<compile_context>
chip_gen: v7x
topology: tpu7x:2x2x1
jax: 0.10.0
libtpu: 0.0.40
codegen_flags: <defaults>
</compile_context>

<pallas_src>
import math

import jax
import jax.numpy as jnp
from jax.experimental import pallas as pl

# ----- synthetic "distilbert-base-uncased"-like config, scaled down -----
VOCAB = 128
MAX_POS = 16
HID = 32          # hidden_size
NHEAD = 2
DHEAD = HID // NHEAD
FFN = 64
NLAYERS = 2
LN_EPS = 1e-12
_INV_SQRT2 = 0.7071067811865476


def _gelu_exact(x):
    # nn.GELU() default = exact (erf-based) GELU
    return 0.5 * x * (1.0 + jax.lax.erf(x * _INV_SQRT2))


def _layernorm(x, g, b, eps=LN_EPS):
    mu = jnp.mean(x, axis=-1, keepdims=True)
    var = jnp.mean((x - mu) ** 2, axis=-1, keepdims=True)
    return (x - mu) * jax.lax.rsqrt(var + eps) * g + b


# ---------------------------------------------------------------------------
# Single fused Pallas kernel: emb-LN + NLAYERS encoder layers + pooling + MLP
# ---------------------------------------------------------------------------
def reader_kernel(x_ref, mask_ref, embln_ref,
                  wqkv_ref, bqkv_ref, wo_ref, w1_ref, b1_ref, w2_ref, vecs_ref,
                  cw1_ref, cb1_ref, cw2_ref, cb2_ref, cw3_ref, cb3_ref,
                  out_ref):
    BS, H = x_ref.shape               # (B*S, H) flat activation slab
    B = mask_ref.shape[0]
    S = mask_ref.shape[2]
    nlayers = wqkv_ref.shape[0]

    # embedding LayerNorm
    embln = embln_ref[...]            # (2, H): [gamma, beta]
    x = _layernorm(x_ref[...], embln[0:1, :], embln[1:2, :])

    # additive attention mask over the key axis
    neg = (mask_ref[...] - 1.0) * 1e9            # (B, 1, S)
    scale = 1.0 / math.sqrt(DHEAD)

    for l in range(nlayers):                     # static loop; weights resident in VMEM
        vecs = vecs_ref[l]                       # (6, H): [bo, ln1g, ln1b, b2, ln2g, ln2b]
        wo = wo_ref[l]                           # (H, H)

        # fused QKV projection: one (B*S, H) @ (H, 3H) matmul
        qkv = jnp.dot(x, wqkv_ref[l],
                      preferred_element_type=jnp.float32) + bqkv_ref[l]   # (BS, 3H)
        q = qkv[:, 0 * H:1 * H].reshape(B, S, H)
        k = qkv[:, 1 * H:2 * H].reshape(B, S, H)
        v = qkv[:, 2 * H:3 * H].reshape(B, S, H)

        # multi-head attention; accumulate heads straight through Wo slices
        # (no lane-axis concatenate of per-head contexts)
        attn = jnp.zeros((BS, H), jnp.float32)
        for h in range(NHEAD):
            lo = h * DHEAD
            qh = q[:, :, lo:lo + DHEAD]          # (B, S, D)
            kh = k[:, :, lo:lo + DHEAD]
            vh = v[:, :, lo:lo + DHEAD]
            s = jnp.einsum('bqd,bkd->bqk', qh, kh,
                           preferred_element_type=jnp.float32) * scale + neg
            s = s - jnp.max(s, axis=-1, keepdims=True)
            p = jnp.exp(s)
            p = p * pl.reciprocal(jnp.sum(p, axis=-1, keepdims=True), approx=True)
            ctx = jnp.einsum('bqk,bkd->bqd', p, vh,
                             preferred_element_type=jnp.float32)          # (B, S, D)
            attn = attn + jnp.dot(ctx.reshape(BS, DHEAD), wo[lo:lo + DHEAD, :],
                                  preferred_element_type=jnp.float32)

        attn = attn + vecs[0:1, :]                                        # + bo
        y1 = _layernorm(x + attn, vecs[1:2, :], vecs[2:3, :])

        ff = jnp.dot(y1, w1_ref[l], preferred_element_type=jnp.float32) + b1_ref[l]
        ff = _gelu_exact(ff)
        ff = jnp.dot(ff, w2_ref[l], preferred_element_type=jnp.float32) + vecs[3:4, :]
        x = _layernorm(y1 + ff, vecs[4:5, :], vecs[5:6, :])

    # ---- classifier head: cat([CLS, mean(seq)]) @ W1 == CLS@W1[:H] + mean@W1[H:] ----
    h3 = x.reshape(B, S, H)
    cls_tok = h3[:, 0, :]                        # (B, H)  == hidden_state[:, 0]
    mean_tok = jnp.mean(h3, axis=1)              # (B, H)  == hidden_state.mean(dim=1)
    cw1 = cw1_ref[...]                           # (2H, 64)
    z = (jnp.dot(cls_tok, cw1[0:H, :], preferred_element_type=jnp.float32)
         + jnp.dot(mean_tok, cw1[H:2 * H, :], preferred_element_type=jnp.float32)
         + cb1_ref[...])
    z = _gelu_exact(z)                           # nn.GELU; Dropout = identity (eval)
    z = jnp.dot(z, cw2_ref[...], preferred_element_type=jnp.float32) + cb2_ref[...]
    z = jnp.maximum(z, 0.0)                      # nn.ReLU; Dropout = identity (eval)
    out_ref[...] = jnp.dot(z, cw3_ref[...],
                           preferred_element_type=jnp.float32) + cb3_ref[...]


def reader_pallas(x_flat, mask3, params):
    """Single fused pallas_call: all inputs resident in VMEM, no grid."""
    B = mask3.shape[0]
    return pl.pallas_call(
        reader_kernel,
        out_shape=jax.ShapeDtypeStruct((B, 1), jnp.float32),
    )(x_flat, mask3, params["emb_ln"],
      params["wqkv"], params["bqkv"], params["wo"],
      params["w1"], params["b1"], params["w2"], params["vecs"],
      *params["cls"])


# ---------------------------------------------------------------------------
# parameter init (deterministic, packed) and forward glue
# ---------------------------------------------------------------------------
def init_params(key):
    keys = iter(jax.random.split(key, 64))
    dense = lambda shp: jax.random.normal(next(keys), shp, jnp.float32) * 0.02
    ones = lambda n: jnp.ones((n,), jnp.float32)
    zeros = lambda n: jnp.zeros((n,), jnp.float32)

    p = {}
    p["word_emb"] = dense((VOCAB, HID))
    p["pos_emb"] = dense((MAX_POS, HID))
    p["emb_ln"] = jnp.stack([ones(HID), zeros(HID)], axis=0)          # (2, H)

    wqkv, bqkv, wo, w1, b1, w2, vecs = [], [], [], [], [], [], []
    for _ in range(NLAYERS):
        wqkv.append(jnp.concatenate([dense((HID, HID)),
                                     dense((HID, HID)),
                                     dense((HID, HID))], axis=1))     # (H, 3H)
        bqkv.append(jnp.zeros((1, 3 * HID), jnp.float32))
        wo.append(dense((HID, HID)))
        w1.append(dense((HID, FFN)))
        b1.append(jnp.zeros((1, FFN), jnp.float32))
        w2.append(dense((FFN, HID)))
        vecs.append(jnp.stack([zeros(HID),               # bo
                               ones(HID), zeros(HID),    # LN1 gamma/beta
                               zeros(HID),               # b2
                               ones(HID), zeros(HID)],   # LN2 gamma/beta
                              axis=0))                   # (6, H)

    p["wqkv"] = jnp.stack(wqkv)        # (L, H, 3H)
    p["bqkv"] = jnp.stack(bqkv)        # (L, 1, 3H)
    p["wo"] = jnp.stack(wo)            # (L, H, H)
    p["w1"] = jnp.stack(w1)            # (L, H, FFN)
    p["b1"] = jnp.stack(b1)            # (L, 1, FFN)
    p["w2"] = jnp.stack(w2)            # (L, FFN, H)
    p["vecs"] = jnp.stack(vecs)        # (L, 6, H)

    p["cls"] = [
        dense((2 * HID, 64)), jnp.zeros((1, 64), jnp.float32),
        dense((64, 32)),      jnp.zeros((1, 32), jnp.float32),
        dense((32, 1)),       jnp.zeros((1, 1), jnp.float32),
    ]
    return p


def reader_model_forward(params, input_ids, attention_mask):
    """Equivalent of ReaderModel.forward(data)['logits'] (no loss_fn)."""
    B, S = input_ids.shape
    # Embedding gather + positional add (glue; gather has no rectangular BlockSpec form)
    emb = jnp.take(params["word_emb"], input_ids, axis=0) + params["pos_emb"][None, :S, :]
    x_flat = emb.reshape(B * S, HID).astype(jnp.float32)
    mask3 = attention_mask.astype(jnp.float32).reshape(B, 1, S)
    return reader_pallas(x_flat, mask3, params)           # single fused Pallas kernel


# TODO(synk): pretrained HF weights, resize_token_embeddings and
# gradient_checkpointing_enable have no Pallas equivalent; backbone is a
# synthetic, deterministically initialized DistilBERT-style encoder.

if __name__ == "__main__":
    root = jax.random.PRNGKey(0)
    k_params, k_ids = jax.random.split(root)

    params = init_params(k_params)

    B, S = 2, 8
    input_ids = jax.random.randint(k_ids, (B, S), 0, VOCAB, dtype=jnp.int32)
    attention_mask = jnp.ones((B, S), dtype=jnp.int32).at[1, 6:].set(0)

    fwd = jax.jit(reader_model_forward)
    logits = fwd(params, input_ids, attention_mask)
    jax.block_until_ready(logits)
    assert logits.shape == (B, 1) and logits.dtype == jnp.float32
    print("KERNEL_OK")
</pallas_src>

<mosaic_0001>
module attributes {stable_mosaic.version = 11 : i64} {
  func.func @reader_kernel(%arg0: memref<16x32xf32, #tpu.memory_space<vmem>>, %arg1: memref<2x1x8xf32, #tpu.memory_space<vmem>>, %arg2: memref<2x32xf32, #tpu.memory_space<vmem>>, %arg3: memref<2x32x96xf32, #tpu.memory_space<vmem>>, %arg4: memref<2x1x96xf32, #tpu.memory_space<vmem>>, %arg5: memref<2x32x32xf32, #tpu.memory_space<vmem>>, %arg6: memref<2x32x64xf32, #tpu.memory_space<vmem>>, %arg7: memref<2x1x64xf32, #tpu.memory_space<vmem>>, %arg8: memref<2x64x32xf32, #tpu.memory_space<vmem>>, %arg9: memref<2x6x32xf32, #tpu.memory_space<vmem>>, %arg10: memref<64x64xf32, #tpu.memory_space<vmem>>, %arg11: memref<1x64xf32, #tpu.memory_space<vmem>>, %arg12: memref<64x32xf32, #tpu.memory_space<vmem>>, %arg13: memref<1x32xf32, #tpu.memory_space<vmem>>, %arg14: memref<32x1xf32, #tpu.memory_space<vmem>>, %arg15: memref<1x1xf32, #tpu.memory_space<vmem>>, %arg16: memref<2x1xf32, #tpu.memory_space<vmem>>) attributes {dimension_semantics = [], scalar_prefetch = 0 : i64, scratch_operands = 0 : i64, tpu.core_type = #tpu.core_type<tc>} {
    %c0 = arith.constant 0 : index
    %c0_0 = arith.constant 0 : index
    %0 = vector.load %arg2[%c0, %c0_0] : memref<2x32xf32, #tpu.memory_space<vmem>>, vector<2x32xf32>
    %c0_1 = arith.constant 0 : index
    %c0_2 = arith.constant 0 : index
    %1 = vector.load %arg0[%c0_1, %c0_2] : memref<16x32xf32, #tpu.memory_space<vmem>>, vector<16x32xf32>
    %2 = vector.extract_strided_slice %0 {offsets = [0, 0], sizes = [1, 32], strides = [1, 1]} : vector<2x32xf32> to vector<1x32xf32>
    %3 = vector.extract_strided_slice %0 {offsets = [1, 0], sizes = [1, 32], strides = [1, 1]} : vector<2x32xf32> to vector<1x32xf32>
    %cst = arith.constant dense<0.000000e+00> : vector<16xf32>
    %4 = vector.multi_reduction <add>, %1, %cst [1] : vector<16x32xf32> to vector<16xf32>
    %5 = vector.shape_cast %4 : vector<16xf32> to vector<16x1xf32>
    %cst_3 = arith.constant 3.200000e+01 : f32
    %6 = vector.broadcast %cst_3 : f32 to vector<16x1xf32>
    %7 = arith.divf %5, %6 : vector<16x1xf32>
    %8 = vector.broadcast %7 : vector<16x1xf32> to vector<16x32xf32>
    %9 = arith.subf %1, %8 : vector<16x32xf32>
    %10 = arith.mulf %9, %9 : vector<16x32xf32>
    %cst_4 = arith.constant dense<0.000000e+00> : vector<16xf32>
    %11 = vector.multi_reduction <add>, %10, %cst_4 [1] : vector<16x32xf32> to vector<16xf32>
    %12 = vector.shape_cast %11 : vector<16xf32> to vector<16x1xf32>
    %cst_5 = arith.constant 3.200000e+01 : f32
    %13 = vector.broadcast %cst_5 : f32 to vector<16x1xf32>
    %14 = arith.divf %12, %13 : vector<16x1xf32>
    %15 = vector.broadcast %7 : vector<16x1xf32> to vector<16x32xf32>
    %16 = arith.subf %1, %15 : vector<16x32xf32>
    %cst_6 = arith.constant 9.99999996E-13 : f32
    %17 = vector.broadcast %cst_6 : f32 to vector<16x1xf32>
    %18 = arith.addf %14, %17 : vector<16x1xf32>
    %19 = math.rsqrt %18 : vector<16x1xf32>
    %20 = vector.broadcast %19 : vector<16x1xf32> to vector<16x32xf32>
    %21 = arith.mulf %16, %20 : vector<16x32xf32>
    %22 = vector.broadcast %2 : vector<1x32xf32> to vector<16x32xf32>
    %23 = arith.mulf %21, %22 : vector<16x32xf32>
    %24 = vector.broadcast %3 : vector<1x32xf32> to vector<16x32xf32>
    %25 = arith.addf %23, %24 : vector<16x32xf32>
    %c0_7 = arith.constant 0 : index
    %c0_8 = arith.constant 0 : index
    %c0_9 = arith.constant 0 : index
    %26 = vector.load %arg1[%c0_7, %c0_8, %c0_9] : memref<2x1x8xf32, #tpu.memory_space<vmem>>, vector<2x1x8xf32>
    %cst_10 = arith.constant 1.000000e+00 : f32
    %27 = vector.broadcast %cst_10 : f32 to vector<2x1x8xf32>
    %28 = arith.subf %26, %27 : vector<2x1x8xf32>
    %cst_11 = arith.constant 1.000000e+09 : f32
    %29 = vector.broadcast %cst_11 : f32 to vector<2x1x8xf32>
    %30 = arith.mulf %28, %29 : vector<2x1x8xf32>
    %c0_12 = arith.constant 0 : index
    %c0_13 = arith.constant 0 : index
    %c0_14 = arith.constant 0 : index
    %31 = vector.load %arg9[%c0_12, %c0_13, %c0_14] : memref<2x6x32xf32, #tpu.memory_space<vmem>>, vector<1x6x32xf32>
    %32 = vector.shape_cast %31 : vector<1x6x32xf32> to vector<6x32xf32>
    %c0_15 = arith.constant 0 : index
    %c0_16 = arith.constant 0 : index
    %c0_17 = arith.constant 0 : index
    %33 = vector.load %arg5[%c0_15, %c0_16, %c0_17] : memref<2x32x32xf32, #tpu.memory_space<vmem>>, vector<1x32x32xf32>
    %34 = vector.shape_cast %33 : vector<1x32x32xf32> to vector<32x32xf32>
    %c0_18 = arith.constant 0 : index
    %c0_19 = arith.constant 0 : index
    %c0_20 = arith.constant 0 : index
    %35 = vector.load %arg3[%c0_18, %c0_19, %c0_20] : memref<2x32x96xf32, #tpu.memory_space<vmem>>, vector<1x32x96xf32>
    %36 = vector.shape_cast %35 : vector<1x32x96xf32> to vector<32x96xf32>
    %cst_21 = arith.constant dense<0.000000e+00> : vector<16x96xf32>
    %37 = tpu.matmul %25, %36, %cst_21 {dimension_numbers = #tpu.dot_dimension_numbers<[1], [0], [0], [1], [0, 0, 1, 1], [], []>} : vector<16x32xf32>, vector<32x96xf32>, vector<16x96xf32> -> vector<16x96xf32>
    %c0_22 = arith.constant 0 : index
    %c0_23 = arith.constant 0 : index
    %c0_24 = arith.constant 0 : index
    %38 = vector.load %arg4[%c0_22, %c0_23, %c0_24] : memref<2x1x96xf32, #tpu.memory_space<vmem>>, vector<1x1x96xf32>
    %39 = vector.shape_cast %38 : vector<1x1x96xf32> to vector<1x96xf32>
    %40 = vector.broadcast %39 : vector<1x96xf32> to vector<16x96xf32>
    %41 = arith.addf %37, %40 : vector<16x96xf32>
    %42 = vector.extract_strided_slice %41 {offsets = [0, 0], sizes = [16, 32], strides = [1, 1]} : vector<16x96xf32> to vector<16x32xf32>
    %43 = vector.shape_cast %42 : vector<16x32xf32> to vector<2x8x32xf32>
    %44 = vector.extract_strided_slice %41 {offsets = [0, 32], sizes = [16, 32], strides = [1, 1]} : vector<16x96xf32> to vector<16x32xf32>
    %45 = vector.shape_cast %44 : vector<16x32xf32> to vector<2x8x32xf32>
    %46 = vector.extract_strided_slice %41 {offsets = [0, 64], sizes = [16, 32], strides = [1, 1]} : vector<16x96xf32> to vector<16x32xf32>
    %47 = vector.shape_cast %46 : vector<16x32xf32> to vector<2x8x32xf32>
    %cst_25 = arith.constant 0.000000e+00 : f32
    %48 = vector.broadcast %cst_25 : f32 to vector<16x32xf32>
    %49 = vector.extract_strided_slice %43 {offsets = [0, 0, 0], sizes = [2, 8, 16], strides = [1, 1, 1]} : vector<2x8x32xf32> to vector<2x8x16xf32>
    %50 = vector.extract_strided_slice %45 {offsets = [0, 0, 0], sizes = [2, 8, 16], strides = [1, 1, 1]} : vector<2x8x32xf32> to vector<2x8x16xf32>
    %51 = vector.extract_strided_slice %47 {offsets = [0, 0, 0], sizes = [2, 8, 16], strides = [1, 1, 1]} : vector<2x8x32xf32> to vector<2x8x16xf32>
    "tpu.trace_start"() <{level = 10 : i32, message = "bqd,bkd->bqk"}> : () -> ()
    %cst_26 = arith.constant dense<0.000000e+00> : vector<2x8x8xf32>
    %52 = tpu.matmul %49, %50, %cst_26 {dimension_numbers = #tpu.dot_dimension_numbers<[2], [2], [1], [1], [0, 0, 0, 1, 1, 1], [0], [0]>} : vector<2x8x16xf32>, vector<2x8x16xf32>, vector<2x8x8xf32> -> vector<2x8x8xf32>
    "tpu.trace_stop"() : () -> ()
    %cst_27 = arith.constant 2.500000e-01 : f32
    %53 = vector.broadcast %cst_27 : f32 to vector<2x8x8xf32>
    %54 = arith.mulf %52, %53 : vector<2x8x8xf32>
    %55 = vector.broadcast %30 : vector<2x1x8xf32> to vector<2x8x8xf32>
    %56 = arith.addf %54, %55 : vector<2x8x8xf32>
    %cst_28 = arith.constant dense<0xFF800000> : vector<2x8xf32>
    %57 = vector.multi_reduction <maximumf>, %56, %cst_28 [2] : vector<2x8x8xf32> to vector<2x8xf32>
    %58 = vector.shape_cast %57 : vector<2x8xf32> to vector<2x8x1xf32>
    %59 = vector.broadcast %58 : vector<2x8x1xf32> to vector<2x8x8xf32>
    %60 = arith.subf %56, %59 : vector<2x8x8xf32>
    %61 = math.exp %60 : vector<2x8x8xf32>
    %cst_29 = arith.constant dense<0.000000e+00> : vector<2x8xf32>
    %62 = vector.multi_reduction <add>, %61, %cst_29 [2] : vector<2x8x8xf32> to vector<2x8xf32>
    %63 = vector.shape_cast %62 : vector<2x8xf32> to vector<2x8x1xf32>
    %64 = tpu.reciprocal %63 {approx = true} : vector<2x8x1xf32> -> vector<2x8x1xf32>
    %65 = vector.broadcast %64 : vector<2x8x1xf32> to vector<2x8x8xf32>
    %66 = arith.mulf %61, %65 : vector<2x8x8xf32>
    "tpu.trace_start"() <{level = 10 : i32, message = "bqk,bkd->bqd"}> : () -> ()
    %cst_30 = arith.constant dense<0.000000e+00> : vector<2x8x16xf32>
    %67 = tpu.matmul %66, %51, %cst_30 {dimension_numbers = #tpu.dot_dimension_numbers<[2], [1], [1], [2], [0, 0, 0, 1, 1, 2], [0], [0]>} : vector<2x8x8xf32>, vector<2x8x16xf32>, vector<2x8x16xf32> -> vector<2x8x16xf32>
    "tpu.trace_stop"() : () -> ()
    %68 = vector.shape_cast %67 : vector<2x8x16xf32> to vector<16x16xf32>
    %69 = vector.extract_strided_slice %34 {offsets = [0, 0], sizes = [16, 32], strides = [1, 1]} : vector<32x32xf32> to vector<16x32xf32>
    %cst_31 = arith.constant dense<0.000000e+00> : vector<16x32xf32>
    %70 = tpu.matmul %68, %69, %cst_31 {dimension_numbers = #tpu.dot_dimension_numbers<[1], [0], [0], [1], [0, 0, 1, 1], [], []>} : vector<16x16xf32>, vector<16x32xf32>, vector<16x32xf32> -> vector<16x32xf32>
    %71 = arith.addf %48, %70 : vector<16x32xf32>
    %72 = vector.extract_strided_slice %43 {offsets = [0, 0, 16], sizes = [2, 8, 16], strides = [1, 1, 1]} : vector<2x8x32xf32> to vector<2x8x16xf32>
    %73 = vector.extract_strided_slice %45 {offsets = [0, 0, 16], sizes = [2, 8, 16], strides = [1, 1, 1]} : vector<2x8x32xf32> to vector<2x8x16xf32>
    %74 = vector.extract_strided_slice %47 {offsets = [0, 0, 16], sizes = [2, 8, 16], strides = [1, 1, 1]} : vector<2x8x32xf32> to vector<2x8x16xf32>
    "tpu.trace_start"() <{level = 10 : i32, message = "bqd,bkd->bqk"}> : () -> ()
    %cst_32 = arith.constant dense<0.000000e+00> : vector<2x8x8xf32>
    %75 = tpu.matmul %72, %73, %cst_32 {dimension_numbers = #tpu.dot_dimension_numbers<[2], [2], [1], [1], [0, 0, 0, 1, 1, 1], [0], [0]>} : vector<2x8x16xf32>, vector<2x8x16xf32>, vector<2x8x8xf32> -> vector<2x8x8xf32>
    "tpu.trace_stop"() : () -> ()
    %cst_33 = arith.constant 2.500000e-01 : f32
    %76 = vector.broadcast %cst_33 : f32 to vector<2x8x8xf32>
    %77 = arith.mulf %75, %76 : vector<2x8x8xf32>
    %78 = vector.broadcast %30 : vector<2x1x8xf32> to vector<2x8x8xf32>
    %79 = arith.addf %77, %78 : vector<2x8x8xf32>
    %cst_34 = arith.constant dense<0xFF800000> : vector<2x8xf32>
    %80 = vector.multi_reduction <maximumf>, %79, %cst_34 [2] : vector<2x8x8xf32> to vector<2x8xf32>
    %81 = vector.shape_cast %80 : vector<2x8xf32> to vector<2x8x1xf32>
    %82 = vector.broadcast %81 : vector<2x8x1xf32> to vector<2x8x8xf32>
    %83 = arith.subf %79, %82 : vector<2x8x8xf32>
    %84 = math.exp %83 : vector<2x8x8xf32>
    %cst_35 = arith.constant dense<0.000000e+00> : vector<2x8xf32>
    %85 = vector.multi_reduction <add>, %84, %cst_35 [2] : vector<2x8x8xf32> to vector<2x8xf32>
    %86 = vector.shape_cast %85 : vector<2x8xf32> to vector<2x8x1xf32>
    %87 = tpu.reciprocal %86 {approx = true} : vector<2x8x1xf32> -> vector<2x8x1xf32>
    %88 = vector.broadcast %87 : vector<2x8x1xf32> to vector<2x8x8xf32>
    %89 = arith.mulf %84, %88 : vector<2x8x8xf32>
    "tpu.trace_start"() <{level = 10 : i32, message = "bqk,bkd->bqd"}> : () -> ()
    %cst_36 = arith.constant dense<0.000000e+00> : vector<2x8x16xf32>
    %90 = tpu.matmul %89, %74, %cst_36 {dimension_numbers = #tpu.dot_dimension_numbers<[2], [1], [1], [2], [0, 0, 0, 1, 1, 2], [0], [0]>} : vector<2x8x8xf32>, vector<2x8x16xf32>, vector<2x8x16xf32> -> vector<2x8x16xf32>
    "tpu.trace_stop"() : () -> ()
    %91 = vector.shape_cast %90 : vector<2x8x16xf32> to vector<16x16xf32>
    %92 = vector.extract_strided_slice %34 {offsets = [16, 0], sizes = [16, 32], strides = [1, 1]} : vector<32x32xf32> to vector<16x32xf32>
    %cst_37 = arith.constant dense<0.000000e+00> : vector<16x32xf32>
    %93 = tpu.matmul %91, %92, %cst_37 {dimension_numbers = #tpu.dot_dimension_numbers<[1], [0], [0], [1], [0, 0, 1, 1], [], []>} : vector<16x16xf32>, vector<16x32xf32>, vector<16x32xf32> -> vector<16x32xf32>
    %94 = arith.addf %71, %93 : vector<16x32xf32>
    %95 = vector.extract_strided_slice %32 {offsets = [0, 0], sizes = [1, 32], strides = [1, 1]} : vector<6x32xf32> to vector<1x32xf32>
    %96 = vector.broadcast %95 : vector<1x32xf32> to vector<16x32xf32>
    %97 = arith.addf %94, %96 : vector<16x32xf32>
    %98 = arith.addf %25, %97 : vector<16x32xf32>
    %99 = vector.extract_strided_slice %32 {offsets = [1, 0], sizes = [1, 32], strides = [1, 1]} : vector<6x32xf32> to vector<1x32xf32>
    %100 = vector.extract_strided_slice %32 {offsets = [2, 0], sizes = [1, 32], strides = [1, 1]} : vector<6x32xf32> to vector<1x32xf32>
    %cst_38 = arith.constant dense<0.000000e+00> : vector<16xf32>
    %101 = vector.multi_reduction <add>, %98, %cst_38 [1] : vector<16x32xf32> to vector<16xf32>
    %102 = vector.shape_cast %101 : vector<16xf32> to vector<16x1xf32>
    %cst_39 = arith.constant 3.200000e+01 : f32
    %103 = vector.broadcast %cst_39 : f32 to vector<16x1xf32>
    %104 = arith.divf %102, %103 : vector<16x1xf32>
    %105 = vector.broadcast %104 : vector<16x1xf32> to vector<16x32xf32>
    %106 = arith.subf %98, %105 : vector<16x32xf32>
    %107 = arith.mulf %106, %106 : vector<16x32xf32>
    %cst_40 = arith.constant dense<0.000000e+00> : vector<16xf32>
    %108 = vector.multi_reduction <add>, %107, %cst_40 [1] : vector<16x32xf32> to vector<16xf32>
    %109 = vector.shape_cast %108 : vector<16xf32> to vector<16x1xf32>
    %cst_41 = arith.constant 3.200000e+01 : f32
    %110 = vector.broadcast %cst_41 : f32 to vector<16x1xf32>
    %111 = arith.divf %109, %110 : vector<16x1xf32>
    %112 = vector.broadcast %104 : vector<16x1xf32> to vector<16x32xf32>
    %113 = arith.subf %98, %112 : vector<16x32xf32>
    %cst_42 = arith.constant 9.99999996E-13 : f32
    %114 = vector.broadcast %cst_42 : f32 to vector<16x1xf32>
    %115 = arith.addf %111, %114 : vector<16x1xf32>
    %116 = math.rsqrt %115 : vector<16x1xf32>
    %117 = vector.broadcast %116 : vector<16x1xf32> to vector<16x32xf32>
    %118 = arith.mulf %113, %117 : vector<16x32xf32>
    %119 = vector.broadcast %99 : vector<1x32xf32> to vector<16x32xf32>
    %120 = arith.mulf %118, %119 : vector<16x32xf32>
    %121 = vector.broadcast %100 : vector<1x32xf32> to vector<16x32xf32>
    %122 = arith.addf %120, %121 : vector<16x32xf32>
    %c0_43 = arith.constant 0 : index
    %c0_44 = arith.constant 0 : index
    %c0_45 = arith.constant 0 : index
    %123 = vector.load %arg6[%c0_43, %c0_44, %c0_45] : memref<2x32x64xf32, #tpu.memory_space<vmem>>, vector<1x32x64xf32>
    %124 = vector.shape_cast %123 : vector<1x32x64xf32> to vector<32x64xf32>
    %cst_46 = arith.constant dense<0.000000e+00> : vector<16x64xf32>
    %125 = tpu.matmul %122, %124, %cst_46 {dimension_numbers = #tpu.dot_dimension_numbers<[1], [0], [0], [1], [0, 0, 1, 1], [], []>} : vector<16x32xf32>, vector<32x64xf32>, vector<16x64xf32> -> vector<16x64xf32>
    %c0_47 = arith.constant 0 : index
    %c0_48 = arith.constant 0 : index
    %c0_49 = arith.constant 0 : index
    %126 = vector.load %arg7[%c0_47, %c0_48, %c0_49] : memref<2x1x64xf32, #tpu.memory_space<vmem>>, vector<1x1x64xf32>
    %127 = vector.shape_cast %126 : vector<1x1x64xf32> to vector<1x64xf32>
    %128 = vector.broadcast %127 : vector<1x64xf32> to vector<16x64xf32>
    %129 = arith.addf %125, %128 : vector<16x64xf32>
    %cst_50 = arith.constant 5.000000e-01 : f32
    %130 = vector.broadcast %cst_50 : f32 to vector<16x64xf32>
    %131 = arith.mulf %130, %129 : vector<16x64xf32>
    %cst_51 = arith.constant 0.707106769 : f32
    %132 = vector.broadcast %cst_51 : f32 to vector<16x64xf32>
    %133 = arith.mulf %129, %132 : vector<16x64xf32>
    %134 = math.erf %133 : vector<16x64xf32>
    %cst_52 = arith.constant 1.000000e+00 : f32
    %135 = vector.broadcast %cst_52 : f32 to vector<16x64xf32>
    %136 = arith.addf %135, %134 : vector<16x64xf32>
    %137 = arith.mulf %131, %136 : vector<16x64xf32>
    %c0_53 = arith.constant 0 : index
    %c0_54 = arith.constant 0 : index
    %c0_55 = arith.constant 0 : index
    %138 = vector.load %arg8[%c0_53, %c0_54, %c0_55] : memref<2x64x32xf32, #tpu.memory_space<vmem>>, vector<1x64x32xf32>
    %139 = vector.shape_cast %138 : vector<1x64x32xf32> to vector<64x32xf32>
    %cst_56 = arith.constant dense<0.000000e+00> : vector<16x32xf32>
    %140 = tpu.matmul %137, %139, %cst_56 {dimension_numbers = #tpu.dot_dimension_numbers<[1], [0], [0], [1], [0, 0, 1, 1], [], []>} : vector<16x64xf32>, vector<64x32xf32>, vector<16x32xf32> -> vector<16x32xf32>
    %141 = vector.extract_strided_slice %32 {offsets = [3, 0], sizes = [1, 32], strides = [1, 1]} : vector<6x32xf32> to vector<1x32xf32>
    %142 = vector.broadcast %141 : vector<1x32xf32> to vector<16x32xf32>
    %143 = arith.addf %140, %142 : vector<16x32xf32>
    %144 = arith.addf %122, %143 : vector<16x32xf32>
    %145 = vector.extract_strided_slice %32 {offsets = [4, 0], sizes = [1, 32], strides = [1, 1]} : vector<6x32xf32> to vector<1x32xf32>
    %146 = vector.extract_strided_slice %32 {offsets = [5, 0], sizes = [1, 32], strides = [1, 1]} : vector<6x32xf32> to vector<1x32xf32>
    %cst_57 = arith.constant dense<0.000000e+00> : vector<16xf32>
    %147 = vector.multi_reduction <add>, %144, %cst_57 [1] : vector<16x32xf32> to vector<16xf32>
    %148 = vector.shape_cast %147 : vector<16xf32> to vector<16x1xf32>
    %cst_58 = arith.constant 3.200000e+01 : f32
    %149 = vector.broadcast %cst_58 : f32 to vector<16x1xf32>
    %150 = arith.divf %148, %149 : vector<16x1xf32>
    %151 = vector.broadcast %150 : vector<16x1xf32> to vector<16x32xf32>
    %152 = arith.subf %144, %151 : vector<16x32xf32>
    %153 = arith.mulf %152, %152 : vector<16x32xf32>
    %cst_59 = arith.constant dense<0.000000e+00> : vector<16xf32>
    %154 = vector.multi_reduction <add>, %153, %cst_59 [1] : vector<16x32xf32> to vector<16xf32>
    %155 = vector.shape_cast %154 : vector<16xf32> to vector<16x1xf32>
    %cst_60 = arith.constant 3.200000e+01 : f32
    %156 = vector.broadcast %cst_60 : f32 to vector<16x1xf32>
    %157 = arith.divf %155, %156 : vector<16x1xf32>
    %158 = vector.broadcast %150 : vector<16x1xf32> to vector<16x32xf32>
    %159 = arith.subf %144, %158 : vector<16x32xf32>
    %cst_61 = arith.constant 9.99999996E-13 : f32
    %160 = vector.broadcast %cst_61 : f32 to vector<16x1xf32>
    %161 = arith.addf %157, %160 : vector<16x1xf32>
    %162 = math.rsqrt %161 : vector<16x1xf32>
    %163 = vector.broadcast %162 : vector<16x1xf32> to vector<16x32xf32>
    %164 = arith.mulf %159, %163 : vector<16x32xf32>
    %165 = vector.broadcast %145 : vector<1x32xf32> to vector<16x32xf32>
    %166 = arith.mulf %164, %165 : vector<16x32xf32>
    %167 = vector.broadcast %146 : vector<1x32xf32> to vector<16x32xf32>
    %168 = arith.addf %166, %167 : vector<16x32xf32>
    %c1 = arith.constant 1 : index
    %c0_62 = arith.constant 0 : index
    %c0_63 = arith.constant 0 : index
    %169 = vector.load %arg9[%c1, %c0_62, %c0_63] : memref<2x6x32xf32, #tpu.memory_space<vmem>>, vector<1x6x32xf32>
    %170 = vector.shape_cast %169 : vector<1x6x32xf32> to vector<6x32xf32>
    %c1_64 = arith.constant 1 : index
    %c0_65 = arith.constant 0 : index
    %c0_66 = arith.constant 0 : index
    %171 = vector.load %arg5[%c1_64, %c0_65, %c0_66] : memref<2x32x32xf32, #tpu.memory_space<vmem>>, vector<1x32x32xf32>
    %172 = vector.shape_cast %171 : vector<1x32x32xf32> to vector<32x32xf32>
    %c1_67 = arith.constant 1 : index
    %c0_68 = arith.constant 0 : index
    %c0_69 = arith.constant 0 : index
    %173 = vector.load %arg3[%c1_67, %c0_68, %c0_69] : memref<2x32x96xf32, #tpu.memory_space<vmem>>, vector<1x32x96xf32>
    %174 = vector.shape_cast %173 : vector<1x32x96xf32> to vector<32x96xf32>
    %cst_70 = arith.constant dense<0.000000e+00> : vector<16x96xf32>
    %175 = tpu.matmul %168, %174, %cst_70 {dimension_numbers = #tpu.dot_dimension_numbers<[1], [0], [0], [1], [0, 0, 1, 1], [], []>} : vector<16x32xf32>, vector<32x96xf32>, vector<16x96xf32> -> vector<16x96xf32>
    %c1_71 = arith.constant 1 : index
    %c0_72 = arith.constant 0 : index
    %c0_73 = arith.constant 0 : index
    %176 = vector.load %arg4[%c1_71, %c0_72, %c0_73] : memref<2x1x96xf32, #tpu.memory_space<vmem>>, vector<1x1x96xf32>
    %177 = vector.shape_cast %176 : vector<1x1x96xf32> to vector<1x96xf32>
    %178 = vector.broadcast %177 : vector<1x96xf32> to vector<16x96xf32>
    %179 = arith.addf %175, %178 : vector<16x96xf32>
    %180 = vector.extract_strided_slice %179 {offsets = [0, 0], sizes = [16, 32], strides = [1, 1]} : vector<16x96xf32> to vector<16x32xf32>
    %181 = vector.shape_cast %180 : vector<16x32xf32> to vector<2x8x32xf32>
    %182 = vector.extract_strided_slice %179 {offsets = [0, 32], sizes = [16, 32], strides = [1, 1]} : vector<16x96xf32> to vector<16x32xf32>
    %183 = vector.shape_cast %182 : vector<16x32xf32> to vector<2x8x32xf32>
    %184 = vector.extract_strided_slice %179 {offsets = [0, 64], sizes = [16, 32], strides = [1, 1]} : vector<16x96xf32> to vector<16x32xf32>
    %185 = vector.shape_cast %184 : vector<16x32xf32> to vector<2x8x32xf32>
    %cst_74 = arith.constant 0.000000e+00 : f32
    %186 = vector.broadcast %cst_74 : f32 to vector<16x32xf32>
    %187 = vector.extract_strided_slice %181 {offsets = [0, 0, 0], sizes = [2, 8, 16], strides = [1, 1, 1]} : vector<2x8x32xf32> to vector<2x8x16xf32>
    %188 = vector.extract_strided_slice %183 {offsets = [0, 0, 0], sizes = [2, 8, 16], strides = [1, 1, 1]} : vector<2x8x32xf32> to vector<2x8x16xf32>
    %189 = vector.extract_strided_slice %185 {offsets = [0, 0, 0], sizes = [2, 8, 16], strides = [1, 1, 1]} : vector<2x8x32xf32> to vector<2x8x16xf32>
    "tpu.trace_start"() <{level = 10 : i32, message = "bqd,bkd->bqk"}> : () -> ()
    %cst_75 = arith.constant dense<0.000000e+00> : vector<2x8x8xf32>
    %190 = tpu.matmul %187, %188, %cst_75 {dimension_numbers = #tpu.dot_dimension_numbers<[2], [2], [1], [1], [0, 0, 0, 1, 1, 1], [0], [0]>} : vector<2x8x16xf32>, vector<2x8x16xf32>, vector<2x8x8xf32> -> vector<2x8x8xf32>
    "tpu.trace_stop"() : () -> ()
    %cst_76 = arith.constant 2.500000e-01 : f32
    %191 = vector.broadcast %cst_76 : f32 to vector<2x8x8xf32>
    %192 = arith.mulf %190, %191 : vector<2x8x8xf32>
    %193 = vector.broadcast %30 : vector<2x1x8xf32> to vector<2x8x8xf32>
    %194 = arith.addf %192, %193 : vector<2x8x8xf32>
    %cst_77 = arith.constant dense<0xFF800000> : vector<2x8xf32>
    %195 = vector.multi_reduction <maximumf>, %194, %cst_77 [2] : vector<2x8x8xf32> to vector<2x8xf32>
    %196 = vector.shape_cast %195 : vector<2x8xf32> to vector<2x8x1xf32>
    %197 = vector.broadcast %196 : vector<2x8x1xf32> to vector<2x8x8xf32>
    %198 = arith.subf %194, %197 : vector<2x8x8xf32>
    %199 = math.exp %198 : vector<2x8x8xf32>
    %cst_78 = arith.constant dense<0.000000e+00> : vector<2x8xf32>
    %200 = vector.multi_reduction <add>, %199, %cst_78 [2] : vector<2x8x8xf32> to vector<2x8xf32>
    %201 = vector.shape_cast %200 : vector<2x8xf32> to vector<2x8x1xf32>
    %202 = tpu.reciprocal %201 {approx = true} : vector<2x8x1xf32> -> vector<2x8x1xf32>
    %203 = vector.broadcast %202 : vector<2x8x1xf32> to vector<2x8x8xf32>
    %204 = arith.mulf %199, %203 : vector<2x8x8xf32>
    "tpu.trace_start"() <{level = 10 : i32, message = "bqk,bkd->bqd"}> : () -> ()
    %cst_79 = arith.constant dense<0.000000e+00> : vector<2x8x16xf32>
    %205 = tpu.matmul %204, %189, %cst_79 {dimension_numbers = #tpu.dot_dimension_numbers<[2], [1], [1], [2], [0, 0, 0, 1, 1, 2], [0], [0]>} : vector<2x8x8xf32>, vector<2x8x16xf32>, vector<2x8x16xf32> -> vector<2x8x16xf32>
    "tpu.trace_stop"() : () -> ()
    %206 = vector.shape_cast %205 : vector<2x8x16xf32> to vector<16x16xf32>
    %207 = vector.extract_strided_slice %172 {offsets = [0, 0], sizes = [16, 32], strides = [1, 1]} : vector<32x32xf32> to vector<16x32xf32>
    %cst_80 = arith.constant dense<0.000000e+00> : vector<16x32xf32>
    %208 = tpu.matmul %206, %207, %cst_80 {dimension_numbers = #tpu.dot_dimension_numbers<[1], [0], [0], [1], [0, 0, 1, 1], [], []>} : vector<16x16xf32>, vector<16x32xf32>, vector<16x32xf32> -> vector<16x32xf32>
    %209 = arith.addf %186, %208 : vector<16x32xf32>
    %210 = vector.extract_strided_slice %181 {offsets = [0, 0, 16], sizes = [2, 8, 16], strides = [1, 1, 1]} : vector<2x8x32xf32> to vector<2x8x16xf32>
    %211 = vector.extract_strided_slice %183 {offsets = [0, 0, 16], sizes = [2, 8, 16], strides = [1, 1, 1]} : vector<2x8x32xf32> to vector<2x8x16xf32>
    %212 = vector.extract_strided_slice %185 {offsets = [0, 0, 16], sizes = [2, 8, 16], strides = [1, 1, 1]} : vector<2x8x32xf32> to vector<2x8x16xf32>
    "tpu.trace_start"() <{level = 10 : i32, message = "bqd,bkd->bqk"}> : () -> ()
    %cst_81 = arith.constant dense<0.000000e+00> : vector<2x8x8xf32>
    %213 = tpu.matmul %210, %211, %cst_81 {dimension_numbers = #tpu.dot_dimension_numbers<[2], [2], [1], [1], [0, 0, 0, 1, 1, 1], [0], [0]>} : vector<2x8x16xf32>, vector<2x8x16xf32>, vector<2x8x8xf32> -> vector<2x8x8xf32>
    "tpu.trace_stop"() : () -> ()
    %cst_82 = arith.constant 2.500000e-01 : f32
    %214 = vector.broadcast %cst_82 : f32 to vector<2x8x8xf32>
    %215 = arith.mulf %213, %214 : vector<2x8x8xf32>
    %216 = vector.broadcast %30 : vector<2x1x8xf32> to vector<2x8x8xf32>
    %217 = arith.addf %215, %216 : vector<2x8x8xf32>
    %cst_83 = arith.constant dense<0xFF800000> : vector<2x8xf32>
    %218 = vector.multi_reduction <maximumf>, %217, %cst_83 [2] : vector<2x8x8xf32> to vector<2x8xf32>
    %219 = vector.shape_cast %218 : vector<2x8xf32> to vector<2x8x1xf32>
    %220 = vector.broadcast %219 : vector<2x8x1xf32> to vector<2x8x8xf32>
    %221 = arith.subf %217, %220 : vector<2x8x8xf32>
    %222 = math.exp %221 : vector<2x8x8xf32>
    %cst_84 = arith.constant dense<0.000000e+00> : vector<2x8xf32>
    %223 = vector.multi_reduction <add>, %222, %cst_84 [2] : vector<2x8x8xf32> to vector<2x8xf32>
    %224 = vector.shape_cast %223 : vector<2x8xf32> to vector<2x8x1xf32>
    %225 = tpu.reciprocal %224 {approx = true} : vector<2x8x1xf32> -> vector<2x8x1xf32>
    %226 = vector.broadcast %225 : vector<2x8x1xf32> to vector<2x8x8xf32>
    %227 = arith.mulf %222, %226 : vector<2x8x8xf32>
    "tpu.trace_start"() <{level = 10 : i32, message = "bqk,bkd->bqd"}> : () -> ()
    %cst_85 = arith.constant dense<0.000000e+00> : vector<2x8x16xf32>
    %228 = tpu.matmul %227, %212, %cst_85 {dimension_numbers = #tpu.dot_dimension_numbers<[2], [1], [1], [2], [0, 0, 0, 1, 1, 2], [0], [0]>} : vector<2x8x8xf32>, vector<2x8x16xf32>, vector<2x8x16xf32> -> vector<2x8x16xf32>
    "tpu.trace_stop"() : () -> ()
    %229 = vector.shape_cast %228 : vector<2x8x16xf32> to vector<16x16xf32>
    %230 = vector.extract_strided_slice %172 {offsets = [16, 0], sizes = [16, 32], strides = [1, 1]} : vector<32x32xf32> to vector<16x32xf32>
    %cst_86 = arith.constant dense<0.000000e+00> : vector<16x32xf32>
    %231 = tpu.matmul %229, %230, %cst_86 {dimension_numbers = #tpu.dot_dimension_numbers<[1], [0], [0], [1], [0, 0, 1, 1], [], []>} : vector<16x16xf32>, vector<16x32xf32>, vector<16x32xf32> -> vector<16x32xf32>
    %232 = arith.addf %209, %231 : vector<16x32xf32>
    %233 = vector.extract_strided_slice %170 {offsets = [0, 0], sizes = [1, 32], strides = [1, 1]} : vector<6x32xf32> to vector<1x32xf32>
    %234 = vector.broadcast %233 : vector<1x32xf32> to vector<16x32xf32>
    %235 = arith.addf %232, %234 : vector<16x32xf32>
    %236 = arith.addf %168, %235 : vector<16x32xf32>
    %237 = vector.extract_strided_slice %170 {offsets = [1, 0], sizes = [1, 32], strides = [1, 1]} : vector<6x32xf32> to vector<1x32xf32>
    %238 = vector.extract_strided_slice %170 {offsets = [2, 0], sizes = [1, 32], strides = [1, 1]} : vector<6x32xf32> to vector<1x32xf32>
    %cst_87 = arith.constant dense<0.000000e+00> : vector<16xf32>
    %239 = vector.multi_reduction <add>, %236, %cst_87 [1] : vector<16x32xf32> to vector<16xf32>
    %240 = vector.shape_cast %239 : vector<16xf32> to vector<16x1xf32>
    %cst_88 = arith.constant 3.200000e+01 : f32
    %241 = vector.broadcast %cst_88 : f32 to vector<16x1xf32>
    %242 = arith.divf %240, %241 : vector<16x1xf32>
    %243 = vector.broadcast %242 : vector<16x1xf32> to vector<16x32xf32>
    %244 = arith.subf %236, %243 : vector<16x32xf32>
    %245 = arith.mulf %244, %244 : vector<16x32xf32>
    %cst_89 = arith.constant dense<0.000000e+00> : vector<16xf32>
    %246 = vector.multi_reduction <add>, %245, %cst_89 [1] : vector<16x32xf32> to vector<16xf32>
    %247 = vector.shape_cast %246 : vector<16xf32> to vector<16x1xf32>
    %cst_90 = arith.constant 3.200000e+01 : f32
    %248 = vector.broadcast %cst_90 : f32 to vector<16x1xf32>
    %249 = arith.divf %247, %248 : vector<16x1xf32>
    %250 = vector.broadcast %242 : vector<16x1xf32> to vector<16x32xf32>
    %251 = arith.subf %236, %250 : vector<16x32xf32>
    %cst_91 = arith.constant 9.99999996E-13 : f32
    %252 = vector.broadcast %cst_91 : f32 to vector<16x1xf32>
    %253 = arith.addf %249, %252 : vector<16x1xf32>
    %254 = math.rsqrt %253 : vector<16x1xf32>
    %255 = vector.broadcast %254 : vector<16x1xf32> to vector<16x32xf32>
    %256 = arith.mulf %251, %255 : vector<16x32xf32>
    %257 = vector.broadcast %237 : vector<1x32xf32> to vector<16x32xf32>
    %258 = arith.mulf %256, %257 : vector<16x32xf32>
    %259 = vector.broadcast %238 : vector<1x32xf32> to vector<16x32xf32>
    %260 = arith.addf %258, %259 : vector<16x32xf32>
    %c1_92 = arith.constant 1 : index
    %c0_93 = arith.constant 0 : index
    %c0_94 = arith.constant 0 : index
    %261 = vector.load %arg6[%c1_92, %c0_93, %c0_94] : memref<2x32x64xf32, #tpu.memory_space<vmem>>, vector<1x32x64xf32>
    %262 = vector.shape_cast %261 : vector<1x32x64xf32> to vector<32x64xf32>
    %cst_95 = arith.constant dense<0.000000e+00> : vector<16x64xf32>
    %263 = tpu.matmul %260, %262, %cst_95 {dimension_numbers = #tpu.dot_dimension_numbers<[1], [0], [0], [1], [0, 0, 1, 1], [], []>} : vector<16x32xf32>, vector<32x64xf32>, vector<16x64xf32> -> vector<16x64xf32>
    %c1_96 = arith.constant 1 : index
    %c0_97 = arith.constant 0 : index
    %c0_98 = arith.constant 0 : index
    %264 = vector.load %arg7[%c1_96, %c0_97, %c0_98] : memref<2x1x64xf32, #tpu.memory_space<vmem>>, vector<1x1x64xf32>
    %265 = vector.shape_cast %264 : vector<1x1x64xf32> to vector<1x64xf32>
    %266 = vector.broadcast %265 : vector<1x64xf32> to vector<16x64xf32>
    %267 = arith.addf %263, %266 : vector<16x64xf32>
    %cst_99 = arith.constant 5.000000e-01 : f32
    %268 = vector.broadcast %cst_99 : f32 to vector<16x64xf32>
    %269 = arith.mulf %268, %267 : vector<16x64xf32>
    %cst_100 = arith.constant 0.707106769 : f32
    %270 = vector.broadcast %cst_100 : f32 to vector<16x64xf32>
    %271 = arith.mulf %267, %270 : vector<16x64xf32>
    %272 = math.erf %271 : vector<16x64xf32>
    %cst_101 = arith.constant 1.000000e+00 : f32
    %273 = vector.broadcast %cst_101 : f32 to vector<16x64xf32>
    %274 = arith.addf %273, %272 : vector<16x64xf32>
    %275 = arith.mulf %269, %274 : vector<16x64xf32>
    %c1_102 = arith.constant 1 : index
    %c0_103 = arith.constant 0 : index
    %c0_104 = arith.constant 0 : index
    %276 = vector.load %arg8[%c1_102, %c0_103, %c0_104] : memref<2x64x32xf32, #tpu.memory_space<vmem>>, vector<1x64x32xf32>
    %277 = vector.shape_cast %276 : vector<1x64x32xf32> to vector<64x32xf32>
    %cst_105 = arith.constant dense<0.000000e+00> : vector<16x32xf32>
    %278 = tpu.matmul %275, %277, %cst_105 {dimension_numbers = #tpu.dot_dimension_numbers<[1], [0], [0], [1], [0, 0, 1, 1], [], []>} : vector<16x64xf32>, vector<64x32xf32>, vector<16x32xf32> -> vector<16x32xf32>
    %279 = vector.extract_strided_slice %170 {offsets = [3, 0], sizes = [1, 32], strides = [1, 1]} : vector<6x32xf32> to vector<1x32xf32>
    %280 = vector.broadcast %279 : vector<1x32xf32> to vector<16x32xf32>
    %281 = arith.addf %278, %280 : vector<16x32xf32>
    %282 = arith.addf %260, %281 : vector<16x32xf32>
    %283 = vector.extract_strided_slice %170 {offsets = [4, 0], sizes = [1, 32], strides = [1, 1]} : vector<6x32xf32> to vector<1x32xf32>
    %284 = vector.extract_strided_slice %170 {offsets = [5, 0], sizes = [1, 32], strides = [1, 1]} : vector<6x32xf32> to vector<1x32xf32>
    %cst_106 = arith.constant dense<0.000000e+00> : vector<16xf32>
    %285 = vector.multi_reduction <add>, %282, %cst_106 [1] : vector<16x32xf32> to vector<16xf32>
    %286 = vector.shape_cast %285 : vector<16xf32> to vector<16x1xf32>
    %cst_107 = arith.constant 3.200000e+01 : f32
    %287 = vector.broadcast %cst_107 : f32 to vector<16x1xf32>
    %288 = arith.divf %286, %287 : vector<16x1xf32>
    %289 = vector.broadcast %288 : vector<16x1xf32> to vector<16x32xf32>
    %290 = arith.subf %282, %289 : vector<16x32xf32>
    %291 = arith.mulf %290, %290 : vector<16x32xf32>
    %cst_108 = arith.constant dense<0.000000e+00> : vector<16xf32>
    %292 = vector.multi_reduction <add>, %291, %cst_108 [1] : vector<16x32xf32> to vector<16xf32>
    %293 = vector.shape_cast %292 : vector<16xf32> to vector<16x1xf32>
    %cst_109 = arith.constant 3.200000e+01 : f32
    %294 = vector.broadcast %cst_109 : f32 to vector<16x1xf32>
    %295 = arith.divf %293, %294 : vector<16x1xf32>
    %296 = vector.broadcast %288 : vector<16x1xf32> to vector<16x32xf32>
    %297 = arith.subf %282, %296 : vector<16x32xf32>
    %cst_110 = arith.constant 9.99999996E-13 : f32
    %298 = vector.broadcast %cst_110 : f32 to vector<16x1xf32>
    %299 = arith.addf %295, %298 : vector<16x1xf32>
    %300 = math.rsqrt %299 : vector<16x1xf32>
    %301 = vector.broadcast %300 : vector<16x1xf32> to vector<16x32xf32>
    %302 = arith.mulf %297, %301 : vector<16x32xf32>
    %303 = vector.broadcast %283 : vector<1x32xf32> to vector<16x32xf32>
    %304 = arith.mulf %302, %303 : vector<16x32xf32>
    %305 = vector.broadcast %284 : vector<1x32xf32> to vector<16x32xf32>
    %306 = arith.addf %304, %305 : vector<16x32xf32>
    %307 = vector.shape_cast %306 : vector<16x32xf32> to vector<2x8x32xf32>
    %308 = vector.extract_strided_slice %307 {offsets = [0, 0, 0], sizes = [2, 1, 32], strides = [1, 1, 1]} : vector<2x8x32xf32> to vector<2x1x32xf32>
    %309 = vector.shape_cast %308 : vector<2x1x32xf32> to vector<2x32xf32>
    %cst_111 = arith.constant dense<0.000000e+00> : vector<2x32xf32>
    %310 = vector.multi_reduction <add>, %307, %cst_111 [1] : vector<2x8x32xf32> to vector<2x32xf32>
    %cst_112 = arith.constant 8.000000e+00 : f32
    %311 = vector.broadcast %cst_112 : f32 to vector<2x32xf32>
    %312 = arith.divf %310, %311 : vector<2x32xf32>
    %c0_113 = arith.constant 0 : index
    %c0_114 = arith.constant 0 : index
    %313 = vector.load %arg10[%c0_113, %c0_114] : memref<64x64xf32, #tpu.memory_space<vmem>>, vector<64x64xf32>
    %314 = vector.extract_strided_slice %313 {offsets = [0, 0], sizes = [32, 64], strides = [1, 1]} : vector<64x64xf32> to vector<32x64xf32>
    %cst_115 = arith.constant dense<0.000000e+00> : vector<2x64xf32>
    %315 = tpu.matmul %309, %314, %cst_115 {dimension_numbers = #tpu.dot_dimension_numbers<[1], [0], [0], [1], [0, 0, 1, 1], [], []>} : vector<2x32xf32>, vector<32x64xf32>, vector<2x64xf32> -> vector<2x64xf32>
    %316 = vector.extract_strided_slice %313 {offsets = [32, 0], sizes = [32, 64], strides = [1, 1]} : vector<64x64xf32> to vector<32x64xf32>
    %cst_116 = arith.constant dense<0.000000e+00> : vector<2x64xf32>
    %317 = tpu.matmul %312, %316, %cst_116 {dimension_numbers = #tpu.dot_dimension_numbers<[1], [0], [0], [1], [0, 0, 1, 1], [], []>} : vector<2x32xf32>, vector<32x64xf32>, vector<2x64xf32> -> vector<2x64xf32>
    %318 = arith.addf %315, %317 : vector<2x64xf32>
    %c0_117 = arith.constant 0 : index
    %c0_118 = arith.constant 0 : index
    %319 = vector.load %arg11[%c0_117, %c0_118] : memref<1x64xf32, #tpu.memory_space<vmem>>, vector<1x64xf32>
    %320 = vector.broadcast %319 : vector<1x64xf32> to vector<2x64xf32>
    %321 = arith.addf %318, %320 : vector<2x64xf32>
    %cst_119 = arith.constant 5.000000e-01 : f32
    %322 = vector.broadcast %cst_119 : f32 to vector<2x64xf32>
    %323 = arith.mulf %322, %321 : vector<2x64xf32>
    %cst_120 = arith.constant 0.707106769 : f32
    %324 = vector.broadcast %cst_120 : f32 to vector<2x64xf32>
    %325 = arith.mulf %321, %324 : vector<2x64xf32>
    %326 = math.erf %325 : vector<2x64xf32>
    %cst_121 = arith.constant 1.000000e+00 : f32
    %327 = vector.broadcast %cst_121 : f32 to vector<2x64xf32>
    %328 = arith.addf %327, %326 : vector<2x64xf32>
    %329 = arith.mulf %323, %328 : vector<2x64xf32>
    %c0_122 = arith.constant 0 : index
    %c0_123 = arith.constant 0 : index
    %330 = vector.load %arg12[%c0_122, %c0_123] : memref<64x32xf32, #tpu.memory_space<vmem>>, vector<64x32xf32>
    %cst_124 = arith.constant dense<0.000000e+00> : vector<2x32xf32>
    %331 = tpu.matmul %329, %330, %cst_124 {dimension_numbers = #tpu.dot_dimension_numbers<[1], [0], [0], [1], [0, 0, 1, 1], [], []>} : vector<2x64xf32>, vector<64x32xf32>, vector<2x32xf32> -> vector<2x32xf32>
    %c0_125 = arith.constant 0 : index
    %c0_126 = arith.constant 0 : index
    %332 = vector.load %arg13[%c0_125, %c0_126] : memref<1x32xf32, #tpu.memory_space<vmem>>, vector<1x32xf32>
    %333 = vector.broadcast %332 : vector<1x32xf32> to vector<2x32xf32>
    %334 = arith.addf %331, %333 : vector<2x32xf32>
    %cst_127 = arith.constant 0.000000e+00 : f32
    %335 = vector.broadcast %cst_127 : f32 to vector<2x32xf32>
    %336 = arith.maximumf %334, %335 : vector<2x32xf32>
    %c0_128 = arith.constant 0 : index
    %c0_129 = arith.constant 0 : index
    %337 = vector.load %arg14[%c0_128, %c0_129] : memref<32x1xf32, #tpu.memory_space<vmem>>, vector<32x1xf32>
    %cst_130 = arith.constant dense<0.000000e+00> : vector<2x1xf32>
    %338 = tpu.matmul %336, %337, %cst_130 {dimension_numbers = #tpu.dot_dimension_numbers<[1], [0], [0], [1], [0, 0, 1, 1], [], []>} : vector<2x32xf32>, vector<32x1xf32>, vector<2x1xf32> -> vector<2x1xf32>
    %c0_131 = arith.constant 0 : index
    %c0_132 = arith.constant 0 : index
    %339 = vector.load %arg15[%c0_131, %c0_132] : memref<1x1xf32, #tpu.memory_space<vmem>>, vector<1x1xf32>
    %340 = vector.broadcast %339 : vector<1x1xf32> to vector<2x1xf32>
    %341 = arith.addf %338, %340 : vector<2x1xf32>
    %c0_133 = arith.constant 0 : index
    %c0_134 = arith.constant 0 : index
    %342 = vector.load %arg16[%c0_133, %c0_134] : memref<2x1xf32, #tpu.memory_space<vmem>>, vector<2x1xf32>
    tpu.vector_store %arg16[%c0_133, %c0_134], %341 {strides = array<i32>} : memref<2x1xf32, #tpu.memory_space<vmem>>, vector<2x1xf32>,
    return
  }
}

</mosaic_0001>

<llo_original>
// kernel: reader_model_forward.1
$region0: #{reader_model_forward.1}
  #allocation0 [shape = 'u32[]', space=smem, size = 0x4, offset = 0x4, fixed_abs, tag = 'smem constant byte address 0x4 - core index']
  #allocation1 [shape = 'u32[144,128]{1,0:T(1,128)}', space=vmem, size = 0x12000, scoped, tag = 'internal scratch']
  #allocation2 [shape = 'f32[1,1]{1,0:T(1,128)S(1)}', space=vmem, size = 0x200, scoped, tag = 'scoped memory for reader_model_forward.1']
  %s0 = inlined_call_operand.vmem [shape: f32[16,32], index: 0, kind: input, shape index: {}]
  %s1 = inlined_call_operand.vmem [shape: f32[2,1,8], index: 1, kind: input, shape index: {}]
  %s2 = inlined_call_operand.vmem [shape: f32[2,32], index: 2, kind: input, shape index: {}]
  %s3 = inlined_call_operand.vmem [shape: f32[2,32,96], index: 3, kind: input, shape index: {}]
  %s4 = inlined_call_operand.vmem [shape: f32[2,1,96], index: 4, kind: input, shape index: {}]
  %s5 = inlined_call_operand.vmem [shape: f32[2,32,32], index: 5, kind: input, shape index: {}]
  %s6 = inlined_call_operand.vmem [shape: f32[2,32,64], index: 6, kind: input, shape index: {}]
  %s7 = inlined_call_operand.vmem [shape: f32[2,1,64], index: 7, kind: input, shape index: {}]
  %s8 = inlined_call_operand.vmem [shape: f32[2,64,32], index: 8, kind: input, shape index: {}]
  %s9 = inlined_call_operand.vmem [shape: f32[2,6,32], index: 9, kind: input, shape index: {}]
  %s10 = inlined_call_operand.vmem [shape: f32[64,64], index: 10, kind: input, shape index: {}]
  %s11 = inlined_call_operand.vmem [shape: f32[1,64], index: 11, kind: input, shape index: {}]
  %s12 = inlined_call_operand.vmem [shape: f32[64,32], index: 12, kind: input, shape index: {}]
  %s13 = inlined_call_operand.vmem [shape: f32[1,32], index: 13, kind: input, shape index: {}]
  %s14 = inlined_call_operand.vmem [shape: f32[32,1], index: 14, kind: input, shape index: {}]
  %s15 = inlined_call_operand.<no memory space> [shape: f32[1,1], index: 15, kind: input, shape index: {}]
  %s16 = inlined_call_operand.vmem [shape: f32[2,1], index: 16, kind: output, shape index: {}]
  %s17 = sld [smem:[#allocation0]]
  $region74: #{reader_model_forward.1} parent=0
    _
  %s19 = ssub.s32 1, %s17
  %s20 = scalar_select 0, %s19, %s17
  %v21 = vstv %s15
  %22 = vst [vmem:[#allocation2] sm:$0x1] %v21
  // Predicated region
  $region2: #{reader_model_forward.1} parent=0 // pred_check
    _
  $region3: #{reader_model_forward.1} parent=0 // pred_check_branch
    %24 = sbr.rel (0) target = $region5
  $region4: #{reader_model_forward.1} parent=0 // pred_region
    _
  $region5: #{reader_model_forward.1} parent=0 // pred_fallthru
    _
  // Predicated region
  $region6: #{reader_model_forward.1} parent=0 // pred_check
    _
  $region7: #{reader_model_forward.1} parent=0 // pred_check_branch
    %26 = sbr.rel (0) target = $region9
  $region8: #{reader_model_forward.1} parent=0 // pred_region
    _
  $region9: #{reader_model_forward.1} parent=0 // pred_fallthru
    _
  // Predicated region
  $region10: #{reader_model_forward.1} parent=0 // pred_check
    _
  $region11: #{reader_model_forward.1} parent=0 // pred_check_branch
    %28 = sbr.rel (0) target = $region13
  $region12: #{reader_model_forward.1} parent=0 // pred_region
    _
  $region13: #{reader_model_forward.1} parent=0 // pred_fallthru
    _
  // Predicated region
  $region14: #{reader_model_forward.1} parent=0 // pred_check
    _
  $region15: #{reader_model_forward.1} parent=0 // pred_check_branch
    %30 = sbr.rel (0) target = $region17
  $region16: #{reader_model_forward.1} parent=0 // pred_region
    _
  $region17: #{reader_model_forward.1} parent=0 // pred_fallthru
    _
  // Predicated region
  $region18: #{reader_model_forward.1} parent=0 // pred_check
    _
  $region19: #{reader_model_forward.1} parent=0 // pred_check_branch
    %32 = sbr.rel (0) target = $region21
  $region20: #{reader_model_forward.1} parent=0 // pred_region
    _
  $region21: #{reader_model_forward.1} parent=0 // pred_fallthru
    _
  // Predicated region
  $region22: #{reader_model_forward.1} parent=0 // pred_check
    _
  $region23: #{reader_model_forward.1} parent=0 // pred_check_branch
    %34 = sbr.rel (0) target = $region25
  $region24: #{reader_model_forward.1} parent=0 // pred_region
    _
  $region25: #{reader_model_forward.1} parent=0 // pred_fallthru
    _
  // Predicated region
  $region26: #{reader_model_forward.1} parent=0 // pred_check
    _
  $region27: #{reader_model_forward.1} parent=0 // pred_check_branch
    %36 = sbr.rel (0) target = $region29
  $region28: #{reader_model_forward.1} parent=0 // pred_region
    _
  $region29: #{reader_model_forward.1} parent=0 // pred_fallthru
    _
  // Predicated region
  $region30: #{reader_model_forward.1} parent=0 // pred_check
    _
  $region31: #{reader_model_forward.1} parent=0 // pred_check_branch
    %38 = sbr.rel (0) target = $region33
  $region32: #{reader_model_forward.1} parent=0 // pred_region
    _
  $region33: #{reader_model_forward.1} parent=0 // pred_fallthru
    _
  // Predicated region
  $region34: #{reader_model_forward.1} parent=0 // pred_check
    _
  $region35: #{reader_model_forward.1} parent=0 // pred_check_branch
    %40 = sbr.rel (0) target = $region37
  $region36: #{reader_model_forward.1} parent=0 // pred_region
    _
  $region37: #{reader_model_forward.1} parent=0 // pred_fallthru
    _
  // Predicated region
  $region38: #{reader_model_forward.1} parent=0 // pred_check
    _
  $region39: #{reader_model_forward.1} parent=0 // pred_check_branch
    %42 = sbr.rel (0) target = $region41
  $region40: #{reader_model_forward.1} parent=0 // pred_region
    _
  $region41: #{reader_model_forward.1} parent=0 // pred_fallthru
    _
  // Predicated region
  $region42: #{reader_model_forward.1} parent=0 // pred_check
    _
  $region43: #{reader_model_forward.1} parent=0 // pred_check_branch
    %44 = sbr.rel (0) target = $region45
  $region44: #{reader_model_forward.1} parent=0 // pred_region
    _
  $region45: #{reader_model_forward.1} parent=0 // pred_fallthru
    _
  // Predicated region
  $region46: #{reader_model_forward.1} parent=0 // pred_check
    _
  $region47: #{reader_model_forward.1} parent=0 // pred_check_branch
    %46 = sbr.rel (0) target = $region49
  $region48: #{reader_model_forward.1} parent=0 // pred_region
    _
  $region49: #{reader_model_forward.1} parent=0 // pred_fallthru
    _
  // Predicated region
  $region50: #{reader_model_forward.1} parent=0 // pred_check
    _
  $region51: #{reader_model_forward.1} parent=0 // pred_check_branch
    %48 = sbr.rel (0) target = $region53
  $region52: #{reader_model_forward.1} parent=0 // pred_region
    _
  $region53: #{reader_model_forward.1} parent=0 // pred_fallthru
    _
  // Predicated region
  $region54: #{reader_model_forward.1} parent=0 // pred_check
    _
  $region55: #{reader_model_forward.1} parent=0 // pred_check_branch
    %50 = sbr.rel (0) target = $region57
  $region56: #{reader_model_forward.1} parent=0 // pred_region
    _
  $region57: #{reader_model_forward.1} parent=0 // pred_fallthru
    _
  // Predicated region
  $region58: #{reader_model_forward.1} parent=0 // pred_check
    _
  $region59: #{reader_model_forward.1} parent=0 // pred_check_branch
    %52 = sbr.rel (0) target = $region61
  $region60: #{reader_model_forward.1} parent=0 // pred_region
    _
  $region61: #{reader_model_forward.1} parent=0 // pred_fallthru
    _
  // Predicated region
  $region62: #{reader_model_forward.1} parent=0 // pred_check
    _
  $region63: #{reader_model_forward.1} parent=0 // pred_check_branch
    %54 = sbr.rel (0) target = $region65
  $region64: #{reader_model_forward.1} parent=0 // pred_region
    _
  $region65: #{reader_model_forward.1} parent=0 // pred_fallthru
    _
  %v55 = vld [vmem:[%s2] sm:$0x3]
  %v56 = vld [vmem:[%s0] sm:$0xff]
  %v57 = vld [vmem:[%s0 + $0x8] sm:$0xff]
  %vm58 = vcmask 261120
  %v59 = vsel %vm58, %v56, 0.0
  %60 = vadd.xlane.f32.xlu0 %v59
  %v61 = vpop.xlane.xlu0 %60
  %v62 = vsel %vm58, %v57, 0.0
  %63 = vadd.xlane.f32.xlu0 %v62
  %v64 = vpop.xlane.xlu0 %63
  %v65 = vrcp.pop 32.0
  %v66 = vmul.f32 %v61, %v65
  %v67 = vmul.f32 %v64, %v65
  %v68 = vsub.f32 %v56, %v66
  %v69 = vsub.f32 %v57, %v67
  %v70 = vmul.f32 %v68, %v68
  %v71 = vmul.f32 %v69, %v69
  %v72 = vsel %vm58, %v70, 0.0
  %73 = vadd.xlane.f32.xlu0 %v72
  %v74 = vpop.xlane.xlu0 %73
  %v75 = vsel %vm58, %v71, 0.0
  %76 = vadd.xlane.f32.xlu0 %v75
  %v77 = vpop.xlane.xlu0 %76
  %v78 = vmul.f32 %v74, %v65
  %v79 = vmul.f32 %v77, %v65
  %v80 = vadd.f32 %v78, 1e-12
  %v81 = vadd.f32 %v79, 1e-12
  %v82 = vrsqrt.pop %v80
  %v83 = vrsqrt.pop %v81
  %v84 = vmul.f32 %v68, %v82
  %v85 = vmul.f32 %v69, %v83
  %v86 = vlaneseq
  %v87 = vshrl.u32 %v86, 7
  %v88 = vsub.s32 0, %v87
  %v89 = vrot.slane %v55, %v88
  %v90 = vmul.f32 %v84, %v89
  %v91 = vmul.f32 %v85, %v89
  %v92 = vlaneseq
  %v93 = vshrl.u32 %v92, 7
  %v94 = vsub.s32 1, %v93
  %v95 = vrot.slane %v55, %v94
  %v96 = vadd.f32 %v90, %v95
  %v97 = vadd.f32 %v91, %v95
  %v98 = vld [vmem:[%s1] sm:$0x1]
  %v99 = vld [vmem:[%s1 + $0x1] sm:$0x1]
  %v100 = vsub.f32 %v98, 1.0
  %v101 = vsub.f32 %v99, 1.0
  %v102 = vmul.f32 %v100, 1e+09
  %v103 = vmul.f32 %v101, 1e+09
  %v104 = vld [vmem:[%s9] sm:$0x3f]
  %v105 = vld [vmem:[%s5] sm:$0xff]
  %v106 = vld [vmem:[%s5 + $0x8] sm:$0xff]
  %v107 = vld [vmem:[%s5 + $0x10] sm:$0xff]
  %v108 = vld [vmem:[%s5 + $0x18] sm:$0xff]
  %v109 = vld [vmem:[%s3] sm:$0xff]
  %v110 = vld [vmem:[%s3 + $0x8] sm:$0xff]
  %v111 = vld [vmem:[%s3 + $0x10] sm:$0xff]
  %v112 = vld [vmem:[%s3 + $0x18] sm:$0xff]
  %v113 = vld [vmem:[%s4] sm:$0x1]
  %v115 = vlaneseq
  %v116 = vshrl.u32 %v115, 7
  %v117 = vsub.s32 0, %v116
  %v118 = vrot.slane %v113, %v117
  %v121 = vsel %vm58, %v96, 0
  %v124 = vsel %vm58, %v97, 0
  %126 = vmatprep.subr.mxu0 0.0
  %127 = vmatpush1.msra.mxu0 %v109
  %128 = vmatprep.subr.mxu0 0.0
  %129 = vmatpush1.msra.mxu0 %v110
  %130 = vmatprep.subr.mxu0 0.0
  %131 = vmatpush1.msra.mxu0 %v111
  %132 = vmatprep.subr.mxu0 0.0
  %133 = vmatpush1.msra.mxu0 %v112
  %134 = vmatprep.subr.mxu0 0.0
  %135 = vmatpush1.msra.mxu0 0.0
  %136 = vmatprep.subr.mxu0 0.0
  %137 = vmatpush1.msra.mxu0 0.0
  %138 = vmatprep.subr.mxu0 0.0
  %139 = vmatpush1.msra.mxu0 0.0
  %140 = vmatprep.subr.mxu0 0.0
  %141 = vmatpush1.msra.mxu0 0.0
  %142 = vmatprep.subr.mxu0 0.0
  %143 = vmatpush1.msra.mxu0 0.0
  %144 = vmatprep.subr.mxu0 0.0
  %145 = vmatpush1.msra.mxu0 0.0
  %146 = vmatprep.subr.mxu0 0.0
  %147 = vmatpush1.msra.mxu0 0.0
  %148 = vmatprep.subr.mxu0 0.0
  %149 = vmatpush1.msra.mxu0 0.0
  %150 = vmatprep.subr.mxu0 0.0
  %151 = vmatpush1.msra.mxu0 0.0
  %152 = vmatprep.subr.mxu0 0.0
  %153 = vmatpush1.msra.mxu0 0.0
  %154 = vmatprep.subr.mxu0 0.0
  %155 = vmatpush1.msra.mxu0 0.0
  %156 = vmatprep.subr.mxu0 0.0
  %157 = vmatpush1.msra.mxu0 0.0
  %158 = vmatprep.subr.mxu0 0.0
  %159 = vmatpush1.msra.mxu0 0.0
  %160 = vmatprep.subr.mxu0 0.0
  %161 = vmatpush1.msra.mxu0 0.0
  %162 = vmatprep.subr.mxu0 0.0
  %163 = vmatpush1.msra.mxu0 0.0
  %164 = vmatprep.subr.mxu0 0.0
  %165 = vmatpush1.msra.mxu0 0.0
  %166 = vmatprep.subr.mxu0 0.0
  %167 = vmatpush1.msra.mxu0 0.0
  %168 = vmatprep.subr.mxu0 0.0
  %169 = vmatpush1.msra.mxu0 0.0
  %170 = vmatprep.subr.mxu0 0.0
  %171 = vmatpush1.msra.mxu0 0.0
  %172 = vmatprep.subr.mxu0 0.0
  %173 = vmatpush1.msra.mxu0 0.0
  %174 = vmatprep.subr.mxu0 0.0
  %175 = vmatpush1.msra.mxu0 0.0
  %176 = vmatprep.subr.mxu0 0.0
  %177 = vmatpush1.msra.mxu0 0.0
  %178 = vmatprep.subr.mxu0 0.0
  %179 = vmatpush1.msra.mxu0 0.0
  %180 = vmatprep.subr.mxu0 0.0
  %181 = vmatpush1.msra.mxu0 0.0
  %182 = vmatprep.subr.mxu0 0.0
  %183 = vmatpush1.msra.mxu0 0.0
  %184 = vmatprep.subr.mxu0 0.0
  %185 = vmatpush1.msra.mxu0 0.0
  %186 = vmatprep.subr.mxu0 0.0
  %187 = vmatpush1.msra.mxu0 0.0
  %188 = vmatprep.subr.mxu0 0.0
  %189 = vmatpush1.msra.mxu0 0.0
  %190 = vmatprep.mubr.f32.mxu0 0.0
  %191 = vmatmul.mubr.f32.gmra.mrb[0].mxu0 %v121
  %v192 = vpop.f32.mrb[0].mxu0
  %v193 = vadd.f32 %v118, %v192
  %v194 = vpop.f32.mrb[0].mxu0
  %195 = vmatprep.mubr.f32.mxu0 0.0
  %196 = vmatmul.mubr.f32.gmra.mrb[0].mxu0 %v124
  %v197 = vpop.f32.mrb[0].mxu0
  %v198 = vadd.f32 %v118, %v197
  %v199 = vpop.f32.mrb[0].mxu0
  %200 = vdwg.mxu0
  %202 = vrot.lane.b32.xlu0 %v193, 96
  %v203 = vpop.permute.xlu0 %202
  %vm204 = vcmask 130048
  %v205 = vsel %vm204, %v193, 0
  %v207 = vsel %vm204, %v203, 0
  %209 = vmatprep.subr.mxu0 0.0
  %210 = vmatpush1.xpose.msra.mxu0 %v207
  %211 = vmatprep.subr.mxu0 0.0
  %212 = vmatpush1.xpose.msra.mxu0 0.0
  %213 = vmatprep.subr.mxu0 0.0
  %214 = vmatpush1.xpose.msra.mxu0 0.0
  %215 = vmatprep.subr.mxu0 0.0
  %216 = vmatpush1.xpose.msra.mxu0 0.0
  %217 = vmatprep.subr.mxu0 0.0
  %218 = vmatpush1.xpose.msra.mxu0 0.0
  %219 = vmatprep.subr.mxu0 0.0
  %220 = vmatpush1.xpose.msra.mxu0 0.0
  %221 = vmatprep.subr.mxu0 0.0
  %222 = vmatpush1.xpose.msra.mxu0 0.0
  %223 = vmatprep.subr.mxu0 0.0
  %224 = vmatpush1.xpose.msra.mxu0 0.0
  %225 = vmatprep.subr.mxu0 0.0
  %226 = vmatpush1.xpose.msra.mxu0 0.0
  %227 = vmatprep.subr.mxu0 0.0
  %228 = vmatpush1.xpose.msra.mxu0 0.0
  %229 = vmatprep.subr.mxu0 0.0
  %230 = vmatpush1.xpose.msra.mxu0 0.0
  %231 = vmatprep.subr.mxu0 0.0
  %232 = vmatpush1.xpose.msra.mxu0 0.0
  %233 = vmatprep.subr.mxu0 0.0
  %234 = vmatpush1.xpose.msra.mxu0 0.0
  %235 = vmatprep.subr.mxu0 0.0
  %236 = vmatpush1.xpose.msra.mxu0 0.0
  %237 = vmatprep.subr.mxu0 0.0
  %238 = vmatpush1.xpose.msra.mxu0 0.0
  %239 = vmatprep.subr.mxu0 0.0
  %240 = vmatpush1.xpose.msra.mxu0 0.0
  %241 = vmatprep.subr.mxu0 0.0
  %242 = vmatpush1.xpose.msra.mxu0 0.0
  %243 = vmatprep.subr.mxu0 0.0
  %244 = vmatpush1.xpose.msra.mxu0 0.0
  %245 = vmatprep.subr.mxu0 0.0
  %246 = vmatpush1.xpose.msra.mxu0 0.0
  %247 = vmatprep.subr.mxu0 0.0
  %248 = vmatpush1.xpose.msra.mxu0 0.0
  %249 = vmatprep.subr.mxu0 0.0
  %250 = vmatpush1.xpose.msra.mxu0 0.0
  %251 = vmatprep.subr.mxu0 0.0
  %252 = vmatpush1.xpose.msra.mxu0 0.0
  %253 = vmatprep.subr.mxu0 0.0
  %254 = vmatpush1.xpose.msra.mxu0 0.0
  %255 = vmatprep.subr.mxu0 0.0
  %256 = vmatpush1.xpose.msra.mxu0 0.0
  %257 = vmatprep.subr.mxu0 0.0
  %258 = vmatpush1.xpose.msra.mxu0 0.0
  %259 = vmatprep.subr.mxu0 0.0
  %260 = vmatpush1.xpose.msra.mxu0 0.0
  %261 = vmatprep.subr.mxu0 0.0
  %262 = vmatpush1.xpose.msra.mxu0 0.0
  %263 = vmatprep.subr.mxu0 0.0
  %264 = vmatpush1.xpose.msra.mxu0 0.0
  %265 = vmatprep.subr.mxu0 0.0
  %266 = vmatpush1.xpose.msra.mxu0 0.0
  %267 = vmatprep.subr.mxu0 0.0
  %268 = vmatpush1.xpose.msra.mxu0 0.0
  %269 = vmatprep.subr.mxu0 0.0
  %270 = vmatpush1.xpose.msra.mxu0 0.0
  %271 = vmatprep.subr.mxu0 0.0
  %272 = vmatpush1.xpose.msra.mxu0 0.0
  %273 = vmatprep.mubr.f32.mxu0 0.0
  %274 = vmatmul.mubr.f32.gmra.mrb[0].mxu0 %v205
  %v275 = vpop.f32.mrb[0].mxu0
  %v276 = vadd.f32 0.0, %v275
  %v277 = vpop.f32.mrb[0].mxu0
  %278 = vdwg.mxu0
  %280 = vrot.lane.b32.xlu0 %v198, 96
  %v281 = vpop.permute.xlu0 %280
  %v282 = vsel %vm204, %v198, 0
  %v284 = vsel %vm204, %v281, 0
  %286 = vmatprep.subr.mxu0 0.0
  %287 = vmatpush1.xpose.msra.mxu0 %v284
  %288 = vmatprep.subr.mxu0 0.0
  %289 = vmatpush1.xpose.msra.mxu0 0.0
  %290 = vmatprep.subr.mxu0 0.0
  %291 = vmatpush1.xpose.msra.mxu0 0.0
  %292 = vmatprep.subr.mxu0 0.0
  %293 = vmatpush1.xpose.msra.mxu0 0.0
  %294 = vmatprep.subr.mxu0 0.0
  %295 = vmatpush1.xpose.msra.mxu0 0.0
  %296 = vmatprep.subr.mxu0 0.0
  %297 = vmatpush1.xpose.msra.mxu0 0.0
  %298 = vmatprep.subr.mxu0 0.0
  %299 = vmatpush1.xpose.msra.mxu0 0.0
  %300 = vmatprep.subr.mxu0 0.0
  %301 = vmatpush1.xpose.msra.mxu0 0.0
  %302 = vmatprep.subr.mxu0 0.0
  %303 = vmatpush1.xpose.msra.mxu0 0.0
  %304 = vmatprep.subr.mxu0 0.0
  %305 = vmatpush1.xpose.msra.mxu0 0.0
  %306 = vmatprep.subr.mxu0 0.0
  %307 = vmatpush1.xpose.msra.mxu0 0.0
  %308 = vmatprep.subr.mxu0 0.0
  %309 = vmatpush1.xpose.msra.mxu0 0.0
  %310 = vmatprep.subr.mxu0 0.0
  %311 = vmatpush1.xpose.msra.mxu0 0.0
  %312 = vmatprep.subr.mxu0 0.0
  %313 = vmatpush1.xpose.msra.mxu0 0.0
  %314 = vmatprep.subr.mxu0 0.0
  %315 = vmatpush1.xpose.msra.mxu0 0.0
  %316 = vmatprep.subr.mxu0 0.0
  %317 = vmatpush1.xpose.msra.mxu0 0.0
  %318 = vmatprep.subr.mxu0 0.0
  %319 = vmatpush1.xpose.msra.mxu0 0.0
  %320 = vmatprep.subr.mxu0 0.0
  %321 = vmatpush1.xpose.msra.mxu0 0.0
  %322 = vmatprep.subr.mxu0 0.0
  %323 = vmatpush1.xpose.msra.mxu0 0.0
  %324 = vmatprep.subr.mxu0 0.0
  %325 = vmatpush1.xpose.msra.mxu0 0.0
  %326 = vmatprep.subr.mxu0 0.0
  %327 = vmatpush1.xpose.msra.mxu0 0.0
  %328 = vmatprep.subr.mxu0 0.0
  %329 = vmatpush1.xpose.msra.mxu0 0.0
  %330 = vmatprep.subr.mxu0 0.0
  %331 = vmatpush1.xpose.msra.mxu0 0.0
  %332 = vmatprep.subr.mxu0 0.0
  %333 = vmatpush1.xpose.msra.mxu0 0.0
  %334 = vmatprep.subr.mxu0 0.0
  %335 = vmatpush1.xpose.msra.mxu0 0.0
  %336 = vmatprep.subr.mxu0 0.0
  %337 = vmatpush1.xpose.msra.mxu0 0.0
  %338 = vmatprep.subr.mxu0 0.0
  %339 = vmatpush1.xpose.msra.mxu0 0.0
  %340 = vmatprep.subr.mxu0 0.0
  %341 = vmatpush1.xpose.msra.mxu0 0.0
  %342 = vmatprep.subr.mxu0 0.0
  %343 = vmatpush1.xpose.msra.mxu0 0.0
  %344 = vmatprep.subr.mxu0 0.0
  %345 = vmatpush1.xpose.msra.mxu0 0.0
  %346 = vmatprep.subr.mxu0 0.0
  %347 = vmatpush1.xpose.msra.mxu0 0.0
  %348 = vmatprep.subr.mxu0 0.0
  %349 = vmatpush1.xpose.msra.mxu0 0.0
  %350 = vmatprep.mubr.f32.mxu0 0.0
  %351 = vmatmul.mubr.f32.gmra.mrb[0].mxu0 %v282
  %v352 = vpop.f32.mrb[0].mxu0
  %v353 = vadd.f32 0.0, %v352
  %v354 = vpop.f32.mrb[0].mxu0
  %355 = vdwg.mxu0
  %v356 = vmul.f32 %v276, 0.25
  %v357 = vmul.f32 %v353, 0.25
  %v360 = vlaneseq
  %v361 = vshrl.u32 %v360, 7
  %v362 = vsub.s32 0, %v361
  %v363 = vrot.slane %v102, %v362
  %v364 = vlaneseq
  %v365 = vshrl.u32 %v364, 7
  %v366 = vsub.s32 0, %v365
  %v367 = vrot.slane %v103, %v366
  %v370 = vadd.f32 %v356, %v363
  %v371 = vadd.f32 %v357, %v367
  %vm372 = vcmask 64512
  %v373 = vsel %vm372, %v370, -inf
  %374 = vmax.xlane.f32.xlu0 %v373
  %v375 = vpop.xlane.xlu0 %374
  %v376 = vsel %vm372, %v371, -inf
  %377 = vmax.xlane.f32.xlu0 %v376
  %v378 = vpop.xlane.xlu0 %377
  %v379 = vsub.f32 %v370, %v375
  %v380 = vsub.f32 %v371, %v378
  %v381 = vmul.f32 %v379, 1.442695
  %v382 = vpow.pop %v381
  %v383 = vmul.f32 %v380, 1.442695
  %v384 = vpow.pop %v383
  %v385 = vsel %vm372, %v382, 0.0
  %386 = vadd.xlane.f32.xlu0 %v385
  %v387 = vpop.xlane.xlu0 %386
  %v388 = vsel %vm372, %v384, 0.0
  %389 = vadd.xlane.f32.xlu0 %v388
  %v390 = vpop.xlane.xlu0 %389
  %v391 = vrcp.pop %v387
  %v392 = vrcp.pop %v390
  %v393 = vmul.f32 %v382, %v391
  %v394 = vmul.f32 %v384, %v392
  %395 = vrot.lane.b32.xlu0 %v193, 64
  %v396 = vpop.permute.xlu0 %395
  %v399 = vsel %vm372, %v393, 0
  %401 = vmatprep.subr.mxu0 0.0
  %402 = vmatpush1.msra.mxu0 %v396
  %403 = vmatprep.subr.mxu0 0.0
  %404 = vmatpush1.msra.mxu0 0.0
  %405 = vmatprep.subr.mxu0 0.0
  %406 = vmatpush1.msra.mxu0 0.0
  %407 = vmatprep.subr.mxu0 0.0
  %408 = vmatpush1.msra.mxu0 0.0
  %409 = vmatprep.subr.mxu0 0.0
  %410 = vmatpush1.msra.mxu0 0.0
  %411 = vmatprep.subr.mxu0 0.0
  %412 = vmatpush1.msra.mxu0 0.0
  %413 = vmatprep.subr.mxu0 0.0
  %414 = vmatpush1.msra.mxu0 0.0
  %415 = vmatprep.subr.mxu0 0.0
  %416 = vmatpush1.msra.mxu0 0.0
  %417 = vmatprep.subr.mxu0 0.0
  %418 = vmatpush1.msra.mxu0 0.0
  %419 = vmatprep.subr.mxu0 0.0
  %420 = vmatpush1.msra.mxu0 0.0
  %421 = vmatprep.subr.mxu0 0.0
  %422 = vmatpush1.msra.mxu0 0.0
  %423 = vmatprep.subr.mxu0 0.0
  %424 = vmatpush1.msra.mxu0 0.0
  %425 = vmatprep.subr.mxu0 0.0
  %426 = vmatpush1.msra.mxu0 0.0
  %427 = vmatprep.subr.mxu0 0.0
  %428 = vmatpush1.msra.mxu0 0.0
  %429 = vmatprep.subr.mxu0 0.0
  %430 = vmatpush1.msra.mxu0 0.0
  %431 = vmatprep.subr.mxu0 0.0
  %432 = vmatpush1.msra.mxu0 0.0
  %433 = vmatprep.subr.mxu0 0.0
  %434 = vmatpush1.msra.mxu0 0.0
  %435 = vmatprep.subr.mxu0 0.0
  %436 = vmatpush1.msra.mxu0 0.0
  %437 = vmatprep.subr.mxu0 0.0
  %438 = vmatpush1.msra.mxu0 0.0
  %439 = vmatprep.subr.mxu0 0.0
  %440 = vmatpush1.msra.mxu0 0.0
  %441 = vmatprep.subr.mxu0 0.0
  %442 = vmatpush1.msra.mxu0 0.0
  %443 = vmatprep.subr.mxu0 0.0
  %444 = vmatpush1.msra.mxu0 0.0
  %445 = vmatprep.subr.mxu0 0.0
  %446 = vmatpush1.msra.mxu0 0.0
  %447 = vmatprep.subr.mxu0 0.0
  %448 = vmatpush1.msra.mxu0 0.0
  %449 = vmatprep.subr.mxu0 0.0
  %450 = vmatpush1.msra.mxu0 0.0
  %451 = vmatprep.subr.mxu0 0.0
  %452 = vmatpush1.msra.mxu0 0.0
  %453 = vmatprep.subr.mxu0 0.0
  %454 = vmatpush1.msra.mxu0 0.0
  %455 = vmatprep.subr.mxu0 0.0
  %456 = vmatpush1.msra.mxu0 0.0
  %457 = vmatprep.subr.mxu0 0.0
  %458 = vmatpush1.msra.mxu0 0.0
  %459 = vmatprep.subr.mxu0 0.0
  %460 = vmatpush1.msra.mxu0 0.0
  %461 = vmatprep.subr.mxu0 0.0
  %462 = vmatpush1.msra.mxu0 0.0
  %463 = vmatprep.subr.mxu0 0.0
  %464 = vmatpush1.msra.mxu0 0.0
  %465 = vmatprep.mubr.f32.mxu0 0.0
  %466 = vmatmul.mubr.f32.gmra.mrb[0].mxu0 %v399
  %v467 = vpop.f32.mrb[0].mxu0
  %v468 = vadd.f32 0.0, %v467
  %v469 = vpop.f32.mrb[0].mxu0
  %470 = vdwg.mxu0
  %471 = vrot.lane.b32.xlu0 %v198, 64
  %v472 = vpop.permute.xlu0 %471
  %v475 = vsel %vm372, %v394, 0
  %477 = vmatprep.subr.mxu0 0.0
  %478 = vmatpush1.msra.mxu0 %v472
  %479 = vmatprep.subr.mxu0 0.0
  %480 = vmatpush1.msra.mxu0 0.0
  %481 = vmatprep.subr.mxu0 0.0
  %482 = vmatpush1.msra.mxu0 0.0
  %483 = vmatprep.subr.mxu0 0.0
  %484 = vmatpush1.msra.mxu0 0.0
  %485 = vmatprep.subr.mxu0 0.0
  %486 = vmatpush1.msra.mxu0 0.0
  %487 = vmatprep.subr.mxu0 0.0
  %488 = vmatpush1.msra.mxu0 0.0
  %489 = vmatprep.subr.mxu0 0.0
  %490 = vmatpush1.msra.mxu0 0.0
  %491 = vmatprep.subr.mxu0 0.0
  %492 = vmatpush1.msra.mxu0 0.0
  %493 = vmatprep.subr.mxu0 0.0
  %494 = vmatpush1.msra.mxu0 0.0
  %495 = vmatprep.subr.mxu0 0.0
  %496 = vmatpush1.msra.mxu0 0.0
  %497 = vmatprep.subr.mxu0 0.0
  %498 = vmatpush1.msra.mxu0 0.0
  %499 = vmatprep.subr.mxu0 0.0
  %500 = vmatpush1.msra.mxu0 0.0
  %501 = vmatprep.subr.mxu0 0.0
  %502 = vmatpush1.msra.mxu0 0.0
  %503 = vmatprep.subr.mxu0 0.0
  %504 = vmatpush1.msra.mxu0 0.0
  %505 = vmatprep.subr.mxu0 0.0
  %506 = vmatpush1.msra.mxu0 0.0
  %507 = vmatprep.subr.mxu0 0.0
  %508 = vmatpush1.msra.mxu0 0.0
  %509 = vmatprep.subr.mxu0 0.0
  %510 = vmatpush1.msra.mxu0 0.0
  %511 = vmatprep.subr.mxu0 0.0
  %512 = vmatpush1.msra.mxu0 0.0
  %513 = vmatprep.subr.mxu0 0.0
  %514 = vmatpush1.msra.mxu0 0.0
  %515 = vmatprep.subr.mxu0 0.0
  %516 = vmatpush1.msra.mxu0 0.0
  %517 = vmatprep.subr.mxu0 0.0
  %518 = vmatpush1.msra.mxu0 0.0
  %519 = vmatprep.subr.mxu0 0.0
  %520 = vmatpush1.msra.mxu0 0.0
  %521 = vmatprep.subr.mxu0 0.0
  %522 = vmatpush1.msra.mxu0 0.0
  %523 = vmatprep.subr.mxu0 0.0
  %524 = vmatpush1.msra.mxu0 0.0
  %525 = vmatprep.subr.mxu0 0.0
  %526 = vmatpush1.msra.mxu0 0.0
  %527 = vmatprep.subr.mxu0 0.0
  %528 = vmatpush1.msra.mxu0 0.0
  %529 = vmatprep.subr.mxu0 0.0
  %530 = vmatpush1.msra.mxu0 0.0
  %531 = vmatprep.subr.mxu0 0.0
  %532 = vmatpush1.msra.mxu0 0.0
  %533 = vmatprep.subr.mxu0 0.0
  %534 = vmatpush1.msra.mxu0 0.0
  %535 = vmatprep.subr.mxu0 0.0
  %536 = vmatpush1.msra.mxu0 0.0
  %537 = vmatprep.subr.mxu0 0.0
  %538 = vmatpush1.msra.mxu0 0.0
  %539 = vmatprep.subr.mxu0 0.0
  %540 = vmatpush1.msra.mxu0 0.0
  %541 = vmatprep.mubr.f32.mxu0 0.0
  %542 = vmatmul.mubr.f32.gmra.mrb[0].mxu0 %v475
  %v543 = vpop.f32.mrb[0].mxu0
  %v544 = vadd.f32 0.0, %v543
  %v545 = vpop.f32.mrb[0].mxu0
  %546 = vdwg.mxu0
  %547 = vrot.lane.b32.xlu0 %v193, 112
  %v548 = vpop.permute.xlu0 %547
  %549 = vrot.lane.b32.xlu0 %v193, 80
  %v550 = vpop.permute.xlu0 %549
  %v551 = vsel %vm204, %v548, 0
  %v553 = vsel %vm204, %v550, 0
  %555 = vmatprep.subr.mxu0 0.0
  %556 = vmatpush1.xpose.msra.mxu0 %v553
  %557 = vmatprep.subr.mxu0 0.0
  %558 = vmatpush1.xpose.msra.mxu0 0.0
  %559 = vmatprep.subr.mxu0 0.0
  %560 = vmatpush1.xpose.msra.mxu0 0.0
  %561 = vmatprep.subr.mxu0 0.0
  %562 = vmatpush1.xpose.msra.mxu0 0.0
  %563 = vmatprep.subr.mxu0 0.0
  %564 = vmatpush1.xpose.msra.mxu0 0.0
  %565 = vmatprep.subr.mxu0 0.0
  %566 = vmatpush1.xpose.msra.mxu0 0.0
  %567 = vmatprep.subr.mxu0 0.0
  %568 = vmatpush1.xpose.msra.mxu0 0.0
  %569 = vmatprep.subr.mxu0 0.0
  %570 = vmatpush1.xpose.msra.mxu0 0.0
  %571 = vmatprep.subr.mxu0 0.0
  %572 = vmatpush1.xpose.msra.mxu0 0.0
  %573 = vmatprep.subr.mxu0 0.0
  %574 = vmatpush1.xpose.msra.mxu0 0.0
  %575 = vmatprep.subr.mxu0 0.0
  %576 = vmatpush1.xpose.msra.mxu0 0.0
  %577 = vmatprep.subr.mxu0 0.0
  %578 = vmatpush1.xpose.msra.mxu0 0.0
  %579 = vmatprep.subr.mxu0 0.0
  %580 = vmatpush1.xpose.msra.mxu0 0.0
  %581 = vmatprep.subr.mxu0 0.0
  %582 = vmatpush1.xpose.msra.mxu0 0.0
  %583 = vmatprep.subr.mxu0 0.0
  %584 = vmatpush1.xpose.msra.mxu0 0.0
  %585 = vmatprep.subr.mxu0 0.0
  %586 = vmatpush1.xpose.msra.mxu0 0.0
  %587 = vmatprep.subr.mxu0 0.0
  %588 = vmatpush1.xpose.msra.mxu0 0.0
  %589 = vmatprep.subr.mxu0 0.0
  %590 = vmatpush1.xpose.msra.mxu0 0.0
  %591 = vmatprep.subr.mxu0 0.0
  %592 = vmatpush1.xpose.msra.mxu0 0.0
  %593 = vmatprep.subr.mxu0 0.0
  %594 = vmatpush1.xpose.msra.mxu0 0.0
  %595 = vmatprep.subr.mxu0 0.0
  %596 = vmatpush1.xpose.msra.mxu0 0.0
  %597 = vmatprep.subr.mxu0 0.0
  %598 = vmatpush1.xpose.msra.mxu0 0.0
  %599 = vmatprep.subr.mxu0 0.0
  %600 = vmatpush1.xpose.msra.mxu0 0.0
  %601 = vmatprep.subr.mxu0 0.0
  %602 = vmatpush1.xpose.msra.mxu0 0.0
  %603 = vmatprep.subr.mxu0 0.0
  %604 = vmatpush1.xpose.msra.mxu0 0.0
  %605 = vmatprep.subr.mxu0 0.0
  %606 = vmatpush1.xpose.msra.mxu0 0.0
  %607 = vmatprep.subr.mxu0 0.0
  %608 = vmatpush1.xpose.msra.mxu0 0.0
  %609 = vmatprep.subr.mxu0 0.0
  %610 = vmatpush1.xpose.msra.mxu0 0.0
  %611 = vmatprep.subr.mxu0 0.0
  %612 = vmatpush1.xpose.msra.mxu0 0.0
  %613 = vmatprep.subr.mxu0 0.0
  %614 = vmatpush1.xpose.msra.mxu0 0.0
  %615 = vmatprep.subr.mxu0 0.0
  %616 = vmatpush1.xpose.msra.mxu0 0.0
  %617 = vmatprep.subr.mxu0 0.0
  %618 = vmatpush1.xpose.msra.mxu0 0.0
  %619 = vmatprep.mubr.f32.mxu0 0.0
  %620 = vmatmul.mubr.f32.gmra.mrb[0].mxu0 %v551
  %v621 = vpop.f32.mrb[0].mxu0
  %v622 = vadd.f32 0.0, %v621
  %v623 = vpop.f32.mrb[0].mxu0
  %624 = vdwg.mxu0
  %625 = vrot.lane.b32.xlu0 %v198, 112
  %v626 = vpop.permute.xlu0 %625
  %627 = vrot.lane.b32.xlu0 %v198, 80
  %v628 = vpop.permute.xlu0 %627
  %v629 = vsel %vm204, %v626, 0
  %v631 = vsel %vm204, %v628, 0
  %633 = vmatprep.subr.mxu0 0.0
  %634 = vmatpush1.xpose.msra.mxu0 %v631
  %635 = vmatprep.subr.mxu0 0.0
  %636 = vmatpush1.xpose.msra.mxu0 0.0
  %637 = vmatprep.subr.mxu0 0.0
  %638 = vmatpush1.xpose.msra.mxu0 0.0
  %639 = vmatprep.subr.mxu0 0.0
  %640 = vmatpush1.xpose.msra.mxu0 0.0
  %641 = vmatprep.subr.mxu0 0.0
  %642 = vmatpush1.xpose.msra.mxu0 0.0
  %643 = vmatprep.subr.mxu0 0.0
  %644 = vmatpush1.xpose.msra.mxu0 0.0
  %645 = vmatprep.subr.mxu0 0.0
  %646 = vmatpush1.xpose.msra.mxu0 0.0
  %647 = vmatprep.subr.mxu0 0.0
  %648 = vmatpush1.xpose.msra.mxu0 0.0
  %649 = vmatprep.subr.mxu0 0.0
  %650 = vmatpush1.xpose.msra.mxu0 0.0
  %651 = vmatprep.subr.mxu0 0.0
  %652 = vmatpush1.xpose.msra.mxu0 0.0
  %653 = vmatprep.subr.mxu0 0.0
  %654 = vmatpush1.xpose.msra.mxu0 0.0
  %655 = vmatprep.subr.mxu0 0.0
  %656 = vmatpush1.xpose.msra.mxu0 0.0
  %657 = vmatprep.subr.mxu0 0.0
  %658 = vmatpush1.xpose.msra.mxu0 0.0
  %659 = vmatprep.subr.mxu0 0.0
  %660 = vmatpush1.xpose.msra.mxu0 0.0
  %661 = vmatprep.subr.mxu0 0.0
  %662 = vmatpush1.xpose.msra.mxu0 0.0
  %663 = vmatprep.subr.mxu0 0.0
  %664 = vmatpush1.xpose.msra.mxu0 0.0
  %665 = vmatprep.subr.mxu0 0.0
  %666 = vmatpush1.xpose.msra.mxu0 0.0
  %667 = vmatprep.subr.mxu0 0.0
  %668 = vmatpush1.xpose.msra.mxu0 0.0
  %669 = vmatprep.subr.mxu0 0.0
  %670 = vmatpush1.xpose.msra.mxu0 0.0
  %671 = vmatprep.subr.mxu0 0.0
  %672 = vmatpush1.xpose.msra.mxu0 0.0
  %673 = vmatprep.subr.mxu0 0.0
  %674 = vmatpush1.xpose.msra.mxu0 0.0
  %675 = vmatprep.subr.mxu0 0.0
  %676 = vmatpush1.xpose.msra.mxu0 0.0
  %677 = vmatprep.subr.mxu0 0.0
  %678 = vmatpush1.xpose.msra.mxu0 0.0
  %679 = vmatprep.subr.mxu0 0.0
  %680 = vmatpush1.xpose.msra.mxu0 0.0
  %681 = vmatprep.subr.mxu0 0.0
  %682 = vmatpush1.xpose.msra.mxu0 0.0
  %683 = vmatprep.subr.mxu0 0.0
  %684 = vmatpush1.xpose.msra.mxu0 0.0
  %685 = vmatprep.subr.mxu0 0.0
  %686 = vmatpush1.xpose.msra.mxu0 0.0
  %687 = vmatprep.subr.mxu0 0.0
  %688 = vmatpush1.xpose.msra.mxu0 0.0
  %689 = vmatprep.subr.mxu0 0.0
  %690 = vmatpush1.xpose.msra.mxu0 0.0
  %691 = vmatprep.subr.mxu0 0.0
  %692 = vmatpush1.xpose.msra.mxu0 0.0
  %693 = vmatprep.subr.mxu0 0.0
  %694 = vmatpush1.xpose.msra.mxu0 0.0
  %695 = vmatprep.subr.mxu0 0.0
  %696 = vmatpush1.xpose.msra.mxu0 0.0
  %697 = vmatprep.mubr.f32.mxu0 0.0
  %698 = vmatmul.mubr.f32.gmra.mrb[0].mxu0 %v629
  %v699 = vpop.f32.mrb[0].mxu0
  %v700 = vadd.f32 0.0, %v699
  %v701 = vpop.f32.mrb[0].mxu0
  %702 = vdwg.mxu0
  %v703 = vmul.f32 %v622, 0.25
  %v704 = vmul.f32 %v700, 0.25
  %v705 = vadd.f32 %v703, %v363
  %v706 = vadd.f32 %v704, %v367
  %v707 = vsel %vm372, %v705, -inf
  %708 = vmax.xlane.f32.xlu0 %v707
  %v709 = vpop.xlane.xlu0 %708
  %v710 = vsel %vm372, %v706, -inf
  %711 = vmax.xlane.f32.xlu0 %v710
  %v712 = vpop.xlane.xlu0 %711
  %v713 = vsub.f32 %v705, %v709
  %v714 = vsub.f32 %v706, %v712
  %v715 = vmul.f32 %v713, 1.442695
  %v716 = vpow.pop %v715
  %v717 = vmul.f32 %v714, 1.442695
  %v718 = vpow.pop %v717
  %v719 = vsel %vm372, %v716, 0.0
  %720 = vadd.xlane.f32.xlu0 %v719
  %v721 = vpop.xlane.xlu0 %720
  %v722 = vsel %vm372, %v718, 0.0
  %723 = vadd.xlane.f32.xlu0 %v722
  %v724 = vpop.xlane.xlu0 %723
  %v725 = vrcp.pop %v721
  %v726 = vrcp.pop %v724
  %v727 = vmul.f32 %v716, %v725
  %v728 = vmul.f32 %v718, %v726
  %729 = vrot.lane.b32.xlu0 %v193, 48
  %v730 = vpop.permute.xlu0 %729
  %v733 = vsel %vm372, %v727, 0
  %735 = vmatprep.subr.mxu0 0.0
  %736 = vmatpush1.msra.mxu0 %v730
  %737 = vmatprep.subr.mxu0 0.0
  %738 = vmatpush1.msra.mxu0 0.0
  %739 = vmatprep.subr.mxu0 0.0
  %740 = vmatpush1.msra.mxu0 0.0
  %741 = vmatprep.subr.mxu0 0.0
  %742 = vmatpush1.msra.mxu0 0.0
  %743 = vmatprep.subr.mxu0 0.0
  %744 = vmatpush1.msra.mxu0 0.0
  %745 = vmatprep.subr.mxu0 0.0
  %746 = vmatpush1.msra.mxu0 0.0
  %747 = vmatprep.subr.mxu0 0.0
  %748 = vmatpush1.msra.mxu0 0.0
  %749 = vmatprep.subr.mxu0 0.0
  %750 = vmatpush1.msra.mxu0 0.0
  %751 = vmatprep.subr.mxu0 0.0
  %752 = vmatpush1.msra.mxu0 0.0
  %753 = vmatprep.subr.mxu0 0.0
  %754 = vmatpush1.msra.mxu0 0.0
  %755 = vmatprep.subr.mxu0 0.0
  %756 = vmatpush1.msra.mxu0 0.0
  %757 = vmatprep.subr.mxu0 0.0
  %758 = vmatpush1.msra.mxu0 0.0
  %759 = vmatprep.subr.mxu0 0.0
  %760 = vmatpush1.msra.mxu0 0.0
  %761 = vmatprep.subr.mxu0 0.0
  %762 = vmatpush1.msra.mxu0 0.0
  %763 = vmatprep.subr.mxu0 0.0
  %764 = vmatpush1.msra.mxu0 0.0
  %765 = vmatprep.subr.mxu0 0.0
  %766 = vmatpush1.msra.mxu0 0.0
  %767 = vmatprep.subr.mxu0 0.0
  %768 = vmatpush1.msra.mxu0 0.0
  %769 = vmatprep.subr.mxu0 0.0
  %770 = vmatpush1.msra.mxu0 0.0
  %771 = vmatprep.subr.mxu0 0.0
  %772 = vmatpush1.msra.mxu0 0.0
  %773 = vmatprep.subr.mxu0 0.0
  %774 = vmatpush1.msra.mxu0 0.0
  %775 = vmatprep.subr.mxu0 0.0
  %776 = vmatpush1.msra.mxu0 0.0
  %777 = vmatprep.subr.mxu0 0.0
  %778 = vmatpush1.msra.mxu0 0.0
  %779 = vmatprep.subr.mxu0 0.0
  %780 = vmatpush1.msra.mxu0 0.0
  %781 = vmatprep.subr.mxu0 0.0
  %782 = vmatpush1.msra.mxu0 0.0
  %783 = vmatprep.subr.mxu0 0.0
  %784 = vmatpush1.msra.mxu0 0.0
  %785 = vmatprep.subr.mxu0 0.0
  %786 = vmatpush1.msra.mxu0 0.0
  %787 = vmatprep.subr.mxu0 0.0
  %788 = vmatpush1.msra.mxu0 0.0
  %789 = vmatprep.subr.mxu0 0.0
  %790 = vmatpush1.msra.mxu0 0.0
  %791 = vmatprep.subr.mxu0 0.0
  %792 = vmatpush1.msra.mxu0 0.0
  %793 = vmatprep.subr.mxu0 0.0
  %794 = vmatpush1.msra.mxu0 0.0
  %795 = vmatprep.subr.mxu0 0.0
  %796 = vmatpush1.msra.mxu0 0.0
  %797 = vmatprep.subr.mxu0 0.0
  %798 = vmatpush1.msra.mxu0 0.0
  %799 = vmatprep.mubr.f32.mxu0 0.0
  %800 = vmatmul.mubr.f32.gmra.mrb[0].mxu0 %v733
  %v801 = vpop.f32.mrb[0].mxu0
  %v802 = vadd.f32 0.0, %v801
  %v803 = vpop.f32.mrb[0].mxu0
  %804 = vdwg.mxu0
  %805 = vrot.lane.b32.xlu0 %v198, 48
  %v806 = vpop.permute.xlu0 %805
  %v809 = vsel %vm372, %v728, 0
  %811 = vmatprep.subr.mxu0 0.0
  %812 = vmatpush1.msra.mxu0 %v806
  %813 = vmatprep.subr.mxu0 0.0
  %814 = vmatpush1.msra.mxu0 0.0
  %815 = vmatprep.subr.mxu0 0.0
  %816 = vmatpush1.msra.mxu0 0.0
  %817 = vmatprep.subr.mxu0 0.0
  %818 = vmatpush1.msra.mxu0 0.0
  %819 = vmatprep.subr.mxu0 0.0
  %820 = vmatpush1.msra.mxu0 0.0
  %821 = vmatprep.subr.mxu0 0.0
  %822 = vmatpush1.msra.mxu0 0.0
  %823 = vmatprep.subr.mxu0 0.0
  %824 = vmatpush1.msra.mxu0 0.0
  %825 = vmatprep.subr.mxu0 0.0
  %826 = vmatpush1.msra.mxu0 0.0
  %827 = vmatprep.subr.mxu0 0.0
  %828 = vmatpush1.msra.mxu0 0.0
  %829 = vmatprep.subr.mxu0 0.0
  %830 = vmatpush1.msra.mxu0 0.0
  %831 = vmatprep.subr.mxu0 0.0
  %832 = vmatpush1.msra.mxu0 0.0
  %833 = vmatprep.subr.mxu0 0.0
  %834 = vmatpush1.msra.mxu0 0.0
  %835 = vmatprep.subr.mxu0 0.0
  %836 = vmatpush1.msra.mxu0 0.0
  %837 = vmatprep.subr.mxu0 0.0
  %838 = vmatpush1.msra.mxu0 0.0
  %839 = vmatprep.subr.mxu0 0.0
  %840 = vmatpush1.msra.mxu0 0.0
  %841 = vmatprep.subr.mxu0 0.0
  %842 = vmatpush1.msra.mxu0 0.0
  %843 = vmatprep.subr.mxu0 0.0
  %844 = vmatpush1.msra.mxu0 0.0
  %845 = vmatprep.subr.mxu0 0.0
  %846 = vmatpush1.msra.mxu0 0.0
  %847 = vmatprep.subr.mxu0 0.0
  %848 = vmatpush1.msra.mxu0 0.0
  %849 = vmatprep.subr.mxu0 0.0
  %850 = vmatpush1.msra.mxu0 0.0
  %851 = vmatprep.subr.mxu0 0.0
  %852 = vmatpush1.msra.mxu0 0.0
  %853 = vmatprep.subr.mxu0 0.0
  %854 = vmatpush1.msra.mxu0 0.0
  %855 = vmatprep.subr.mxu0 0.0
  %856 = vmatpush1.msra.mxu0 0.0
  %857 = vmatprep.subr.mxu0 0.0
  %858 = vmatpush1.msra.mxu0 0.0
  %859 = vmatprep.subr.mxu0 0.0
  %860 = vmatpush1.msra.mxu0 0.0
  %861 = vmatprep.subr.mxu0 0.0
  %862 = vmatpush1.msra.mxu0 0.0
  %863 = vmatprep.subr.mxu0 0.0
  %864 = vmatpush1.msra.mxu0 0.0
  %865 = vmatprep.subr.mxu0 0.0
  %866 = vmatpush1.msra.mxu0 0.0
  %867 = vmatprep.subr.mxu0 0.0
  %868 = vmatpush1.msra.mxu0 0.0
  %869 = vmatprep.subr.mxu0 0.0
  %870 = vmatpush1.msra.mxu0 0.0
  %871 = vmatprep.subr.mxu0 0.0
  %872 = vmatpush1.msra.mxu0 0.0
  %873 = vmatprep.subr.mxu0 0.0
  %874 = vmatpush1.msra.mxu0 0.0
  %875 = vmatprep.mubr.f32.mxu0 0.0
  %876 = vmatmul.mubr.f32.gmra.mrb[0].mxu0 %v809
  %v877 = vpop.f32.mrb[0].mxu0
  %v878 = vadd.f32 0.0, %v877
  %v879 = vpop.f32.mrb[0].mxu0
  %880 = vdwg.mxu0
  %v882 = vsel %vm204, %v802, 0
  %v885 = vsel %vm204, %v878, 0
  %887 = vmatprep.subr.mxu0 0.0
  %888 = vmatpush1.msra.mxu0 %v107
  %889 = vmatprep.subr.mxu0 0.0
  %890 = vmatpush1.msra.mxu0 %v108
  %891 = vmatprep.subr.mxu0 0.0
  %892 = vmatpush1.msra.mxu0 0.0
  %893 = vmatprep.subr.mxu0 0.0
  %894 = vmatpush1.msra.mxu0 0.0
  %895 = vmatprep.subr.mxu0 0.0
  %896 = vmatpush1.msra.mxu0 0.0
  %897 = vmatprep.subr.mxu0 0.0
  %898 = vmatpush1.msra.mxu0 0.0
  %899 = vmatprep.subr.mxu0 0.0
  %900 = vmatpush1.msra.mxu0 0.0
  %901 = vmatprep.subr.mxu0 0.0
  %902 = vmatpush1.msra.mxu0 0.0
  %903 = vmatprep.subr.mxu0 0.0
  %904 = vmatpush1.msra.mxu0 0.0
  %905 = vmatprep.subr.mxu0 0.0
  %906 = vmatpush1.msra.mxu0 0.0
  %907 = vmatprep.subr.mxu0 0.0
  %908 = vmatpush1.msra.mxu0 0.0
  %909 = vmatprep.subr.mxu0 0.0
  %910 = vmatpush1.msra.mxu0 0.0
  %911 = vmatprep.subr.mxu0 0.0
  %912 = vmatpush1.msra.mxu0 0.0
  %913 = vmatprep.subr.mxu0 0.0
  %914 = vmatpush1.msra.mxu0 0.0
  %915 = vmatprep.subr.mxu0 0.0
  %916 = vmatpush1.msra.mxu0 0.0
  %917 = vmatprep.subr.mxu0 0.0
  %918 = vmatpush1.msra.mxu0 0.0
  %919 = vmatprep.subr.mxu0 0.0
  %920 = vmatpush1.msra.mxu0 0.0
  %921 = vmatprep.subr.mxu0 0.0
  %922 = vmatpush1.msra.mxu0 0.0
  %923 = vmatprep.subr.mxu0 0.0
  %924 = vmatpush1.msra.mxu0 0.0
  %925 = vmatprep.subr.mxu0 0.0
  %926 = vmatpush1.msra.mxu0 0.0
  %927 = vmatprep.subr.mxu0 0.0
  %928 = vmatpush1.msra.mxu0 0.0
  %929 = vmatprep.subr.mxu0 0.0
  %930 = vmatpush1.msra.mxu0 0.0
  %931 = vmatprep.subr.mxu0 0.0
  %932 = vmatpush1.msra.mxu0 0.0
  %933 = vmatprep.subr.mxu0 0.0
  %934 = vmatpush1.msra.mxu0 0.0
  %935 = vmatprep.subr.mxu0 0.0
  %936 = vmatpush1.msra.mxu0 0.0
  %937 = vmatprep.subr.mxu0 0.0
  %938 = vmatpush1.msra.mxu0 0.0
  %939 = vmatprep.subr.mxu0 0.0
  %940 = vmatpush1.msra.mxu0 0.0
  %941 = vmatprep.subr.mxu0 0.0
  %942 = vmatpush1.msra.mxu0 0.0
  %943 = vmatprep.subr.mxu0 0.0
  %944 = vmatpush1.msra.mxu0 0.0
  %945 = vmatprep.subr.mxu0 0.0
  %946 = vmatpush1.msra.mxu0 0.0
  %947 = vmatprep.subr.mxu0 0.0
  %948 = vmatpush1.msra.mxu0 0.0
  %949 = vmatprep.subr.mxu0 0.0
  %950 = vmatpush1.msra.mxu0 0.0
  %951 = vmatprep.mubr.f32.mxu0 0.0
  %952 = vmatmul.mubr.f32.gmra.mrb[0].mxu0 %v882
  %v953 = vpop.f32.mrb[0].mxu0
  %v954 = vadd.f32 0.0, %v953
  %v955 = vpop.f32.mrb[0].mxu0
  %956 = vmatprep.mubr.f32.mxu0 0.0
  %957 = vmatmul.mubr.f32.gmra.mrb[0].mxu0 %v885
  %v958 = vpop.f32.mrb[0].mxu0
  %v959 = vadd.f32 0.0, %v958
  %v960 = vpop.f32.mrb[0].mxu0
  %961 = vdwg.mxu0
  %v963 = vsel %vm204, %v468, 0
  %v966 = vsel %vm204, %v544, 0
  %968 = vmatprep.subr.mxu0 0.0
  %969 = vmatpush1.msra.mxu0 %v105
  %970 = vmatprep.subr.mxu0 0.0
  %971 = vmatpush1.msra.mxu0 %v106
  %972 = vmatprep.subr.mxu0 0.0
  %973 = vmatpush1.msra.mxu0 0.0
  %974 = vmatprep.subr.mxu0 0.0
  %975 = vmatpush1.msra.mxu0 0.0
  %976 = vmatprep.subr.mxu0 0.0
  %977 = vmatpush1.msra.mxu0 0.0
  %978 = vmatprep.subr.mxu0 0.0
  %979 = vmatpush1.msra.mxu0 0.0
  %980 = vmatprep.subr.mxu0 0.0
  %981 = vmatpush1.msra.mxu0 0.0
  %982 = vmatprep.subr.mxu0 0.0
  %983 = vmatpush1.msra.mxu0 0.0
  %984 = vmatprep.subr.mxu0 0.0
  %985 = vmatpush1.msra.mxu0 0.0
  %986 = vmatprep.subr.mxu0 0.0
  %987 = vmatpush1.msra.mxu0 0.0
  %988 = vmatprep.subr.mxu0 0.0
  %989 = vmatpush1.msra.mxu0 0.0
  %990 = vmatprep.subr.mxu0 0.0
  %991 = vmatpush1.msra.mxu0 0.0
  %992 = vmatprep.subr.mxu0 0.0
  %993 = vmatpush1.msra.mxu0 0.0
  %994 = vmatprep.subr.mxu0 0.0
  %995 = vmatpush1.msra.mxu0 0.0
  %996 = vmatprep.subr.mxu0 0.0
  %997 = vmatpush1.msra.mxu0 0.0
  %998 = vmatprep.subr.mxu0 0.0
  %999 = vmatpush1.msra.mxu0 0.0
  %1000 = vmatprep.subr.mxu0 0.0
  %1001 = vmatpush1.msra.mxu0 0.0
  %1002 = vmatprep.subr.mxu0 0.0
  %1003 = vmatpush1.msra.mxu0 0.0
  %1004 = vmatprep.subr.mxu0 0.0
  %1005 = vmatpush1.msra.mxu0 0.0
  %1006 = vmatprep.subr.mxu0 0.0
  %1007 = vmatpush1.msra.mxu0 0.0
  %1008 = vmatprep.subr.mxu0 0.0
  %1009 = vmatpush1.msra.mxu0 0.0
  %1010 = vmatprep.subr.mxu0 0.0
  %1011 = vmatpush1.msra.mxu0 0.0
  %1012 = vmatprep.subr.mxu0 0.0
  %1013 = vmatpush1.msra.mxu0 0.0
  %1014 = vmatprep.subr.mxu0 0.0
  %1015 = vmatpush1.msra.mxu0 0.0
  %1016 = vmatprep.subr.mxu0 0.0
  %1017 = vmatpush1.msra.mxu0 0.0
  %1018 = vmatprep.subr.mxu0 0.0
  %1019 = vmatpush1.msra.mxu0 0.0
  %1020 = vmatprep.subr.mxu0 0.0
  %1021 = vmatpush1.msra.mxu0 0.0
  %1022 = vmatprep.subr.mxu0 0.0
  %1023 = vmatpush1.msra.mxu0 0.0
  %1024 = vmatprep.subr.mxu0 0.0
  %1025 = vmatpush1.msra.mxu0 0.0
  %1026 = vmatprep.subr.mxu0 0.0
  %1027 = vmatpush1.msra.mxu0 0.0
  %1028 = vmatprep.subr.mxu0 0.0
  %1029 = vmatpush1.msra.mxu0 0.0
  %1030 = vmatprep.subr.mxu0 0.0
  %1031 = vmatpush1.msra.mxu0 0.0
  %1032 = vmatprep.mubr.f32.mxu0 0.0
  %1033 = vmatmul.mubr.f32.gmra.mrb[0].mxu0 %v963
  %v1034 = vpop.f32.mrb[0].mxu0
  %v1035 = vadd.f32 %v954, %v1034
  %v1036 = vpop.f32.mrb[0].mxu0
  %1037 = vmatprep.mubr.f32.mxu0 0.0
  %1038 = vmatmul.mubr.f32.gmra.mrb[0].mxu0 %v966
  %v1039 = vpop.f32.mrb[0].mxu0
  %v1040 = vadd.f32 %v959, %v1039
  %v1041 = vpop.f32.mrb[0].mxu0
  %1042 = vdwg.mxu0
  %v1043 = vlaneseq
  %v1044 = vshrl.u32 %v1043, 7
  %v1045 = vsub.s32 0, %v1044
  %v1046 = vrot.slane %v104, %v1045
  %v1047 = vadd.f32 %v1035, %v1046
  %v1048 = vadd.f32 %v1040, %v1046
  %v1049 = vadd.f32 %v96, %v1047
  %v1050 = vadd.f32 %v97, %v1048
  %v1051 = vsel %vm58, %v1049, 0.0
  %1052 = vadd.xlane.f32.xlu0 %v1051
  %v1053 = vpop.xlane.xlu0 %1052
  %v1054 = vsel %vm58, %v1050, 0.0
  %1055 = vadd.xlane.f32.xlu0 %v1054
  %v1056 = vpop.xlane.xlu0 %1055
  %v1057 = vmul.f32 %v1053, %v65
  %v1058 = vmul.f32 %v1056, %v65
  %v1059 = vsub.f32 %v1049, %v1057
  %v1060 = vsub.f32 %v1050, %v1058
  %v1061 = vmul.f32 %v1059, %v1059
  %v1062 = vmul.f32 %v1060, %v1060
  %v1063 = vsel %vm58, %v1061, 0.0
  %1064 = vadd.xlane.f32.xlu0 %v1063
  %v1065 = vpop.xlane.xlu0 %1064
  %v1066 = vsel %vm58, %v1062, 0.0
  %1067 = vadd.xlane.f32.xlu0 %v1066
  %v1068 = vpop.xlane.xlu0 %1067
  %v1069 = vmul.f32 %v1065, %v65
  %v1070 = vmul.f32 %v1068, %v65
  %v1071 = vadd.f32 %v1069, 1e-12
  %v1072 = vadd.f32 %v1070, 1e-12
  %v1073 = vrsqrt.pop %v1071
  %v1074 = vrsqrt.pop %v1072
  %v1075 = vmul.f32 %v1059, %v1073
  %v1076 = vmul.f32 %v1060, %v1074
  %v1077 = vlaneseq
  %v1078 = vshrl.u32 %v1077, 7
  %v1079 = vsub.s32 1, %v1078
  %v1080 = vrot.slane %v104, %v1079
  %v1081 = vmul.f32 %v1075, %v1080
  %v1082 = vmul.f32 %v1076, %v1080
  %v1083 = vlaneseq
  %v1084 = vshrl.u32 %v1083, 7
  %v1085 = vsub.s32 2, %v1084
  %v1086 = vrot.slane %v104, %v1085
  %v1087 = vadd.f32 %v1081, %v1086
  %v1088 = vadd.f32 %v1082, %v1086
  %v1089 = vld [vmem:[%s6] sm:$0xff]
  %v1090 = vld [vmem:[%s6 + $0x8] sm:$0xff]
  %v1091 = vld [vmem:[%s6 + $0x10] sm:$0xff]
  %v1092 = vld [vmem:[%s6 + $0x18] sm:$0xff]
  %v1093 = vld [vmem:[%s7] sm:$0x1]
  %v1095 = vlaneseq
  %v1096 = vshrl.u32 %v1095, 7
  %v1097 = vsub.s32 0, %v1096
  %v1098 = vrot.slane %v1093, %v1097
  %v1101 = vsel %vm58, %v1087, 0
  %v1104 = vsel %vm58, %v1088, 0
  %1106 = vmatprep.subr.mxu0 0.0
  %1107 = vmatpush1.msra.mxu0 %v1089
  %1108 = vmatprep.subr.mxu0 0.0
  %1109 = vmatpush1.msra.mxu0 %v1090
  %1110 = vmatprep.subr.mxu0 0.0
  %1111 = vmatpush1.msra.mxu0 %v1091
  %1112 = vmatprep.subr.mxu0 0.0
  %1113 = vmatpush1.msra.mxu0 %v1092
  %1114 = vmatprep.subr.mxu0 0.0
  %1115 = vmatpush1.msra.mxu0 0.0
  %1116 = vmatprep.subr.mxu0 0.0
  %1117 = vmatpush1.msra.mxu0 0.0
  %1118 = vmatprep.subr.mxu0 0.0
  %1119 = vmatpush1.msra.mxu0 0.0
  %1120 = vmatprep.subr.mxu0 0.0
  %1121 = vmatpush1.msra.mxu0 0.0
  %1122 = vmatprep.subr.mxu0 0.0
  %1123 = vmatpush1.msra.mxu0 0.0
  %1124 = vmatprep.subr.mxu0 0.0
  %1125 = vmatpush1.msra.mxu0 0.0
  %1126 = vmatprep.subr.mxu0 0.0
  %1127 = vmatpush1.msra.mxu0 0.0
  %1128 = vmatprep.subr.mxu0 0.0
  %1129 = vmatpush1.msra.mxu0 0.0
  %1130 = vmatprep.subr.mxu0 0.0
  %1131 = vmatpush1.msra.mxu0 0.0
  %1132 = vmatprep.subr.mxu0 0.0
  %1133 = vmatpush1.msra.mxu0 0.0
  %1134 = vmatprep.subr.mxu0 0.0
  %1135 = vmatpush1.msra.mxu0 0.0
  %1136 = vmatprep.subr.mxu0 0.0
  %1137 = vmatpush1.msra.mxu0 0.0
  %1138 = vmatprep.subr.mxu0 0.0
  %1139 = vmatpush1.msra.mxu0 0.0
  %1140 = vmatprep.subr.mxu0 0.0
  %1141 = vmatpush1.msra.mxu0 0.0
  %1142 = vmatprep.subr.mxu0 0.0
  %1143 = vmatpush1.msra.mxu0 0.0
  %1144 = vmatprep.subr.mxu0 0.0
  %1145 = vmatpush1.msra.mxu0 0.0
  %1146 = vmatprep.subr.mxu0 0.0
  %1147 = vmatpush1.msra.mxu0 0.0
  %1148 = vmatprep.subr.mxu0 0.0
  %1149 = vmatpush1.msra.mxu0 0.0
  %1150 = vmatprep.subr.mxu0 0.0
  %1151 = vmatpush1.msra.mxu0 0.0
  %1152 = vmatprep.subr.mxu0 0.0
  %1153 = vmatpush1.msra.mxu0 0.0
  %1154 = vmatprep.subr.mxu0 0.0
  %1155 = vmatpush1.msra.mxu0 0.0
  %1156 = vmatprep.subr.mxu0 0.0
  %1157 = vmatpush1.msra.mxu0 0.0
  %1158 = vmatprep.subr.mxu0 0.0
  %1159 = vmatpush1.msra.mxu0 0.0
  %1160 = vmatprep.subr.mxu0 0.0
  %1161 = vmatpush1.msra.mxu0 0.0
  %1162 = vmatprep.subr.mxu0 0.0
  %1163 = vmatpush1.msra.mxu0 0.0
  %1164 = vmatprep.subr.mxu0 0.0
  %1165 = vmatpush1.msra.mxu0 0.0
  %1166 = vmatprep.subr.mxu0 0.0
  %1167 = vmatpush1.msra.mxu0 0.0
  %1168 = vmatprep.subr.mxu0 0.0
  %1169 = vmatpush1.msra.mxu0 0.0
  %1170 = vmatprep.mubr.f32.mxu0 0.0
  %1171 = vmatmul.mubr.f32.gmra.mrb[0].mxu0 %v1101
  %v1172 = vpop.f32.mrb[0].mxu0
  %v1173 = vadd.f32 %v1098, %v1172
  %v1174 = vpop.f32.mrb[0].mxu0
  %1175 = vmatprep.mubr.f32.mxu0 0.0
  %1176 = vmatmul.mubr.f32.gmra.mrb[0].mxu0 %v1104
  %v1177 = vpop.f32.mrb[0].mxu0
  %v1178 = vadd.f32 %v1098, %v1177
  %v1179 = vpop.f32.mrb[0].mxu0
  %1180 = vdwg.mxu0
  %v1181 = vmul.f32 %v1173, 0.5
  %v1182 = vmul.f32 %v1178, 0.5
  %v1183 = vmul.f32 %v1173, 0.70710677
  %v1184 = vmul.f32 %v1178, 0.70710677
  %v1185 = verf.f32.pop %v1183
  %v1186 = verf.f32.pop %v1184
  %v1187 = vadd.f32 %v1185, 1.0
  %v1188 = vadd.f32 %v1186, 1.0
  %v1189 = vmul.f32 %v1181, %v1187
  %v1190 = vmul.f32 %v1182, %v1188
  %v1191 = vld [vmem:[%s8] sm:$0xff]
  %v1192 = vld [vmem:[%s8 + $0x8] sm:$0xff]
  %v1193 = vld [vmem:[%s8 + $0x10] sm:$0xff]
  %v1194 = vld [vmem:[%s8 + $0x18] sm:$0xff]
  %v1195 = vld [vmem:[%s8 + $0x20] sm:$0xff]
  %v1196 = vld [vmem:[%s8 + $0x28] sm:$0xff]
  %v1197 = vld [vmem:[%s8 + $0x30] sm:$0xff]
  %v1198 = vld [vmem:[%s8 + $0x38] sm:$0xff]
  %v1199 = vlaneseq
  %v1200 = vshrl.u32 %v1199, 7
  %v1201 = vsub.s32 3, %v1200
  %v1202 = vrot.slane %v104, %v1201
  %vm1203 = vcmask 523264
  %v1205 = vsel %vm1203, %v1189, 0
  %v1208 = vsel %vm1203, %v1190, 0
  %1210 = vmatprep.subr.mxu0 0.0
  %1211 = vmatpush1.msra.mxu0 %v1191
  %1212 = vmatprep.subr.mxu0 0.0
  %1213 = vmatpush1.msra.mxu0 %v1192
  %1214 = vmatprep.subr.mxu0 0.0
  %1215 = vmatpush1.msra.mxu0 %v1193
  %1216 = vmatprep.subr.mxu0 0.0
  %1217 = vmatpush1.msra.mxu0 %v1194
  %1218 = vmatprep.subr.mxu0 0.0
  %1219 = vmatpush1.msra.mxu0 %v1195
  %1220 = vmatprep.subr.mxu0 0.0
  %1221 = vmatpush1.msra.mxu0 %v1196
  %1222 = vmatprep.subr.mxu0 0.0
  %1223 = vmatpush1.msra.mxu0 %v1197
  %1224 = vmatprep.subr.mxu0 0.0
  %1225 = vmatpush1.msra.mxu0 %v1198
  %1226 = vmatprep.subr.mxu0 0.0
  %1227 = vmatpush1.msra.mxu0 0.0
  %1228 = vmatprep.subr.mxu0 0.0
  %1229 = vmatpush1.msra.mxu0 0.0
  %1230 = vmatprep.subr.mxu0 0.0
  %1231 = vmatpush1.msra.mxu0 0.0
  %1232 = vmatprep.subr.mxu0 0.0
  %1233 = vmatpush1.msra.mxu0 0.0
  %1234 = vmatprep.subr.mxu0 0.0
  %1235 = vmatpush1.msra.mxu0 0.0
  %1236 = vmatprep.subr.mxu0 0.0
  %1237 = vmatpush1.msra.mxu0 0.0
  %1238 = vmatprep.subr.mxu0 0.0
  %1239 = vmatpush1.msra.mxu0 0.0
  %1240 = vmatprep.subr.mxu0 0.0
  %1241 = vmatpush1.msra.mxu0 0.0
  %1242 = vmatprep.subr.mxu0 0.0
  %1243 = vmatpush1.msra.mxu0 0.0
  %1244 = vmatprep.subr.mxu0 0.0
  %1245 = vmatpush1.msra.mxu0 0.0
  %1246 = vmatprep.subr.mxu0 0.0
  %1247 = vmatpush1.msra.mxu0 0.0
  %1248 = vmatprep.subr.mxu0 0.0
  %1249 = vmatpush1.msra.mxu0 0.0
  %1250 = vmatprep.subr.mxu0 0.0
  %1251 = vmatpush1.msra.mxu0 0.0
  %1252 = vmatprep.subr.mxu0 0.0
  %1253 = vmatpush1.msra.mxu0 0.0
  %1254 = vmatprep.subr.mxu0 0.0
  %1255 = vmatpush1.msra.mxu0 0.0
  %1256 = vmatprep.subr.mxu0 0.0
  %1257 = vmatpush1.msra.mxu0 0.0
  %1258 = vmatprep.subr.mxu0 0.0
  %1259 = vmatpush1.msra.mxu0 0.0
  %1260 = vmatprep.subr.mxu0 0.0
  %1261 = vmatpush1.msra.mxu0 0.0
  %1262 = vmatprep.subr.mxu0 0.0
  %1263 = vmatpush1.msra.mxu0 0.0
  %1264 = vmatprep.subr.mxu0 0.0
  %1265 = vmatpush1.msra.mxu0 0.0
  %1266 = vmatprep.subr.mxu0 0.0
  %1267 = vmatpush1.msra.mxu0 0.0
  %1268 = vmatprep.subr.mxu0 0.0
  %1269 = vmatpush1.msra.mxu0 0.0
  %1270 = vmatprep.subr.mxu0 0.0
  %1271 = vmatpush1.msra.mxu0 0.0
  %1272 = vmatprep.subr.mxu0 0.0
  %1273 = vmatpush1.msra.mxu0 0.0
  %1274 = vmatprep.mubr.f32.mxu0 0.0
  %1275 = vmatmul.mubr.f32.gmra.mrb[0].mxu0 %v1205
  %v1276 = vpop.f32.mrb[0].mxu0
  %v1277 = vadd.f32 %v1202, %v1276
  %v1278 = vpop.f32.mrb[0].mxu0
  %1279 = vmatprep.mubr.f32.mxu0 0.0
  %1280 = vmatmul.mubr.f32.gmra.mrb[0].mxu0 %v1208
  %v1281 = vpop.f32.mrb[0].mxu0
  %v1282 = vadd.f32 %v1202, %v1281
  %v1283 = vpop.f32.mrb[0].mxu0
  %1284 = vdwg.mxu0
  %v1285 = vadd.f32 %v1087, %v1277
  %v1286 = vadd.f32 %v1088, %v1282
  %v1287 = vsel %vm58, %v1285, 0.0
  %1288 = vadd.xlane.f32.xlu0 %v1287
  %v1289 = vpop.xlane.xlu0 %1288
  %v1290 = vsel %vm58, %v1286, 0.0
  %1291 = vadd.xlane.f32.xlu0 %v1290
  %v1292 = vpop.xlane.xlu0 %1291
  %v1293 = vmul.f32 %v1289, %v65
  %v1294 = vmul.f32 %v1292, %v65
  %v1295 = vsub.f32 %v1285, %v1293
  %v1296 = vsub.f32 %v1286, %v1294
  %v1297 = vmul.f32 %v1295, %v1295
  %v1298 = vmul.f32 %v1296, %v1296
  %v1299 = vsel %vm58, %v1297, 0.0
  %1300 = vadd.xlane.f32.xlu0 %v1299
  %v1301 = vpop.xlane.xlu0 %1300
  %v1302 = vsel %vm58, %v1298, 0.0
  %1303 = vadd.xlane.f32.xlu0 %v1302
  %v1304 = vpop.xlane.xlu0 %1303
  %v1305 = vmul.f32 %v1301, %v65
  %v1306 = vmul.f32 %v1304, %v65
  %v1307 = vadd.f32 %v1305, 1e-12
  %v1308 = vadd.f32 %v1306, 1e-12
  %v1309 = vrsqrt.pop %v1307
  %v1310 = vrsqrt.pop %v1308
  %v1311 = vmul.f32 %v1295, %v1309
  %v1312 = vmul.f32 %v1296, %v1310
  %v1313 = vlaneseq
  %v1314 = vshrl.u32 %v1313, 7
  %v1315 = vsub.s32 4, %v1314
  %v1316 = vrot.slane %v104, %v1315
  %v1317 = vmul.f32 %v1311, %v1316
  %v1318 = vmul.f32 %v1312, %v1316
  %v1319 = vlaneseq
  %v1320 = vshrl.u32 %v1319, 7
  %v1321 = vsub.s32 5, %v1320
  %v1322 = vrot.slane %v104, %v1321
  %v1323 = vadd.f32 %v1317, %v1322
  %v1324 = vadd.f32 %v1318, %v1322
  %s1325 = scalar_lea.vmem %s9, 8
  %v1326 = vld [vmem:[%s1325] sm:$0x3f]
  %s1327 = scalar_lea.vmem %s5, 32
  %v1328 = vld [vmem:[%s1327] sm:$0xff]
  %v1329 = vld [vmem:[%s1327 + $0x8] sm:$0xff]
  %v1330 = vld [vmem:[%s1327 + $0x10] sm:$0xff]
  %v1331 = vld [vmem:[%s1327 + $0x18] sm:$0xff]
  %s1332 = scalar_lea.vmem %s3, 32
  %v1333 = vld [vmem:[%s1332] sm:$0xff]
  %v1334 = vld [vmem:[%s1332 + $0x8] sm:$0xff]
  %v1335 = vld [vmem:[%s1332 + $0x10] sm:$0xff]
  %v1336 = vld [vmem:[%s1332 + $0x18] sm:$0xff]
  %s1337 = scalar_lea.vmem %s4, 1
  %v1338 = vld [vmem:[%s1337] sm:$0x1]
  %v1340 = vlaneseq
  %v1341 = vshrl.u32 %v1340, 7
  %v1342 = vsub.s32 0, %v1341
  %v1343 = vrot.slane %v1338, %v1342
  %v1346 = vsel %vm58, %v1323, 0
  %v1349 = vsel %vm58, %v1324, 0
  %1351 = vmatprep.subr.mxu0 0.0
  %1352 = vmatpush1.msra.mxu0 %v1333
  %1353 = vmatprep.subr.mxu0 0.0
  %1354 = vmatpush1.msra.mxu0 %v1334
  %1355 = vmatprep.subr.mxu0 0.0
  %1356 = vmatpush1.msra.mxu0 %v1335
  %1357 = vmatprep.subr.mxu0 0.0
  %1358 = vmatpush1.msra.mxu0 %v1336
  %1359 = vmatprep.subr.mxu0 0.0
  %1360 = vmatpush1.msra.mxu0 0.0
  %1361 = vmatprep.subr.mxu0 0.0
  %1362 = vmatpush1.msra.mxu0 0.0
  %1363 = vmatprep.subr.mxu0 0.0
  %1364 = vmatpush1.msra.mxu0 0.0
  %1365 = vmatprep.subr.mxu0 0.0
  %1366 = vmatpush1.msra.mxu0 0.0
  %1367 = vmatprep.subr.mxu0 0.0
  %1368 = vmatpush1.msra.mxu0 0.0
  %1369 = vmatprep.subr.mxu0 0.0
  %1370 = vmatpush1.msra.mxu0 0.0
  %1371 = vmatprep.subr.mxu0 0.0
  %1372 = vmatpush1.msra.mxu0 0.0
  %1373 = vmatprep.subr.mxu0 0.0
  %1374 = vmatpush1.msra.mxu0 0.0
  %1375 = vmatprep.subr.mxu0 0.0
  %1376 = vmatpush1.msra.mxu0 0.0
  %1377 = vmatprep.subr.mxu0 0.0
  %1378 = vmatpush1.msra.mxu0 0.0
  %1379 = vmatprep.subr.mxu0 0.0
  %1380 = vmatpush1.msra.mxu0 0.0
  %1381 = vmatprep.subr.mxu0 0.0
  %1382 = vmatpush1.msra.mxu0 0.0
  %1383 = vmatprep.subr.mxu0 0.0
  %1384 = vmatpush1.msra.mxu0 0.0
  %1385 = vmatprep.subr.mxu0 0.0
  %1386 = vmatpush1.msra.mxu0 0.0
  %1387 = vmatprep.subr.mxu0 0.0
  %1388 = vmatpush1.msra.mxu0 0.0
  %1389 = vmatprep.subr.mxu0 0.0
  %1390 = vmatpush1.msra.mxu0 0.0
  %1391 = vmatprep.subr.mxu0 0.0
  %1392 = vmatpush1.msra.mxu0 0.0
  %1393 = vmatprep.subr.mxu0 0.0
  %1394 = vmatpush1.msra.mxu0 0.0
  %1395 = vmatprep.subr.mxu0 0.0
  %1396 = vmatpush1.msra.mxu0 0.0
  %1397 = vmatprep.subr.mxu0 0.0
  %1398 = vmatpush1.msra.mxu0 0.0
  %1399 = vmatprep.subr.mxu0 0.0
  %1400 = vmatpush1.msra.mxu0 0.0
  %1401 = vmatprep.subr.mxu0 0.0
  %1402 = vmatpush1.msra.mxu0 0.0
  %1403 = vmatprep.subr.mxu0 0.0
  %1404 = vmatpush1.msra.mxu0 0.0
  %1405 = vmatprep.subr.mxu0 0.0
  %1406 = vmatpush1.msra.mxu0 0.0
  %1407 = vmatprep.subr.mxu0 0.0
  %1408 = vmatpush1.msra.mxu0 0.0
  %1409 = vmatprep.subr.mxu0 0.0
  %1410 = vmatpush1.msra.mxu0 0.0
  %1411 = vmatprep.subr.mxu0 0.0
  %1412 = vmatpush1.msra.mxu0 0.0
  %1413 = vmatprep.subr.mxu0 0.0
  %1414 = vmatpush1.msra.mxu0 0.0
  %1415 = vmatprep.mubr.f32.mxu0 0.0
  %1416 = vmatmul.mubr.f32.gmra.mrb[0].mxu0 %v1346
  %v1417 = vpop.f32.mrb[0].mxu0
  %v1418 = vadd.f32 %v1343, %v1417
  %v1419 = vpop.f32.mrb[0].mxu0
  %1420 = vmatprep.mubr.f32.mxu0 0.0
  %1421 = vmatmul.mubr.f32.gmra.mrb[0].mxu0 %v1349
  %v1422 = vpop.f32.mrb[0].mxu0
  %v1423 = vadd.f32 %v1343, %v1422
  %v1424 = vpop.f32.mrb[0].mxu0
  %1425 = vdwg.mxu0
  %1427 = vrot.lane.b32.xlu0 %v1418, 96
  %v1428 = vpop.permute.xlu0 %1427
  %v1429 = vsel %vm204, %v1418, 0
  %v1431 = vsel %vm204, %v1428, 0
  %1433 = vmatprep.subr.mxu0 0.0
  %1434 = vmatpush1.xpose.msra.mxu0 %v1431
  %1435 = vmatprep.subr.mxu0 0.0
  %1436 = vmatpush1.xpose.msra.mxu0 0.0
  %1437 = vmatprep.subr.mxu0 0.0
  %1438 = vmatpush1.xpose.msra.mxu0 0.0
  %1439 = vmatprep.subr.mxu0 0.0
  %1440 = vmatpush1.xpose.msra.mxu0 0.0
  %1441 = vmatprep.subr.mxu0 0.0
  %1442 = vmatpush1.xpose.msra.mxu0 0.0
  %1443 = vmatprep.subr.mxu0 0.0
  %1444 = vmatpush1.xpose.msra.mxu0 0.0
  %1445 = vmatprep.subr.mxu0 0.0
  %1446 = vmatpush1.xpose.msra.mxu0 0.0
  %1447 = vmatprep.subr.mxu0 0.0
  %1448 = vmatpush1.xpose.msra.mxu0 0.0
  %1449 = vmatprep.subr.mxu0 0.0
  %1450 = vmatpush1.xpose.msra.mxu0 0.0
  %1451 = vmatprep.subr.mxu0 0.0
  %1452 = vmatpush1.xpose.msra.mxu0 0.0
  %1453 = vmatprep.subr.mxu0 0.0
  %1454 = vmatpush1.xpose.msra.mxu0 0.0
  %1455 = vmatprep.subr.mxu0 0.0
  %1456 = vmatpush1.xpose.msra.mxu0 0.0
  %1457 = vmatprep.subr.mxu0 0.0
  %1458 = vmatpush1.xpose.msra.mxu0 0.0
  %1459 = vmatprep.subr.mxu0 0.0
  %1460 = vmatpush1.xpose.msra.mxu0 0.0
  %1461 = vmatprep.subr.mxu0 0.0
  %1462 = vmatpush1.xpose.msra.mxu0 0.0
  %1463 = vmatprep.subr.mxu0 0.0
  %1464 = vmatpush1.xpose.msra.mxu0 0.0
  %1465 = vmatprep.subr.mxu0 0.0
  %1466 = vmatpush1.xpose.msra.mxu0 0.0
  %1467 = vmatprep.subr.mxu0 0.0
  %1468 = vmatpush1.xpose.msra.mxu0 0.0
  %1469 = vmatprep.subr.mxu0 0.0
  %1470 = vmatpush1.xpose.msra.mxu0 0.0
  %1471 = vmatprep.subr.mxu0 0.0
  %1472 = vmatpush1.xpose.msra.mxu0 0.0
  %1473 = vmatprep.subr.mxu0 0.0
  %1474 = vmatpush1.xpose.msra.mxu0 0.0
  %1475 = vmatprep.subr.mxu0 0.0
  %1476 = vmatpush1.xpose.msra.mxu0 0.0
  %1477 = vmatprep.subr.mxu0 0.0
  %1478 = vmatpush1.xpose.msra.mxu0 0.0
  %1479 = vmatprep.subr.mxu0 0.0
  %1480 = vmatpush1.xpose.msra.mxu0 0.0
  %1481 = vmatprep.subr.mxu0 0.0
  %1482 = vmatpush1.xpose.msra.mxu0 0.0
  %1483 = vmatprep.subr.mxu0 0.0
  %1484 = vmatpush1.xpose.msra.mxu0 0.0
  %1485 = vmatprep.subr.mxu0 0.0
  %1486 = vmatpush1.xpose.msra.mxu0 0.0
  %1487 = vmatprep.subr.mxu0 0.0
  %1488 = vmatpush1.xpose.msra.mxu0 0.0
  %1489 = vmatprep.subr.mxu0 0.0
  %1490 = vmatpush1.xpose.msra.mxu0 0.0
  %1491 = vmatprep.subr.mxu0 0.0
  %1492 = vmatpush1.xpose.msra.mxu0 0.0
  %1493 = vmatprep.subr.mxu0 0.0
  %1494 = vmatpush1.xpose.msra.mxu0 0.0
  %1495 = vmatprep.subr.mxu0 0.0
  %1496 = vmatpush1.xpose.msra.mxu0 0.0
  %1497 = vmatprep.mubr.f32.mxu0 0.0
  %1498 = vmatmul.mubr.f32.gmra.mrb[0].mxu0 %v1429
  %v1499 = vpop.f32.mrb[0].mxu0
  %v1500 = vadd.f32 0.0, %v1499
  %v1501 = vpop.f32.mrb[0].mxu0
  %1502 = vdwg.mxu0
  %1504 = vrot.lane.b32.xlu0 %v1423, 96
  %v1505 = vpop.permute.xlu0 %1504
  %v1506 = vsel %vm204, %v1423, 0
  %v1508 = vsel %vm204, %v1505, 0
  %1510 = vmatprep.subr.mxu0 0.0
  %1511 = vmatpush1.xpose.msra.mxu0 %v1508
  %1512 = vmatprep.subr.mxu0 0.0
  %1513 = vmatpush1.xpose.msra.mxu0 0.0
  %1514 = vmatprep.subr.mxu0 0.0
  %1515 = vmatpush1.xpose.msra.mxu0 0.0
  %1516 = vmatprep.subr.mxu0 0.0
  %1517 = vmatpush1.xpose.msra.mxu0 0.0
  %1518 = vmatprep.subr.mxu0 0.0
  %1519 = vmatpush1.xpose.msra.mxu0 0.0
  %1520 = vmatprep.subr.mxu0 0.0
  %1521 = vmatpush1.xpose.msra.mxu0 0.0
  %1522 = vmatprep.subr.mxu0 0.0
  %1523 = vmatpush1.xpose.msra.mxu0 0.0
  %1524 = vmatprep.subr.mxu0 0.0
  %1525 = vmatpush1.xpose.msra.mxu0 0.0
  %1526 = vmatprep.subr.mxu0 0.0
  %1527 = vmatpush1.xpose.msra.mxu0 0.0
  %1528 = vmatprep.subr.mxu0 0.0
  %1529 = vmatpush1.xpose.msra.mxu0 0.0
  %1530 = vmatprep.subr.mxu0 0.0
  %1531 = vmatpush1.xpose.msra.mxu0 0.0
  %1532 = vmatprep.subr.mxu0 0.0
  %1533 = vmatpush1.xpose.msra.mxu0 0.0
  %1534 = vmatprep.subr.mxu0 0.0
  %1535 = vmatpush1.xpose.msra.mxu0 0.0
  %1536 = vmatprep.subr.mxu0 0.0
  %1537 = vmatpush1.xpose.msra.mxu0 0.0
  %1538 = vmatprep.subr.mxu0 0.0
  %1539 = vmatpush1.xpose.msra.mxu0 0.0
  %1540 = vmatprep.subr.mxu0 0.0
  %1541 = vmatpush1.xpose.msra.mxu0 0.0
  %1542 = vmatprep.subr.mxu0 0.0
  %1543 = vmatpush1.xpose.msra.mxu0 0.0
  %1544 = vmatprep.subr.mxu0 0.0
  %1545 = vmatpush1.xpose.msra.mxu0 0.0
  %1546 = vmatprep.subr.mxu0 0.0
  %1547 = vmatpush1.xpose.msra.mxu0 0.0
  %1548 = vmatprep.subr.mxu0 0.0
  %1549 = vmatpush1.xpose.msra.mxu0 0.0
  %1550 = vmatprep.subr.mxu0 0.0
  %1551 = vmatpush1.xpose.msra.mxu0 0.0
  %1552 = vmatprep.subr.mxu0 0.0
  %1553 = vmatpush1.xpose.msra.mxu0 0.0
  %1554 = vmatprep.subr.mxu0 0.0
  %1555 = vmatpush1.xpose.msra.mxu0 0.0
  %1556 = vmatprep.subr.mxu0 0.0
  %1557 = vmatpush1.xpose.msra.mxu0 0.0
  %1558 = vmatprep.subr.mxu0 0.0
  %1559 = vmatpush1.xpose.msra.mxu0 0.0
  %1560 = vmatprep.subr.mxu0 0.0
  %1561 = vmatpush1.xpose.msra.mxu0 0.0
  %1562 = vmatprep.subr.mxu0 0.0
  %1563 = vmatpush1.xpose.msra.mxu0 0.0
  %1564 = vmatprep.subr.mxu0 0.0
  %1565 = vmatpush1.xpose.msra.mxu0 0.0
  %1566 = vmatprep.subr.mxu0 0.0
  %1567 = vmatpush1.xpose.msra.mxu0 0.0
  %1568 = vmatprep.subr.mxu0 0.0
  %1569 = vmatpush1.xpose.msra.mxu0 0.0
  %1570 = vmatprep.subr.mxu0 0.0
  %1571 = vmatpush1.xpose.msra.mxu0 0.0
  %1572 = vmatprep.subr.mxu0 0.0
  %1573 = vmatpush1.xpose.msra.mxu0 0.0
  %1574 = vmatprep.mubr.f32.mxu0 0.0
  %1575 = vmatmul.mubr.f32.gmra.mrb[0].mxu0 %v1506
  %v1576 = vpop.f32.mrb[0].mxu0
  %v1577 = vadd.f32 0.0, %v1576
  %v1578 = vpop.f32.mrb[0].mxu0
  %1579 = vdwg.mxu0
  %v1580 = vmul.f32 %v1500, 0.25
  %v1581 = vmul.f32 %v1577, 0.25
  %v1582 = vadd.f32 %v1580, %v363
  %v1583 = vadd.f32 %v1581, %v367
  %v1584 = vsel %vm372, %v1582, -inf
  %1585 = vmax.xlane.f32.xlu0 %v1584
  %v1586 = vpop.xlane.xlu0 %1585
  %v1587 = vsel %vm372, %v1583, -inf
  %1588 = vmax.xlane.f32.xlu0 %v1587
  %v1589 = vpop.xlane.xlu0 %1588
  %v1590 = vsub.f32 %v1582, %v1586
  %v1591 = vsub.f32 %v1583, %v1589
  %v1592 = vmul.f32 %v1590, 1.442695
  %v1593 = vpow.pop %v1592
  %v1594 = vmul.f32 %v1591, 1.442695
  %v1595 = vpow.pop %v1594
  %v1596 = vsel %vm372, %v1593, 0.0
  %1597 = vadd.xlane.f32.xlu0 %v1596
  %v1598 = vpop.xlane.xlu0 %1597
  %v1599 = vsel %vm372, %v1595, 0.0
  %1600 = vadd.xlane.f32.xlu0 %v1599
  %v1601 = vpop.xlane.xlu0 %1600
  %v1602 = vrcp.pop %v1598
  %v1603 = vrcp.pop %v1601
  %v1604 = vmul.f32 %v1593, %v1602
  %v1605 = vmul.f32 %v1595, %v1603
  %1606 = vrot.lane.b32.xlu0 %v1418, 64
  %v1607 = vpop.permute.xlu0 %1606
  %v1610 = vsel %vm372, %v1604, 0
  %1612 = vmatprep.subr.mxu0 0.0
  %1613 = vmatpush1.msra.mxu0 %v1607
  %1614 = vmatprep.subr.mxu0 0.0
  %1615 = vmatpush1.msra.mxu0 0.0
  %1616 = vmatprep.subr.mxu0 0.0
  %1617 = vmatpush1.msra.mxu0 0.0
  %1618 = vmatprep.subr.mxu0 0.0
  %1619 = vmatpush1.msra.mxu0 0.0
  %1620 = vmatprep.subr.mxu0 0.0
  %1621 = vmatpush1.msra.mxu0 0.0
  %1622 = vmatprep.subr.mxu0 0.0
  %1623 = vmatpush1.msra.mxu0 0.0
  %1624 = vmatprep.subr.mxu0 0.0
  %1625 = vmatpush1.msra.mxu0 0.0
  %1626 = vmatprep.subr.mxu0 0.0
  %1627 = vmatpush1.msra.mxu0 0.0
  %1628 = vmatprep.subr.mxu0 0.0
  %1629 = vmatpush1.msra.mxu0 0.0
  %1630 = vmatprep.subr.mxu0 0.0
  %1631 = vmatpush1.msra.mxu0 0.0
  %1632 = vmatprep.subr.mxu0 0.0
  %1633 = vmatpush1.msra.mxu0 0.0
  %1634 = vmatprep.subr.mxu0 0.0
  %1635 = vmatpush1.msra.mxu0 0.0
  %1636 = vmatprep.subr.mxu0 0.0
  %1637 = vmatpush1.msra.mxu0 0.0
  %1638 = vmatprep.subr.mxu0 0.0
  %1639 = vmatpush1.msra.mxu0 0.0
  %1640 = vmatprep.subr.mxu0 0.0
  %1641 = vmatpush1.msra.mxu0 0.0
  %1642 = vmatprep.subr.mxu0 0.0
  %1643 = vmatpush1.msra.mxu0 0.0
  %1644 = vmatprep.subr.mxu0 0.0
  %1645 = vmatpush1.msra.mxu0 0.0
  %1646 = vmatprep.subr.mxu0 0.0
  %1647 = vmatpush1.msra.mxu0 0.0
  %1648 = vmatprep.subr.mxu0 0.0
  %1649 = vmatpush1.msra.mxu0 0.0
  %1650 = vmatprep.subr.mxu0 0.0
  %1651 = vmatpush1.msra.mxu0 0.0
  %1652 = vmatprep.subr.mxu0 0.0
  %1653 = vmatpush1.msra.mxu0 0.0
  %1654 = vmatprep.subr.mxu0 0.0
  %1655 = vmatpush1.msra.mxu0 0.0
  %1656 = vmatprep.subr.mxu0 0.0
  %1657 = vmatpush1.msra.mxu0 0.0
  %1658 = vmatprep.subr.mxu0 0.0
  %1659 = vmatpush1.msra.mxu0 0.0
  %1660 = vmatprep.subr.mxu0 0.0
  %1661 = vmatpush1.msra.mxu0 0.0
  %1662 = vmatprep.subr.mxu0 0.0
  %1663 = vmatpush1.msra.mxu0 0.0
  %1664 = vmatprep.subr.mxu0 0.0
  %1665 = vmatpush1.msra.mxu0 0.0
  %1666 = vmatprep.subr.mxu0 0.0
  %1667 = vmatpush1.msra.mxu0 0.0
  %1668 = vmatprep.subr.mxu0 0.0
  %1669 = vmatpush1.msra.mxu0 0.0
  %1670 = vmatprep.subr.mxu0 0.0
  %1671 = vmatpush1.msra.mxu0 0.0
  %1672 = vmatprep.subr.mxu0 0.0
  %1673 = vmatpush1.msra.mxu0 0.0
  %1674 = vmatprep.subr.mxu0 0.0
  %1675 = vmatpush1.msra.mxu0 0.0
  %1676 = vmatprep.mubr.f32.mxu0 0.0
  %1677 = vmatmul.mubr.f32.gmra.mrb[0].mxu0 %v1610
  %v1678 = vpop.f32.mrb[0].mxu0
  %v1679 = vadd.f32 0.0, %v1678
  %v1680 = vpop.f32.mrb[0].mxu0
  %1681 = vdwg.mxu0
  %1682 = vrot.lane.b32.xlu0 %v1423, 64
  %v1683 = vpop.permute.xlu0 %1682
  %v1686 = vsel %vm372, %v1605, 0
  %1688 = vmatprep.subr.mxu0 0.0
  %1689 = vmatpush1.msra.mxu0 %v1683
  %1690 = vmatprep.subr.mxu0 0.0
  %1691 = vmatpush1.msra.mxu0 0.0
  %1692 = vmatprep.subr.mxu0 0.0
  %1693 = vmatpush1.msra.mxu0 0.0
  %1694 = vmatprep.subr.mxu0 0.0
  %1695 = vmatpush1.msra.mxu0 0.0
  %1696 = vmatprep.subr.mxu0 0.0
  %1697 = vmatpush1.msra.mxu0 0.0
  %1698 = vmatprep.subr.mxu0 0.0
  %1699 = vmatpush1.msra.mxu0 0.0
  %1700 = vmatprep.subr.mxu0 0.0
  %1701 = vmatpush1.msra.mxu0 0.0
  %1702 = vmatprep.subr.mxu0 0.0
  %1703 = vmatpush1.msra.mxu0 0.0
  %1704 = vmatprep.subr.mxu0 0.0
  %1705 = vmatpush1.msra.mxu0 0.0
  %1706 = vmatprep.subr.mxu0 0.0
  %1707 = vmatpush1.msra.mxu0 0.0
  %1708 = vmatprep.subr.mxu0 0.0
  %1709 = vmatpush1.msra.mxu0 0.0
  %1710 = vmatprep.subr.mxu0 0.0
  %1711 = vmatpush1.msra.mxu0 0.0
  %1712 = vmatprep.subr.mxu0 0.0
  %1713 = vmatpush1.msra.mxu0 0.0
  %1714 = vmatprep.subr.mxu0 0.0
  %1715 = vmatpush1.msra.mxu0 0.0
  %1716 = vmatprep.subr.mxu0 0.0
  %1717 = vmatpush1.msra.mxu0 0.0
  %1718 = vmatprep.subr.mxu0 0.0
  %1719 = vmatpush1.msra.mxu0 0.0
  %1720 = vmatprep.subr.mxu0 0.0
  %1721 = vmatpush1.msra.mxu0 0.0
  %1722 = vmatprep.subr.mxu0 0.0
  %1723 = vmatpush1.msra.mxu0 0.0
  %1724 = vmatprep.subr.mxu0 0.0
  %1725 = vmatpush1.msra.mxu0 0.0
  %1726 = vmatprep.subr.mxu0 0.0
  %1727 = vmatpush1.msra.mxu0 0.0
  %1728 = vmatprep.subr.mxu0 0.0
  %1729 = vmatpush1.msra.mxu0 0.0
  %1730 = vmatprep.subr.mxu0 0.0
  %1731 = vmatpush1.msra.mxu0 0.0
  %1732 = vmatprep.subr.mxu0 0.0
  %1733 = vmatpush1.msra.mxu0 0.0
  %1734 = vmatprep.subr.mxu0 0.0
  %1735 = vmatpush1.msra.mxu0 0.0
  %1736 = vmatprep.subr.mxu0 0.0
  %1737 = vmatpush1.msra.mxu0 0.0
  %1738 = vmatprep.subr.mxu0 0.0
  %1739 = vmatpush1.msra.mxu0 0.0
  %1740 = vmatprep.subr.mxu0 0.0
  %1741 = vmatpush1.msra.mxu0 0.0
  %1742 = vmatprep.subr.mxu0 0.0
  %1743 = vmatpush1.msra.mxu0 0.0
  %1744 = vmatprep.subr.mxu0 0.0
  %1745 = vmatpush1.msra.mxu0 0.0
  %1746 = vmatprep.subr.mxu0 0.0
  %1747 = vmatpush1.msra.mxu0 0.0
  %1748 = vmatprep.subr.mxu0 0.0
  %1749 = vmatpush1.msra.mxu0 0.0
  %1750 = vmatprep.subr.mxu0 0.0
  %1751 = vmatpush1.msra.mxu0 0.0
  %1752 = vmatprep.mubr.f32.mxu0 0.0
  %1753 = vmatmul.mubr.f32.gmra.mrb[0].mxu0 %v1686
  %v1754 = vpop.f32.mrb[0].mxu0
  %v1755 = vadd.f32 0.0, %v1754
  %v1756 = vpop.f32.mrb[0].mxu0
  %1757 = vdwg.mxu0
  %1758 = vrot.lane.b32.xlu0 %v1418, 112
  %v1759 = vpop.permute.xlu0 %1758
  %1760 = vrot.lane.b32.xlu0 %v1418, 80
  %v1761 = vpop.permute.xlu0 %1760
  %v1762 = vsel %vm204, %v1759, 0
  %v1764 = vsel %vm204, %v1761, 0
  %1766 = vmatprep.subr.mxu0 0.0
  %1767 = vmatpush1.xpose.msra.mxu0 %v1764
  %1768 = vmatprep.subr.mxu0 0.0
  %1769 = vmatpush1.xpose.msra.mxu0 0.0
  %1770 = vmatprep.subr.mxu0 0.0
  %1771 = vmatpush1.xpose.msra.mxu0 0.0
  %1772 = vmatprep.subr.mxu0 0.0
  %1773 = vmatpush1.xpose.msra.mxu0 0.0
  %1774 = vmatprep.subr.mxu0 0.0
  %1775 = vmatpush1.xpose.msra.mxu0 0.0
  %1776 = vmatprep.subr.mxu0 0.0
  %1777 = vmatpush1.xpose.msra.mxu0 0.0
  %1778 = vmatprep.subr.mxu0 0.0
  %1779 = vmatpush1.xpose.msra.mxu0 0.0
  %1780 = vmatprep.subr.mxu0 0.0
  %1781 = vmatpush1.xpose.msra.mxu0 0.0
  %1782 = vmatprep.subr.mxu0 0.0
  %1783 = vmatpush1.xpose.msra.mxu0 0.0
  %1784 = vmatprep.subr.mxu0 0.0
  %1785 = vmatpush1.xpose.msra.mxu0 0.0
  %1786 = vmatprep.subr.mxu0 0.0
  %1787 = vmatpush1.xpose.msra.mxu0 0.0
  %1788 = vmatprep.subr.mxu0 0.0
  %1789 = vmatpush1.xpose.msra.mxu0 0.0
  %1790 = vmatprep.subr.mxu0 0.0
  %1791 = vmatpush1.xpose.msra.mxu0 0.0
  %1792 = vmatprep.subr.mxu0 0.0
  %1793 = vmatpush1.xpose.msra.mxu0 0.0
  %1794 = vmatprep.subr.mxu0 0.0
  %1795 = vmatpush1.xpose.msra.mxu0 0.0
  %1796 = vmatprep.subr.mxu0 0.0
  %1797 = vmatpush1.xpose.msra.mxu0 0.0
  %1798 = vmatprep.subr.mxu0 0.0
  %1799 = vmatpush1.xpose.msra.mxu0 0.0
  %1800 = vmatprep.subr.mxu0 0.0
  %1801 = vmatpush1.xpose.msra.mxu0 0.0
  %1802 = vmatprep.subr.mxu0 0.0
  %1803 = vmatpush1.xpose.msra.mxu0 0.0
  %1804 = vmatprep.subr.mxu0 0.0
  %1805 = vmatpush1.xpose.msra.mxu0 0.0
  %1806 = vmatprep.subr.mxu0 0.0
  %1807 = vmatpush1.xpose.msra.mxu0 0.0
  %1808 = vmatprep.subr.mxu0 0.0
  %1809 = vmatpush1.xpose.msra.mxu0 0.0
  %1810 = vmatprep.subr.mxu0 0.0
  %1811 = vmatpush1.xpose.msra.mxu0 0.0
  %1812 = vmatprep.subr.mxu0 0.0
  %1813 = vmatpush1.xpose.msra.mxu0 0.0
  %1814 = vmatprep.subr.mxu0 0.0
  %1815 = vmatpush1.xpose.msra.mxu0 0.0
  %1816 = vmatprep.subr.mxu0 0.0
  %1817 = vmatpush1.xpose.msra.mxu0 0.0
  %1818 = vmatprep.subr.mxu0 0.0
  %1819 = vmatpush1.xpose.msra.mxu0 0.0
  %1820 = vmatprep.subr.mxu0 0.0
  %1821 = vmatpush1.xpose.msra.mxu0 0.0
  %1822 = vmatprep.subr.mxu0 0.0
  %1823 = vmatpush1.xpose.msra.mxu0 0.0
  %1824 = vmatprep.subr.mxu0 0.0
  %1825 = vmatpush1.xpose.msra.mxu0 0.0
  %1826 = vmatprep.subr.mxu0 0.0
  %1827 = vmatpush1.xpose.msra.mxu0 0.0
  %1828 = vmatprep.subr.mxu0 0.0
  %1829 = vmatpush1.xpose.msra.mxu0 0.0
  %1830 = vmatprep.mubr.f32.mxu0 0.0
  %1831 = vmatmul.mubr.f32.gmra.mrb[0].mxu0 %v1762
  %v1832 = vpop.f32.mrb[0].mxu0
  %v1833 = vadd.f32 0.0, %v1832
  %v1834 = vpop.f32.mrb[0].mxu0
  %1835 = vdwg.mxu0
  %1836 = vrot.lane.b32.xlu0 %v1423, 112
  %v1837 = vpop.permute.xlu0 %1836
  %1838 = vrot.lane.b32.xlu0 %v1423, 80
  %v1839 = vpop.permute.xlu0 %1838
  %v1840 = vsel %vm204, %v1837, 0
  %v1842 = vsel %vm204, %v1839, 0
  %1844 = vmatprep.subr.mxu0 0.0
  %1845 = vmatpush1.xpose.msra.mxu0 %v1842
  %1846 = vmatprep.subr.mxu0 0.0
  %1847 = vmatpush1.xpose.msra.mxu0 0.0
  %1848 = vmatprep.subr.mxu0 0.0
  %1849 = vmatpush1.xpose.msra.mxu0 0.0
  %1850 = vmatprep.subr.mxu0 0.0
  %1851 = vmatpush1.xpose.msra.mxu0 0.0
  %1852 = vmatprep.subr.mxu0 0.0
  %1853 = vmatpush1.xpose.msra.mxu0 0.0
  %1854 = vmatprep.subr.mxu0 0.0
  %1855 = vmatpush1.xpose.msra.mxu0 0.0
  %1856 = vmatprep.subr.mxu0 0.0
  %1857 = vmatpush1.xpose.msra.mxu0 0.0
  %1858 = vmatprep.subr.mxu0 0.0
  %1859 = vmatpush1.xpose.msra.mxu0 0.0
  %1860 = vmatprep.subr.mxu0 0.0
  %1861 = vmatpush1.xpose.msra.mxu0 0.0
  %1862 = vmatprep.subr.mxu0 0.0
  %1863 = vmatpush1.xpose.msra.mxu0 0.0
  %1864 = vmatprep.subr.mxu0 0.0
  %1865 = vmatpush1.xpose.msra.mxu0 0.0
  %1866 = vmatprep.subr.mxu0 0.0
  %1867 = vmatpush1.xpose.msra.mxu0 0.0
  %1868 = vmatprep.subr.mxu0 0.0
  %1869 = vmatpush1.xpose.msra.mxu0 0.0
  %1870 = vmatprep.subr.mxu0 0.0
  %1871 = vmatpush1.xpose.msra.mxu0 0.0
  %1872 = vmatprep.subr.mxu0 0.0
  %1873 = vmatpush1.xpose.msra.mxu0 0.0
  %1874 = vmatprep.subr.mxu0 0.0
  %1875 = vmatpush1.xpose.msra.mxu0 0.0
  %1876 = vmatprep.subr.mxu0 0.0
  %1877 = vmatpush1.xpose.msra.mxu0 0.0
  %1878 = vmatprep.subr.mxu0 0.0
  %1879 = vmatpush1.xpose.msra.mxu0 0.0
  %1880 = vmatprep.subr.mxu0 0.0
  %1881 = vmatpush1.xpose.msra.mxu0 0.0
  %1882 = vmatprep.subr.mxu0 0.0
  %1883 = vmatpush1.xpose.msra.mxu0 0.0
  %1884 = vmatprep.subr.mxu0 0.0
  %1885 = vmatpush1.xpose.msra.mxu0 0.0
  %1886 = vmatprep.subr.mxu0 0.0
  %1887 = vmatpush1.xpose.msra.mxu0 0.0
  %1888 = vmatprep.subr.mxu0 0.0
  %1889 = vmatpush1.xpose.msra.mxu0 0.0
  %1890 = vmatprep.subr.mxu0 0.0
  %1891 = vmatpush1.xpose.msra.mxu0 0.0
  %1892 = vmatprep.subr.mxu0 0.0
  %1893 = vmatpush1.xpose.msra.mxu0 0.0
  %1894 = vmatprep.subr.mxu0 0.0
  %1895 = vmatpush1.xpose.msra.mxu0 0.0
  %1896 = vmatprep.subr.mxu0 0.0
  %1897 = vmatpush1.xpose.msra.mxu0 0.0
  %1898 = vmatprep.subr.mxu0 0.0
  %1899 = vmatpush1.xpose.msra.mxu0 0.0
  %1900 = vmatprep.subr.mxu0 0.0
  %1901 = vmatpush1.xpose.msra.mxu0 0.0
  %1902 = vmatprep.subr.mxu0 0.0
  %1903 = vmatpush1.xpose.msra.mxu0 0.0
  %1904 = vmatprep.subr.mxu0 0.0
  %1905 = vmatpush1.xpose.msra.mxu0 0.0
  %1906 = vmatprep.subr.mxu0 0.0
  %1907 = vmatpush1.xpose.msra.mxu0 0.0
  %1908 = vmatprep.mubr.f32.mxu0 0.0
  %1909 = vmatmul.mubr.f32.gmra.mrb[0].mxu0 %v1840
  %v1910 = vpop.f32.mrb[0].mxu0
  %v1911 = vadd.f32 0.0, %v1910
  %v1912 = vpop.f32.mrb[0].mxu0
  %1913 = vdwg.mxu0
  %v1914 = vmul.f32 %v1833, 0.25
  %v1915 = vmul.f32 %v1911, 0.25
  %v1916 = vadd.f32 %v1914, %v363
  %v1917 = vadd.f32 %v1915, %v367
  %v1918 = vsel %vm372, %v1916, -inf
  %1919 = vmax.xlane.f32.xlu0 %v1918
  %v1920 = vpop.xlane.xlu0 %1919
  %v1921 = vsel %vm372, %v1917, -inf
  %1922 = vmax.xlane.f32.xlu0 %v1921
  %v1923 = vpop.xlane.xlu0 %1922
  %v1924 = vsub.f32 %v1916, %v1920
  %v1925 = vsub.f32 %v1917, %v1923
  %v1926 = vmul.f32 %v1924, 1.442695
  %v1927 = vpow.pop %v1926
  %v1928 = vmul.f32 %v1925, 1.442695
  %v1929 = vpow.pop %v1928
  %v1930 = vsel %vm372, %v1927, 0.0
  %1931 = vadd.xlane.f32.xlu0 %v1930
  %v1932 = vpop.xlane.xlu0 %1931
  %v1933 = vsel %vm372, %v1929, 0.0
  %1934 = vadd.xlane.f32.xlu0 %v1933
  %v1935 = vpop.xlane.xlu0 %1934
  %v1936 = vrcp.pop %v1932
  %v1937 = vrcp.pop %v1935
  %v1938 = vmul.f32 %v1927, %v1936
  %v1939 = vmul.f32 %v1929, %v1937
  %1940 = vrot.lane.b32.xlu0 %v1418, 48
  %v1941 = vpop.permute.xlu0 %1940
  %v1944 = vsel %vm372, %v1938, 0
  %1946 = vmatprep.subr.mxu0 0.0
  %1947 = vmatpush1.msra.mxu0 %v1941
  %1948 = vmatprep.subr.mxu0 0.0
  %1949 = vmatpush1.msra.mxu0 0.0
  %1950 = vmatprep.subr.mxu0 0.0
  %1951 = vmatpush1.msra.mxu0 0.0
  %1952 = vmatprep.subr.mxu0 0.0
  %1953 = vmatpush1.msra.mxu0 0.0
  %1954 = vmatprep.subr.mxu0 0.0
  %1955 = vmatpush1.msra.mxu0 0.0
  %1956 = vmatprep.subr.mxu0 0.0
  %1957 = vmatpush1.msra.mxu0 0.0
  %1958 = vmatprep.subr.mxu0 0.0
  %1959 = vmatpush1.msra.mxu0 0.0
  %1960 = vmatprep.subr.mxu0 0.0
  %1961 = vmatpush1.msra.mxu0 0.0
  %1962 = vmatprep.subr.mxu0 0.0
  %1963 = vmatpush1.msra.mxu0 0.0
  %1964 = vmatprep.subr.mxu0 0.0
  %1965 = vmatpush1.msra.mxu0 0.0
  %1966 = vmatprep.subr.mxu0 0.0
  %1967 = vmatpush1.msra.mxu0 0.0
  %1968 = vmatprep.subr.mxu0 0.0
  %1969 = vmatpush1.msra.mxu0 0.0
  %1970 = vmatprep.subr.mxu0 0.0
  %1971 = vmatpush1.msra.mxu0 0.0
  %1972 = vmatprep.subr.mxu0 0.0
  %1973 = vmatpush1.msra.mxu0 0.0
  %1974 = vmatprep.subr.mxu0 0.0
  %1975 = vmatpush1.msra.mxu0 0.0
  %1976 = vmatprep.subr.mxu0 0.0
  %1977 = vmatpush1.msra.mxu0 0.0
  %1978 = vmatprep.subr.mxu0 0.0
  %1979 = vmatpush1.msra.mxu0 0.0
  %1980 = vmatprep.subr.mxu0 0.0
  %1981 = vmatpush1.msra.mxu0 0.0
  %1982 = vmatprep.subr.mxu0 0.0
  %1983 = vmatpush1.msra.mxu0 0.0
  %1984 = vmatprep.subr.mxu0 0.0
  %1985 = vmatpush1.msra.mxu0 0.0
  %1986 = vmatprep.subr.mxu0 0.0
  %1987 = vmatpush1.msra.mxu0 0.0
  %1988 = vmatprep.subr.mxu0 0.0
  %1989 = vmatpush1.msra.mxu0 0.0
  %1990 = vmatprep.subr.mxu0 0.0
  %1991 = vmatpush1.msra.mxu0 0.0
  %1992 = vmatprep.subr.mxu0 0.0
  %1993 = vmatpush1.msra.mxu0 0.0
  %1994 = vmatprep.subr.mxu0 0.0
  %1995 = vmatpush1.msra.mxu0 0.0
  %1996 = vmatprep.subr.mxu0 0.0
  %1997 = vmatpush1.msra.mxu0 0.0
  %1998 = vmatprep.subr.mxu0 0.0
  %1999 = vmatpush1.msra.mxu0 0.0
  %2000 = vmatprep.subr.mxu0 0.0
  %2001 = vmatpush1.msra.mxu0 0.0
  %2002 = vmatprep.subr.mxu0 0.0
  %2003 = vmatpush1.msra.mxu0 0.0
  %2004 = vmatprep.subr.mxu0 0.0
  %2005 = vmatpush1.msra.mxu0 0.0
  %2006 = vmatprep.subr.mxu0 0.0
  %2007 = vmatpush1.msra.mxu0 0.0
  %2008 = vmatprep.subr.mxu0 0.0
  %2009 = vmatpush1.msra.mxu0 0.0
  %2010 = vmatprep.mubr.f32.mxu0 0.0
  %2011 = vmatmul.mubr.f32.gmra.mrb[0].mxu0 %v1944
  %v2012 = vpop.f32.mrb[0].mxu0
  %v2013 = vadd.f32 0.0, %v2012
  %v2014 = vpop.f32.mrb[0].mxu0
  %2015 = vdwg.mxu0
  %2016 = vrot.lane.b32.xlu0 %v1423, 48
  %v2017 = vpop.permute.xlu0 %2016
  %v2020 = vsel %vm372, %v1939, 0
  %2022 = vmatprep.subr.mxu0 0.0
  %2023 = vmatpush1.msra.mxu0 %v2017
  %2024 = vmatprep.subr.mxu0 0.0
  %2025 = vmatpush1.msra.mxu0 0.0
  %2026 = vmatprep.subr.mxu0 0.0
  %2027 = vmatpush1.msra.mxu0 0.0
  %2028 = vmatprep.subr.mxu0 0.0
  %2029 = vmatpush1.msra.mxu0 0.0
  %2030 = vmatprep.subr.mxu0 0.0
  %2031 = vmatpush1.msra.mxu0 0.0
  %2032 = vmatprep.subr.mxu0 0.0
  %2033 = vmatpush1.msra.mxu0 0.0
  %2034 = vmatprep.subr.mxu0 0.0
  %2035 = vmatpush1.msra.mxu0 0.0
  %2036 = vmatprep.subr.mxu0 0.0
  %2037 = vmatpush1.msra.mxu0 0.0
  %2038 = vmatprep.subr.mxu0 0.0
  %2039 = vmatpush1.msra.mxu0 0.0
  %2040 = vmatprep.subr.mxu0 0.0
  %2041 = vmatpush1.msra.mxu0 0.0
  %2042 = vmatprep.subr.mxu0 0.0
  %2043 = vmatpush1.msra.mxu0 0.0
  %2044 = vmatprep.subr.mxu0 0.0
  %2045 = vmatpush1.msra.mxu0 0.0
  %2046 = vmatprep.subr.mxu0 0.0
  %2047 = vmatpush1.msra.mxu0 0.0
  %2048 = vmatprep.subr.mxu0 0.0
  %2049 = vmatpush1.msra.mxu0 0.0
  %2050 = vmatprep.subr.mxu0 0.0
  %2051 = vmatpush1.msra.mxu0 0.0
  %2052 = vmatprep.subr.mxu0 0.0
  %2053 = vmatpush1.msra.mxu0 0.0
  %2054 = vmatprep.subr.mxu0 0.0
  %2055 = vmatpush1.msra.mxu0 0.0
  %2056 = vmatprep.subr.mxu0 0.0
  %2057 = vmatpush1.msra.mxu0 0.0
  %2058 = vmatprep.subr.mxu0 0.0
  %2059 = vmatpush1.msra.mxu0 0.0
  %2060 = vmatprep.subr.mxu0 0.0
  %2061 = vmatpush1.msra.mxu0 0.0
  %2062 = vmatprep.subr.mxu0 0.0
  %2063 = vmatpush1.msra.mxu0 0.0
  %2064 = vmatprep.subr.mxu0 0.0
  %2065 = vmatpush1.msra.mxu0 0.0
  %2066 = vmatprep.subr.mxu0 0.0
  %2067 = vmatpush1.msra.mxu0 0.0
  %2068 = vmatprep.subr.mxu0 0.0
  %2069 = vmatpush1.msra.mxu0 0.0
  %2070 = vmatprep.subr.mxu0 0.0
  %2071 = vmatpush1.msra.mxu0 0.0
  %2072 = vmatprep.subr.mxu0 0.0
  %2073 = vmatpush1.msra.mxu0 0.0
  %2074 = vmatprep.subr.mxu0 0.0
  %2075 = vmatpush1.msra.mxu0 0.0
  %2076 = vmatprep.subr.mxu0 0.0
  %2077 = vmatpush1.msra.mxu0 0.0
  %2078 = vmatprep.subr.mxu0 0.0
  %2079 = vmatpush1.msra.mxu0 0.0
  %2080 = vmatprep.subr.mxu0 0.0
  %2081 = vmatpush1.msra.mxu0 0.0
  %2082 = vmatprep.subr.mxu0 0.0
  %2083 = vmatpush1.msra.mxu0 0.0
  %2084 = vmatprep.subr.mxu0 0.0
  %2085 = vmatpush1.msra.mxu0 0.0
  %2086 = vmatprep.mubr.f32.mxu0 0.0
  %2087 = vmatmul.mubr.f32.gmra.mrb[0].mxu0 %v2020
  %v2088 = vpop.f32.mrb[0].mxu0
  %v2089 = vadd.f32 0.0, %v2088
  %v2090 = vpop.f32.mrb[0].mxu0
  %2091 = vdwg.mxu0
  %v2093 = vsel %vm204, %v2013, 0
  %v2096 = vsel %vm204, %v2089, 0
  %2098 = vmatprep.subr.mxu0 0.0
  %2099 = vmatpush1.msra.mxu0 %v1330
  %2100 = vmatprep.subr.mxu0 0.0
  %2101 = vmatpush1.msra.mxu0 %v1331
  %2102 = vmatprep.subr.mxu0 0.0
  %2103 = vmatpush1.msra.mxu0 0.0
  %2104 = vmatprep.subr.mxu0 0.0
  %2105 = vmatpush1.msra.mxu0 0.0
  %2106 = vmatprep.subr.mxu0 0.0
  %2107 = vmatpush1.msra.mxu0 0.0
  %2108 = vmatprep.subr.mxu0 0.0
  %2109 = vmatpush1.msra.mxu0 0.0
  %2110 = vmatprep.subr.mxu0 0.0
  %2111 = vmatpush1.msra.mxu0 0.0
  %2112 = vmatprep.subr.mxu0 0.0
  %2113 = vmatpush1.msra.mxu0 0.0
  %2114 = vmatprep.subr.mxu0 0.0
  %2115 = vmatpush1.msra.mxu0 0.0
  %2116 = vmatprep.subr.mxu0 0.0
  %2117 = vmatpush1.msra.mxu0 0.0
  %2118 = vmatprep.subr.mxu0 0.0
  %2119 = vmatpush1.msra.mxu0 0.0
  %2120 = vmatprep.subr.mxu0 0.0
  %2121 = vmatpush1.msra.mxu0 0.0
  %2122 = vmatprep.subr.mxu0 0.0
  %2123 = vmatpush1.msra.mxu0 0.0
  %2124 = vmatprep.subr.mxu0 0.0
  %2125 = vmatpush1.msra.mxu0 0.0
  %2126 = vmatprep.subr.mxu0 0.0
  %2127 = vmatpush1.msra.mxu0 0.0
  %2128 = vmatprep.subr.mxu0 0.0
  %2129 = vmatpush1.msra.mxu0 0.0
  %2130 = vmatprep.subr.mxu0 0.0
  %2131 = vmatpush1.msra.mxu0 0.0
  %2132 = vmatprep.subr.mxu0 0.0
  %2133 = vmatpush1.msra.mxu0 0.0
  %2134 = vmatprep.subr.mxu0 0.0
  %2135 = vmatpush1.msra.mxu0 0.0
  %2136 = vmatprep.subr.mxu0 0.0
  %2137 = vmatpush1.msra.mxu0 0.0
  %2138 = vmatprep.subr.mxu0 0.0
  %2139 = vmatpush1.msra.mxu0 0.0
  %2140 = vmatprep.subr.mxu0 0.0
  %2141 = vmatpush1.msra.mxu0 0.0
  %2142 = vmatprep.subr.mxu0 0.0
  %2143 = vmatpush1.msra.mxu0 0.0
  %2144 = vmatprep.subr.mxu0 0.0
  %2145 = vmatpush1.msra.mxu0 0.0
  %2146 = vmatprep.subr.mxu0 0.0
  %2147 = vmatpush1.msra.mxu0 0.0
  %2148 = vmatprep.subr.mxu0 0.0
  %2149 = vmatpush1.msra.mxu0 0.0
  %2150 = vmatprep.subr.mxu0 0.0
  %2151 = vmatpush1.msra.mxu0 0.0
  %2152 = vmatprep.subr.mxu0 0.0
  %2153 = vmatpush1.msra.mxu0 0.0
  %2154 = vmatprep.subr.mxu0 0.0
  %2155 = vmatpush1.msra.mxu0 0.0
  %2156 = vmatprep.subr.mxu0 0.0
  %2157 = vmatpush1.msra.mxu0 0.0
  %2158 = vmatprep.subr.mxu0 0.0
  %2159 = vmatpush1.msra.mxu0 0.0
  %2160 = vmatprep.subr.mxu0 0.0
  %2161 = vmatpush1.msra.mxu0 0.0
  %2162 = vmatprep.mubr.f32.mxu0 0.0
  %2163 = vmatmul.mubr.f32.gmra.mrb[0].mxu0 %v2093
  %v2164 = vpop.f32.mrb[0].mxu0
  %v2165 = vadd.f32 0.0, %v2164
  %v2166 = vpop.f32.mrb[0].mxu0
  %2167 = vmatprep.mubr.f32.mxu0 0.0
  %2168 = vmatmul.mubr.f32.gmra.mrb[0].mxu0 %v2096
  %v2169 = vpop.f32.mrb[0].mxu0
  %v2170 = vadd.f32 0.0, %v2169
  %v2171 = vpop.f32.mrb[0].mxu0
  %2172 = vdwg.mxu0
  %v2174 = vsel %vm204, %v1679, 0
  %v2177 = vsel %vm204, %v1755, 0
  %2179 = vmatprep.subr.mxu0 0.0
  %2180 = vmatpush1.msra.mxu0 %v1328
  %2181 = vmatprep.subr.mxu0 0.0
  %2182 = vmatpush1.msra.mxu0 %v1329
  %2183 = vmatprep.subr.mxu0 0.0
  %2184 = vmatpush1.msra.mxu0 0.0
  %2185 = vmatprep.subr.mxu0 0.0
  %2186 = vmatpush1.msra.mxu0 0.0
  %2187 = vmatprep.subr.mxu0 0.0
  %2188 = vmatpush1.msra.mxu0 0.0
  %2189 = vmatprep.subr.mxu0 0.0
  %2190 = vmatpush1.msra.mxu0 0.0
  %2191 = vmatprep.subr.mxu0 0.0
  %2192 = vmatpush1.msra.mxu0 0.0
  %2193 = vmatprep.subr.mxu0 0.0
  %2194 = vmatpush1.msra.mxu0 0.0
  %2195 = vmatprep.subr.mxu0 0.0
  %2196 = vmatpush1.msra.mxu0 0.0
  %2197 = vmatprep.subr.mxu0 0.0
  %2198 = vmatpush1.msra.mxu0 0.0
  %2199 = vmatprep.subr.mxu0 0.0
  %2200 = vmatpush1.msra.mxu0 0.0
  %2201 = vmatprep.subr.mxu0 0.0
  %2202 = vmatpush1.msra.mxu0 0.0
  %2203 = vmatprep.subr.mxu0 0.0
  %2204 = vmatpush1.msra.mxu0 0.0
  %2205 = vmatprep.subr.mxu0 0.0
  %2206 = vmatpush1.msra.mxu0 0.0
  %2207 = vmatprep.subr.mxu0 0.0
  %2208 = vmatpush1.msra.mxu0 0.0
  %2209 = vmatprep.subr.mxu0 0.0
  %2210 = vmatpush1.msra.mxu0 0.0
  %2211 = vmatprep.subr.mxu0 0.0
  %2212 = vmatpush1.msra.mxu0 0.0
  %2213 = vmatprep.subr.mxu0 0.0
  %2214 = vmatpush1.msra.mxu0 0.0
  %2215 = vmatprep.subr.mxu0 0.0
  %2216 = vmatpush1.msra.mxu0 0.0
  %2217 = vmatprep.subr.mxu0 0.0
  %2218 = vmatpush1.msra.mxu0 0.0
  %2219 = vmatprep.subr.mxu0 0.0
  %2220 = vmatpush1.msra.mxu0 0.0
  %2221 = vmatprep.subr.mxu0 0.0
  %2222 = vmatpush1.msra.mxu0 0.0
  %2223 = vmatprep.subr.mxu0 0.0
  %2224 = vmatpush1.msra.mxu0 0.0
  %2225 = vmatprep.subr.mxu0 0.0
  %2226 = vmatpush1.msra.mxu0 0.0
  %2227 = vmatprep.subr.mxu0 0.0
  %2228 = vmatpush1.msra.mxu0 0.0
  %2229 = vmatprep.subr.mxu0 0.0
  %2230 = vmatpush1.msra.mxu0 0.0
  %2231 = vmatprep.subr.mxu0 0.0
  %2232 = vmatpush1.msra.mxu0 0.0
  %2233 = vmatprep.subr.mxu0 0.0
  %2234 = vmatpush1.msra.mxu0 0.0
  %2235 = vmatprep.subr.mxu0 0.0
  %2236 = vmatpush1.msra.mxu0 0.0
  %2237 = vmatprep.subr.mxu0 0.0
  %2238 = vmatpush1.msra.mxu0 0.0
  %2239 = vmatprep.subr.mxu0 0.0
  %2240 = vmatpush1.msra.mxu0 0.0
  %2241 = vmatprep.subr.mxu0 0.0
  %2242 = vmatpush1.msra.mxu0 0.0
  %2243 = vmatprep.mubr.f32.mxu0 0.0
  %2244 = vmatmul.mubr.f32.gmra.mrb[0].mxu0 %v2174
  %v2245 = vpop.f32.mrb[0].mxu0
  %v2246 = vadd.f32 %v2165, %v2245
  %v2247 = vpop.f32.mrb[0].mxu0
  %2248 = vmatprep.mubr.f32.mxu0 0.0
  %2249 = vmatmul.mubr.f32.gmra.mrb[0].mxu0 %v2177
  %v2250 = vpop.f32.mrb[0].mxu0
  %v2251 = vadd.f32 %v2170, %v2250
  %v2252 = vpop.f32.mrb[0].mxu0
  %2253 = vdwg.mxu0
  %v2254 = vlaneseq
  %v2255 = vshrl.u32 %v2254, 7
  %v2256 = vsub.s32 0, %v2255
  %v2257 = vrot.slane %v1326, %v2256
  %v2258 = vadd.f32 %v2246, %v2257
  %v2259 = vadd.f32 %v2251, %v2257
  %v2260 = vadd.f32 %v1323, %v2258
  %v2261 = vadd.f32 %v1324, %v2259
  %v2262 = vsel %vm58, %v2260, 0.0
  %2263 = vadd.xlane.f32.xlu0 %v2262
  %v2264 = vpop.xlane.xlu0 %2263
  %v2265 = vsel %vm58, %v2261, 0.0
  %2266 = vadd.xlane.f32.xlu0 %v2265
  %v2267 = vpop.xlane.xlu0 %2266
  %v2268 = vmul.f32 %v2264, %v65
  %v2269 = vmul.f32 %v2267, %v65
  %v2270 = vsub.f32 %v2260, %v2268
  %v2271 = vsub.f32 %v2261, %v2269
  %v2272 = vmul.f32 %v2270, %v2270
  %v2273 = vmul.f32 %v2271, %v2271
  %v2274 = vsel %vm58, %v2272, 0.0
  %2275 = vadd.xlane.f32.xlu0 %v2274
  %v2276 = vpop.xlane.xlu0 %2275
  %v2277 = vsel %vm58, %v2273, 0.0
  %2278 = vadd.xlane.f32.xlu0 %v2277
  %v2279 = vpop.xlane.xlu0 %2278
  %v2280 = vmul.f32 %v2276, %v65
  %v2281 = vmul.f32 %v2279, %v65
  %v2282 = vadd.f32 %v2280, 1e-12
  %v2283 = vadd.f32 %v2281, 1e-12
  %v2284 = vrsqrt.pop %v2282
  %v2285 = vrsqrt.pop %v2283
  %v2286 = vmul.f32 %v2270, %v2284
  %v2287 = vmul.f32 %v2271, %v2285
  %v2288 = vlaneseq
  %v2289 = vshrl.u32 %v2288, 7
  %v2290 = vsub.s32 1, %v2289
  %v2291 = vrot.slane %v1326, %v2290
  %v2292 = vmul.f32 %v2286, %v2291
  %v2293 = vmul.f32 %v2287, %v2291
  %v2294 = vlaneseq
  %v2295 = vshrl.u32 %v2294, 7
  %v2296 = vsub.s32 2, %v2295
  %v2297 = vrot.slane %v1326, %v2296
  %v2298 = vadd.f32 %v2292, %v2297
  %v2299 = vadd.f32 %v2293, %v2297
  %s2300 = scalar_lea.vmem %s6, 32
  %v2301 = vld [vmem:[%s2300] sm:$0xff]
  %v2302 = vld [vmem:[%s2300 + $0x8] sm:$0xff]
  %v2303 = vld [vmem:[%s2300 + $0x10] sm:$0xff]
  %v2304 = vld [vmem:[%s2300 + $0x18] sm:$0xff]
  %s2305 = scalar_lea.vmem %s7, 1
  %v2306 = vld [vmem:[%s2305] sm:$0x1]
  %v2308 = vlaneseq
  %v2309 = vshrl.u32 %v2308, 7
  %v2310 = vsub.s32 0, %v2309
  %v2311 = vrot.slane %v2306, %v2310
  %v2314 = vsel %vm58, %v2298, 0
  %v2317 = vsel %vm58, %v2299, 0
  %2319 = vmatprep.subr.mxu0 0.0
  %2320 = vmatpush1.msra.mxu0 %v2301
  %2321 = vmatprep.subr.mxu0 0.0
  %2322 = vmatpush1.msra.mxu0 %v2302
  %2323 = vmatprep.subr.mxu0 0.0
  %2324 = vmatpush1.msra.mxu0 %v2303
  %2325 = vmatprep.subr.mxu0 0.0
  %2326 = vmatpush1.msra.mxu0 %v2304
  %2327 = vmatprep.subr.mxu0 0.0
  %2328 = vmatpush1.msra.mxu0 0.0
  %2329 = vmatprep.subr.mxu0 0.0
  %2330 = vmatpush1.msra.mxu0 0.0
  %2331 = vmatprep.subr.mxu0 0.0
  %2332 = vmatpush1.msra.mxu0 0.0
  %2333 = vmatprep.subr.mxu0 0.0
  %2334 = vmatpush1.msra.mxu0 0.0
  %2335 = vmatprep.subr.mxu0 0.0
  %2336 = vmatpush1.msra.mxu0 0.0
  %2337 = vmatprep.subr.mxu0 0.0
  %2338 = vmatpush1.msra.mxu0 0.0
  %2339 = vmatprep.subr.mxu0 0.0
  %2340 = vmatpush1.msra.mxu0 0.0
  %2341 = vmatprep.subr.mxu0 0.0
  %2342 = vmatpush1.msra.mxu0 0.0
  %2343 = vmatprep.subr.mxu0 0.0
  %2344 = vmatpush1.msra.mxu0 0.0
  %2345 = vmatprep.subr.mxu0 0.0
  %2346 = vmatpush1.msra.mxu0 0.0
  %2347 = vmatprep.subr.mxu0 0.0
  %2348 = vmatpush1.msra.mxu0 0.0
  %2349 = vmatprep.subr.mxu0 0.0
  %2350 = vmatpush1.msra.mxu0 0.0
  %2351 = vmatprep.subr.mxu0 0.0
  %2352 = vmatpush1.msra.mxu0 0.0
  %2353 = vmatprep.subr.mxu0 0.0
  %2354 = vmatpush1.msra.mxu0 0.0
  %2355 = vmatprep.subr.mxu0 0.0
  %2356 = vmatpush1.msra.mxu0 0.0
  %2357 = vmatprep.subr.mxu0 0.0
  %2358 = vmatpush1.msra.mxu0 0.0
  %2359 = vmatprep.subr.mxu0 0.0
  %2360 = vmatpush1.msra.mxu0 0.0
  %2361 = vmatprep.subr.mxu0 0.0
  %2362 = vmatpush1.msra.mxu0 0.0
  %2363 = vmatprep.subr.mxu0 0.0
  %2364 = vmatpush1.msra.mxu0 0.0
  %2365 = vmatprep.subr.mxu0 0.0
  %2366 = vmatpush1.msra.mxu0 0.0
  %2367 = vmatprep.subr.mxu0 0.0
  %2368 = vmatpush1.msra.mxu0 0.0
  %2369 = vmatprep.subr.mxu0 0.0
  %2370 = vmatpush1.msra.mxu0 0.0
  %2371 = vmatprep.subr.mxu0 0.0
  %2372 = vmatpush1.msra.mxu0 0.0
  %2373 = vmatprep.subr.mxu0 0.0
  %2374 = vmatpush1.msra.mxu0 0.0
  %2375 = vmatprep.subr.mxu0 0.0
  %2376 = vmatpush1.msra.mxu0 0.0
  %2377 = vmatprep.subr.mxu0 0.0
  %2378 = vmatpush1.msra.mxu0 0.0
  %2379 = vmatprep.subr.mxu0 0.0
  %2380 = vmatpush1.msra.mxu0 0.0
  %2381 = vmatprep.subr.mxu0 0.0
  %2382 = vmatpush1.msra.mxu0 0.0
  %2383 = vmatprep.mubr.f32.mxu0 0.0
  %2384 = vmatmul.mubr.f32.gmra.mrb[0].mxu0 %v2314
  %v2385 = vpop.f32.mrb[0].mxu0
  %v2386 = vadd.f32 %v2311, %v2385
  %v2387 = vpop.f32.mrb[0].mxu0
  %2388 = vmatprep.mubr.f32.mxu0 0.0
  %2389 = vmatmul.mubr.f32.gmra.mrb[0].mxu0 %v2317
  %v2390 = vpop.f32.mrb[0].mxu0
  %v2391 = vadd.f32 %v2311, %v2390
  %v2392 = vpop.f32.mrb[0].mxu0
  %2393 = vdwg.mxu0
  %v2394 = vmul.f32 %v2386, 0.5
  %v2395 = vmul.f32 %v2391, 0.5
  %v2396 = vmul.f32 %v2386, 0.70710677
  %v2397 = vmul.f32 %v2391, 0.70710677
  %v2398 = verf.f32.pop %v2396
  %v2399 = verf.f32.pop %v2397
  %v2400 = vadd.f32 %v2398, 1.0
  %v2401 = vadd.f32 %v2399, 1.0
  %v2402 = vmul.f32 %v2394, %v2400
  %v2403 = vmul.f32 %v2395, %v2401
  %s2404 = scalar_lea.vmem %s8, 64
  %v2405 = vld [vmem:[%s2404] sm:$0xff]
  %v2406 = vld [vmem:[%s2404 + $0x8] sm:$0xff]
  %v2407 = vld [vmem:[%s2404 + $0x10] sm:$0xff]
  %v2408 = vld [vmem:[%s2404 + $0x18] sm:$0xff]
  %v2409 = vld [vmem:[%s2404 + $0x20] sm:$0xff]
  %v2410 = vld [vmem:[%s2404 + $0x28] sm:$0xff]
  %v2411 = vld [vmem:[%s2404 + $0x30] sm:$0xff]
  %v2412 = vld [vmem:[%s2404 + $0x38] sm:$0xff]
  %v2413 = vlaneseq
  %v2414 = vshrl.u32 %v2413, 7
  %v2415 = vsub.s32 3, %v2414
  %v2416 = vrot.slane %v1326, %v2415
  %v2418 = vsel %vm1203, %v2402, 0
  %v2421 = vsel %vm1203, %v2403, 0
  %2423 = vmatprep.subr.mxu0 0.0
  %2424 = vmatpush1.msra.mxu0 %v2405
  %2425 = vmatprep.subr.mxu0 0.0
  %2426 = vmatpush1.msra.mxu0 %v2406
  %2427 = vmatprep.subr.mxu0 0.0
  %2428 = vmatpush1.msra.mxu0 %v2407
  %2429 = vmatprep.subr.mxu0 0.0
  %2430 = vmatpush1.msra.mxu0 %v2408
  %2431 = vmatprep.subr.mxu0 0.0
  %2432 = vmatpush1.msra.mxu0 %v2409
  %2433 = vmatprep.subr.mxu0 0.0
  %2434 = vmatpush1.msra.mxu0 %v2410
  %2435 = vmatprep.subr.mxu0 0.0
  %2436 = vmatpush1.msra.mxu0 %v2411
  %2437 = vmatprep.subr.mxu0 0.0
  %2438 = vmatpush1.msra.mxu0 %v2412
  %2439 = vmatprep.subr.mxu0 0.0
  %2440 = vmatpush1.msra.mxu0 0.0
  %2441 = vmatprep.subr.mxu0 0.0
  %2442 = vmatpush1.msra.mxu0 0.0
  %2443 = vmatprep.subr.mxu0 0.0
  %2444 = vmatpush1.msra.mxu0 0.0
  %2445 = vmatprep.subr.mxu0 0.0
  %2446 = vmatpush1.msra.mxu0 0.0
  %2447 = vmatprep.subr.mxu0 0.0
  %2448 = vmatpush1.msra.mxu0 0.0
  %2449 = vmatprep.subr.mxu0 0.0
  %2450 = vmatpush1.msra.mxu0 0.0
  %2451 = vmatprep.subr.mxu0 0.0
  %2452 = vmatpush1.msra.mxu0 0.0
  %2453 = vmatprep.subr.mxu0 0.0
  %2454 = vmatpush1.msra.mxu0 0.0
  %2455 = vmatprep.subr.mxu0 0.0
  %2456 = vmatpush1.msra.mxu0 0.0
  %2457 = vmatprep.subr.mxu0 0.0
  %2458 = vmatpush1.msra.mxu0 0.0
  %2459 = vmatprep.subr.mxu0 0.0
  %2460 = vmatpush1.msra.mxu0 0.0
  %2461 = vmatprep.subr.mxu0 0.0
  %2462 = vmatpush1.msra.mxu0 0.0
  %2463 = vmatprep.subr.mxu0 0.0
  %2464 = vmatpush1.msra.mxu0 0.0
  %2465 = vmatprep.subr.mxu0 0.0
  %2466 = vmatpush1.msra.mxu0 0.0
  %2467 = vmatprep.subr.mxu0 0.0
  %2468 = vmatpush1.msra.mxu0 0.0
  %2469 = vmatprep.subr.mxu0 0.0
  %2470 = vmatpush1.msra.mxu0 0.0
  %2471 = vmatprep.subr.mxu0 0.0
  %2472 = vmatpush1.msra.mxu0 0.0
  %2473 = vmatprep.subr.mxu0 0.0
  %2474 = vmatpush1.msra.mxu0 0.0
  %2475 = vmatprep.subr.mxu0 0.0
  %2476 = vmatpush1.msra.mxu0 0.0
  %2477 = vmatprep.subr.mxu0 0.0
  %2478 = vmatpush1.msra.mxu0 0.0
  %2479 = vmatprep.subr.mxu0 0.0
  %2480 = vmatpush1.msra.mxu0 0.0
  %2481 = vmatprep.subr.mxu0 0.0
  %2482 = vmatpush1.msra.mxu0 0.0
  %2483 = vmatprep.subr.mxu0 0.0
  %2484 = vmatpush1.msra.mxu0 0.0
  %2485 = vmatprep.subr.mxu0 0.0
  %2486 = vmatpush1.msra.mxu0 0.0
  %2487 = vmatprep.mubr.f32.mxu0 0.0
  %2488 = vmatmul.mubr.f32.gmra.mrb[0].mxu0 %v2418
  %v2489 = vpop.f32.mrb[0].mxu0
  %v2490 = vadd.f32 %v2416, %v2489
  %v2491 = vpop.f32.mrb[0].mxu0
  %2492 = vmatprep.mubr.f32.mxu0 0.0
  %2493 = vmatmul.mubr.f32.gmra.mrb[0].mxu0 %v2421
  %v2494 = vpop.f32.mrb[0].mxu0
  %v2495 = vadd.f32 %v2416, %v2494
  %v2496 = vpop.f32.mrb[0].mxu0
  %2497 = vdwg.mxu0
  %v2498 = vadd.f32 %v2298, %v2490
  %v2499 = vadd.f32 %v2299, %v2495
  %v2500 = vsel %vm58, %v2498, 0.0
  %2501 = vadd.xlane.f32.xlu0 %v2500
  %v2502 = vpop.xlane.xlu0 %2501
  %v2503 = vsel %vm58, %v2499, 0.0
  %2504 = vadd.xlane.f32.xlu0 %v2503
  %v2505 = vpop.xlane.xlu0 %2504
  %v2506 = vmul.f32 %v2502, %v65
  %v2507 = vmul.f32 %v2505, %v65
  %v2508 = vsub.f32 %v2498, %v2506
  %v2509 = vsub.f32 %v2499, %v2507
  %v2510 = vmul.f32 %v2508, %v2508
  %v2511 = vmul.f32 %v2509, %v2509
  %v2512 = vsel %vm58, %v2510, 0.0
  %2513 = vadd.xlane.f32.xlu0 %v2512
  %v2514 = vpop.xlane.xlu0 %2513
  %v2515 = vsel %vm58, %v2511, 0.0
  %2516 = vadd.xlane.f32.xlu0 %v2515
  %v2517 = vpop.xlane.xlu0 %2516
  %v2518 = vmul.f32 %v2514, %v65
  %v2519 = vmul.f32 %v2517, %v65
  %v2520 = vadd.f32 %v2518, 1e-12
  %v2521 = vadd.f32 %v2519, 1e-12
  %v2522 = vrsqrt.pop %v2520
  %v2523 = vrsqrt.pop %v2521
  %v2524 = vmul.f32 %v2508, %v2522
  %v2525 = vmul.f32 %v2509, %v2523
  %v2526 = vlaneseq
  %v2527 = vshrl.u32 %v2526, 7
  %v2528 = vsub.s32 4, %v2527
  %v2529 = vrot.slane %v1326, %v2528
  %v2530 = vmul.f32 %v2524, %v2529
  %v2531 = vmul.f32 %v2525, %v2529
  %v2532 = vlaneseq
  %v2533 = vshrl.u32 %v2532, 7
  %v2534 = vsub.s32 5, %v2533
  %v2535 = vrot.slane %v1326, %v2534
  %v2536 = vadd.f32 %v2530, %v2535
  %v2537 = vadd.f32 %v2531, %v2535
  %v2538 = vsel %vm58, %v2536, 0.0
  %v2539 = vrot.slane %v2538, 4
  %v2540 = vadd.f32 %v2538, %v2539
  %v2541 = vrot.slane %v2540, 2
  %v2542 = vadd.f32 %v2540, %v2541
  %v2543 = vrot.slane %v2542, 1
  %v2544 = vadd.f32 %v2542, %v2543
  %v2545 = vsel %vm58, %v2537, 0.0
  %v2546 = vrot.slane %v2545, 4
  %v2547 = vadd.f32 %v2545, %v2546
  %v2548 = vrot.slane %v2547, 2
  %v2549 = vadd.f32 %v2547, %v2548
  %v2550 = vrot.slane %v2549, 1
  %v2551 = vadd.f32 %v2549, %v2550
  %v2552 = vrcp.pop 8.0
  %v2553 = vmul.f32 %v2544, %v2552
  %v2554 = vmul.f32 %v2551, %v2552
  %v2555 = vld [vmem:[%s10] sm:$0xff]
  %v2556 = vld [vmem:[%s10 + $0x8] sm:$0xff]
  %v2557 = vld [vmem:[%s10 + $0x10] sm:$0xff]
  %v2558 = vld [vmem:[%s10 + $0x18] sm:$0xff]
  %v2559 = vld [vmem:[%s10 + $0x20] sm:$0xff]
  %v2560 = vld [vmem:[%s10 + $0x28] sm:$0xff]
  %v2561 = vld [vmem:[%s10 + $0x30] sm:$0xff]
  %v2562 = vld [vmem:[%s10 + $0x38] sm:$0xff]
  %vm2565 = vcmask 1041409
  %v2566 = vsel %vm2565, %v2554, %v2553
  %v2567 = vsel %vm58, %v2566, 0
  %2569 = vmatprep.subr.mxu0 0.0
  %2570 = vmatpush1.msra.mxu0 %v2559
  %2571 = vmatprep.subr.mxu0 0.0
  %2572 = vmatpush1.msra.mxu0 %v2560
  %2573 = vmatprep.subr.mxu0 0.0
  %2574 = vmatpush1.msra.mxu0 %v2561
  %2575 = vmatprep.subr.mxu0 0.0
  %2576 = vmatpush1.msra.mxu0 %v2562
  %2577 = vmatprep.subr.mxu0 0.0
  %2578 = vmatpush1.msra.mxu0 0.0
  %2579 = vmatprep.subr.mxu0 0.0
  %2580 = vmatpush1.msra.mxu0 0.0
  %2581 = vmatprep.subr.mxu0 0.0
  %2582 = vmatpush1.msra.mxu0 0.0
  %2583 = vmatprep.subr.mxu0 0.0
  %2584 = vmatpush1.msra.mxu0 0.0
  %2585 = vmatprep.subr.mxu0 0.0
  %2586 = vmatpush1.msra.mxu0 0.0
  %2587 = vmatprep.subr.mxu0 0.0
  %2588 = vmatpush1.msra.mxu0 0.0
  %2589 = vmatprep.subr.mxu0 0.0
  %2590 = vmatpush1.msra.mxu0 0.0
  %2591 = vmatprep.subr.mxu0 0.0
  %2592 = vmatpush1.msra.mxu0 0.0
  %2593 = vmatprep.subr.mxu0 0.0
  %2594 = vmatpush1.msra.mxu0 0.0
  %2595 = vmatprep.subr.mxu0 0.0
  %2596 = vmatpush1.msra.mxu0 0.0
  %2597 = vmatprep.subr.mxu0 0.0
  %2598 = vmatpush1.msra.mxu0 0.0
  %2599 = vmatprep.subr.mxu0 0.0
  %2600 = vmatpush1.msra.mxu0 0.0
  %2601 = vmatprep.subr.mxu0 0.0
  %2602 = vmatpush1.msra.mxu0 0.0
  %2603 = vmatprep.subr.mxu0 0.0
  %2604 = vmatpush1.msra.mxu0 0.0
  %2605 = vmatprep.subr.mxu0 0.0
  %2606 = vmatpush1.msra.mxu0 0.0
  %2607 = vmatprep.subr.mxu0 0.0
  %2608 = vmatpush1.msra.mxu0 0.0
  %2609 = vmatprep.subr.mxu0 0.0
  %2610 = vmatpush1.msra.mxu0 0.0
  %2611 = vmatprep.subr.mxu0 0.0
  %2612 = vmatpush1.msra.mxu0 0.0
  %2613 = vmatprep.subr.mxu0 0.0
  %2614 = vmatpush1.msra.mxu0 0.0
  %2615 = vmatprep.subr.mxu0 0.0
  %2616 = vmatpush1.msra.mxu0 0.0
  %2617 = vmatprep.subr.mxu0 0.0
  %2618 = vmatpush1.msra.mxu0 0.0
  %2619 = vmatprep.subr.mxu0 0.0
  %2620 = vmatpush1.msra.mxu0 0.0
  %2621 = vmatprep.subr.mxu0 0.0
  %2622 = vmatpush1.msra.mxu0 0.0
  %2623 = vmatprep.subr.mxu0 0.0
  %2624 = vmatpush1.msra.mxu0 0.0
  %2625 = vmatprep.subr.mxu0 0.0
  %2626 = vmatpush1.msra.mxu0 0.0
  %2627 = vmatprep.subr.mxu0 0.0
  %2628 = vmatpush1.msra.mxu0 0.0
  %2629 = vmatprep.subr.mxu0 0.0
  %2630 = vmatpush1.msra.mxu0 0.0
  %2631 = vmatprep.subr.mxu0 0.0
  %2632 = vmatpush1.msra.mxu0 0.0
  %2633 = vmatprep.mubr.f32.mxu0 0.0
  %2634 = vmatmul.mubr.f32.gmra.mrb[0].mxu0 %v2567
  %v2635 = vpop.f32.mrb[0].mxu0
  %v2636 = vadd.f32 0.0, %v2635
  %v2637 = vpop.f32.mrb[0].mxu0
  %2638 = vdwg.mxu0
  %v2641 = vrot.slane %v2537, 7
  %v2642 = vsel %vm2565, %v2641, %v2536
  %v2643 = vsel %vm58, %v2642, 0
  %2645 = vmatprep.subr.mxu0 0.0
  %2646 = vmatpush1.msra.mxu0 %v2555
  %2647 = vmatprep.subr.mxu0 0.0
  %2648 = vmatpush1.msra.mxu0 %v2556
  %2649 = vmatprep.subr.mxu0 0.0
  %2650 = vmatpush1.msra.mxu0 %v2557
  %2651 = vmatprep.subr.mxu0 0.0
  %2652 = vmatpush1.msra.mxu0 %v2558
  %2653 = vmatprep.subr.mxu0 0.0
  %2654 = vmatpush1.msra.mxu0 0.0
  %2655 = vmatprep.subr.mxu0 0.0
  %2656 = vmatpush1.msra.mxu0 0.0
  %2657 = vmatprep.subr.mxu0 0.0
  %2658 = vmatpush1.msra.mxu0 0.0
  %2659 = vmatprep.subr.mxu0 0.0
  %2660 = vmatpush1.msra.mxu0 0.0
  %2661 = vmatprep.subr.mxu0 0.0
  %2662 = vmatpush1.msra.mxu0 0.0
  %2663 = vmatprep.subr.mxu0 0.0
  %2664 = vmatpush1.msra.mxu0 0.0
  %2665 = vmatprep.subr.mxu0 0.0
  %2666 = vmatpush1.msra.mxu0 0.0
  %2667 = vmatprep.subr.mxu0 0.0
  %2668 = vmatpush1.msra.mxu0 0.0
  %2669 = vmatprep.subr.mxu0 0.0
  %2670 = vmatpush1.msra.mxu0 0.0
  %2671 = vmatprep.subr.mxu0 0.0
  %2672 = vmatpush1.msra.mxu0 0.0
  %2673 = vmatprep.subr.mxu0 0.0
  %2674 = vmatpush1.msra.mxu0 0.0
  %2675 = vmatprep.subr.mxu0 0.0
  %2676 = vmatpush1.msra.mxu0 0.0
  %2677 = vmatprep.subr.mxu0 0.0
  %2678 = vmatpush1.msra.mxu0 0.0
  %2679 = vmatprep.subr.mxu0 0.0
  %2680 = vmatpush1.msra.mxu0 0.0
  %2681 = vmatprep.subr.mxu0 0.0
  %2682 = vmatpush1.msra.mxu0 0.0
  %2683 = vmatprep.subr.mxu0 0.0
  %2684 = vmatpush1.msra.mxu0 0.0
  %2685 = vmatprep.subr.mxu0 0.0
  %2686 = vmatpush1.msra.mxu0 0.0
  %2687 = vmatprep.subr.mxu0 0.0
  %2688 = vmatpush1.msra.mxu0 0.0
  %2689 = vmatprep.subr.mxu0 0.0
  %2690 = vmatpush1.msra.mxu0 0.0
  %2691 = vmatprep.subr.mxu0 0.0
  %2692 = vmatpush1.msra.mxu0 0.0
  %2693 = vmatprep.subr.mxu0 0.0
  %2694 = vmatpush1.msra.mxu0 0.0
  %2695 = vmatprep.subr.mxu0 0.0
  %2696 = vmatpush1.msra.mxu0 0.0
  %2697 = vmatprep.subr.mxu0 0.0
  %2698 = vmatpush1.msra.mxu0 0.0
  %2699 = vmatprep.subr.mxu0 0.0
  %2700 = vmatpush1.msra.mxu0 0.0
  %2701 = vmatprep.subr.mxu0 0.0
  %2702 = vmatpush1.msra.mxu0 0.0
  %2703 = vmatprep.subr.mxu0 0.0
  %2704 = vmatpush1.msra.mxu0 0.0
  %2705 = vmatprep.subr.mxu0 0.0
  %2706 = vmatpush1.msra.mxu0 0.0
  %2707 = vmatprep.subr.mxu0 0.0
  %2708 = vmatpush1.msra.mxu0 0.0
  %2709 = vmatprep.mubr.f32.mxu0 0.0
  %2710 = vmatmul.mubr.f32.gmra.mrb[0].mxu0 %v2643
  %v2711 = vpop.f32.mrb[0].mxu0
  %v2712 = vadd.f32 %v2636, %v2711
  %v2713 = vpop.f32.mrb[0].mxu0
  %2714 = vdwg.mxu0
  %v2715 = vld [vmem:[%s11] sm:$0x1]
  %v2717 = vlaneseq
  %v2718 = vshrl.u32 %v2717, 7
  %v2719 = vsub.s32 0, %v2718
  %v2720 = vrot.slane %v2715, %v2719
  %v2722 = vadd.f32 %v2712, %v2720
  %v2723 = vmul.f32 %v2722, 0.5
  %v2724 = vmul.f32 %v2722, 0.70710677
  %v2725 = verf.f32.pop %v2724
  %v2726 = vadd.f32 %v2725, 1.0
  %v2727 = vmul.f32 %v2723, %v2726
  %v2728 = vld [vmem:[%s12] sm:$0xff]
  %v2729 = vld [vmem:[%s12 + $0x8] sm:$0xff]
  %v2730 = vld [vmem:[%s12 + $0x10] sm:$0xff]
  %v2731 = vld [vmem:[%s12 + $0x18] sm:$0xff]
  %v2732 = vld [vmem:[%s12 + $0x20] sm:$0xff]
  %v2733 = vld [vmem:[%s12 + $0x28] sm:$0xff]
  %v2734 = vld [vmem:[%s12 + $0x30] sm:$0xff]
  %v2735 = vld [vmem:[%s12 + $0x38] sm:$0xff]
  %v2736 = vld [vmem:[%s13] sm:$0x1]
  %v2738 = vlaneseq
  %v2739 = vshrl.u32 %v2738, 7
  %v2740 = vsub.s32 0, %v2739
  %v2741 = vrot.slane %v2736, %v2740
  %v2744 = vsel %vm1203, %v2727, 0
  %2746 = vmatprep.subr.mxu0 0.0
  %2747 = vmatpush1.msra.mxu0 %v2728
  %2748 = vmatprep.subr.mxu0 0.0
  %2749 = vmatpush1.msra.mxu0 %v2729
  %2750 = vmatprep.subr.mxu0 0.0
  %2751 = vmatpush1.msra.mxu0 %v2730
  %2752 = vmatprep.subr.mxu0 0.0
  %2753 = vmatpush1.msra.mxu0 %v2731
  %2754 = vmatprep.subr.mxu0 0.0
  %2755 = vmatpush1.msra.mxu0 %v2732
  %2756 = vmatprep.subr.mxu0 0.0
  %2757 = vmatpush1.msra.mxu0 %v2733
  %2758 = vmatprep.subr.mxu0 0.0
  %2759 = vmatpush1.msra.mxu0 %v2734
  %2760 = vmatprep.subr.mxu0 0.0
  %2761 = vmatpush1.msra.mxu0 %v2735
  %2762 = vmatprep.subr.mxu0 0.0
  %2763 = vmatpush1.msra.mxu0 0.0
  %2764 = vmatprep.subr.mxu0 0.0
  %2765 = vmatpush1.msra.mxu0 0.0
  %2766 = vmatprep.subr.mxu0 0.0
  %2767 = vmatpush1.msra.mxu0 0.0
  %2768 = vmatprep.subr.mxu0 0.0
  %2769 = vmatpush1.msra.mxu0 0.0
  %2770 = vmatprep.subr.mxu0 0.0
  %2771 = vmatpush1.msra.mxu0 0.0
  %2772 = vmatprep.subr.mxu0 0.0
  %2773 = vmatpush1.msra.mxu0 0.0
  %2774 = vmatprep.subr.mxu0 0.0
  %2775 = vmatpush1.msra.mxu0 0.0
  %2776 = vmatprep.subr.mxu0 0.0
  %2777 = vmatpush1.msra.mxu0 0.0
  %2778 = vmatprep.subr.mxu0 0.0
  %2779 = vmatpush1.msra.mxu0 0.0
  %2780 = vmatprep.subr.mxu0 0.0
  %2781 = vmatpush1.msra.mxu0 0.0
  %2782 = vmatprep.subr.mxu0 0.0
  %2783 = vmatpush1.msra.mxu0 0.0
  %2784 = vmatprep.subr.mxu0 0.0
  %2785 = vmatpush1.msra.mxu0 0.0
  %2786 = vmatprep.subr.mxu0 0.0
  %2787 = vmatpush1.msra.mxu0 0.0
  %2788 = vmatprep.subr.mxu0 0.0
  %2789 = vmatpush1.msra.mxu0 0.0
  %2790 = vmatprep.subr.mxu0 0.0
  %2791 = vmatpush1.msra.mxu0 0.0
  %2792 = vmatprep.subr.mxu0 0.0
  %2793 = vmatpush1.msra.mxu0 0.0
  %2794 = vmatprep.subr.mxu0 0.0
  %2795 = vmatpush1.msra.mxu0 0.0
  %2796 = vmatprep.subr.mxu0 0.0
  %2797 = vmatpush1.msra.mxu0 0.0
  %2798 = vmatprep.subr.mxu0 0.0
  %2799 = vmatpush1.msra.mxu0 0.0
  %2800 = vmatprep.subr.mxu0 0.0
  %2801 = vmatpush1.msra.mxu0 0.0
  %2802 = vmatprep.subr.mxu0 0.0
  %2803 = vmatpush1.msra.mxu0 0.0
  %2804 = vmatprep.subr.mxu0 0.0
  %2805 = vmatpush1.msra.mxu0 0.0
  %2806 = vmatprep.subr.mxu0 0.0
  %2807 = vmatpush1.msra.mxu0 0.0
  %2808 = vmatprep.subr.mxu0 0.0
  %2809 = vmatpush1.msra.mxu0 0.0
  %2810 = vmatprep.mubr.f32.mxu0 0.0
  %2811 = vmatmul.mubr.f32.gmra.mrb[0].mxu0 %v2744
  %v2812 = vpop.f32.mrb[0].mxu0
  %v2813 = vadd.f32 %v2741, %v2812
  %v2814 = vpop.f32.mrb[0].mxu0
  %2815 = vdwg.mxu0
  %v2816 = vmax.f32 %v2813, 0.0
  %v2817 = vld [vmem:[%s14] sm:$0xff]
  %v2818 = vld [vmem:[%s14 + $0x8] sm:$0xff]
  %v2819 = vld [vmem:[%s14 + $0x10] sm:$0xff]
  %v2820 = vld [vmem:[%s14 + $0x18] sm:$0xff]
  %v2821 = vld [vmem:[#allocation2] sm:$0x1]
  %v2823 = vlaneseq
  %v2824 = vshrl.u32 %v2823, 7
  %v2825 = vsub.s32 0, %v2824
  %v2826 = vrot.slane %v2821, %v2825
  %v2829 = vsel %vm58, %v2816, 0
  %2831 = vmatprep.subr.mxu0 0.0
  %2832 = vmatpush1.msra.mxu0 %v2817
  %2833 = vmatprep.subr.mxu0 0.0
  %2834 = vmatpush1.msra.mxu0 %v2818
  %2835 = vmatprep.subr.mxu0 0.0
  %2836 = vmatpush1.msra.mxu0 %v2819
  %2837 = vmatprep.subr.mxu0 0.0
  %2838 = vmatpush1.msra.mxu0 %v2820
  %2839 = vmatprep.subr.mxu0 0.0
  %2840 = vmatpush1.msra.mxu0 0.0
  %2841 = vmatprep.subr.mxu0 0.0
  %2842 = vmatpush1.msra.mxu0 0.0
  %2843 = vmatprep.subr.mxu0 0.0
  %2844 = vmatpush1.msra.mxu0 0.0
  %2845 = vmatprep.subr.mxu0 0.0
  %2846 = vmatpush1.msra.mxu0 0.0
  %2847 = vmatprep.subr.mxu0 0.0
  %2848 = vmatpush1.msra.mxu0 0.0
  %2849 = vmatprep.subr.mxu0 0.0
  %2850 = vmatpush1.msra.mxu0 0.0
  %2851 = vmatprep.subr.mxu0 0.0
  %2852 = vmatpush1.msra.mxu0 0.0
  %2853 = vmatprep.subr.mxu0 0.0
  %2854 = vmatpush1.msra.mxu0 0.0
  %2855 = vmatprep.subr.mxu0 0.0
  %2856 = vmatpush1.msra.mxu0 0.0
  %2857 = vmatprep.subr.mxu0 0.0
  %2858 = vmatpush1.msra.mxu0 0.0
  %2859 = vmatprep.subr.mxu0 0.0
  %2860 = vmatpush1.msra.mxu0 0.0
  %2861 = vmatprep.subr.mxu0 0.0
  %2862 = vmatpush1.msra.mxu0 0.0
  %2863 = vmatprep.subr.mxu0 0.0
  %2864 = vmatpush1.msra.mxu0 0.0
  %2865 = vmatprep.subr.mxu0 0.0
  %2866 = vmatpush1.msra.mxu0 0.0
  %2867 = vmatprep.subr.mxu0 0.0
  %2868 = vmatpush1.msra.mxu0 0.0
  %2869 = vmatprep.subr.mxu0 0.0
  %2870 = vmatpush1.msra.mxu0 0.0
  %2871 = vmatprep.subr.mxu0 0.0
  %2872 = vmatpush1.msra.mxu0 0.0
  %2873 = vmatprep.subr.mxu0 0.0
  %2874 = vmatpush1.msra.mxu0 0.0
  %2875 = vmatprep.subr.mxu0 0.0
  %2876 = vmatpush1.msra.mxu0 0.0
  %2877 = vmatprep.subr.mxu0 0.0
  %2878 = vmatpush1.msra.mxu0 0.0
  %2879 = vmatprep.subr.mxu0 0.0
  %2880 = vmatpush1.msra.mxu0 0.0
  %2881 = vmatprep.subr.mxu0 0.0
  %2882 = vmatpush1.msra.mxu0 0.0
  %2883 = vmatprep.subr.mxu0 0.0
  %2884 = vmatpush1.msra.mxu0 0.0
  %2885 = vmatprep.subr.mxu0 0.0
  %2886 = vmatpush1.msra.mxu0 0.0
  %2887 = vmatprep.subr.mxu0 0.0
  %2888 = vmatpush1.msra.mxu0 0.0
  %2889 = vmatprep.subr.mxu0 0.0
  %2890 = vmatpush1.msra.mxu0 0.0
  %2891 = vmatprep.subr.mxu0 0.0
  %2892 = vmatpush1.msra.mxu0 0.0
  %2893 = vmatprep.subr.mxu0 0.0
  %2894 = vmatpush1.msra.mxu0 0.0
  %2895 = vmatprep.mubr.f32.mxu0 0.0
  %2896 = vmatmul.mubr.f32.gmra.mrb[0].mxu0 %v2829
  %v2897 = vpop.f32.mrb[0].mxu0
  %v2898 = vadd.f32 %v2826, %v2897
  %v2899 = vpop.f32.mrb[0].mxu0
  %2900 = vdwg.mxu0
  %vm2901 = vcmask 1024
  %2902 = vst.msk [vmem:[%s16] sm:$0x3] %vm2901, %v2898
  // Predicated region
  $region66: #{reader_model_forward.1} parent=0 // pred_check
    _
  $region67: #{reader_model_forward.1} parent=0 // pred_check_branch
    %2904 = sbr.rel (0) target = $region69
  $region68: #{reader_model_forward.1} parent=0 // pred_region
    _
  $region69: #{reader_model_forward.1} parent=0 // pred_fallthru
    _
  // Predicated region
  $region70: #{reader_model_forward.1} parent=0 // pred_check
    _
  $region71: #{reader_model_forward.1} parent=0 // pred_check_branch
    %2906 = sbr.rel (0) target = $region73
  $region72: #{reader_model_forward.1} parent=0 // pred_region
    _
  $region73: #{reader_model_forward.1} parent=0 // pred_fallthru
    _

</llo_original>
